<compile_context>
chip_gen: v7x
topology: tpu7x:2x2x1
jax: 0.10.0
libtpu: 0.0.40
codegen_flags: <defaults>
</compile_context>

<pallas_src>
import functools

import jax
import jax.numpy as jnp
from jax.experimental import pallas as pl
from jax.experimental.pallas import tpu as pltpu

LN_EPS = 1e-5  # matches torch.nn.LayerNorm default eps


def _layernorm(x, w, b):
    mu = jnp.mean(x, axis=-1, keepdims=True)
    var = jnp.mean((x - mu) ** 2, axis=-1, keepdims=True)
    return (x - mu) * jax.lax.rsqrt(var + LN_EPS) * w + b


def _decoder_layer_kernel(
    dec_ref, enc_ref,
    wq1_ref, wk1_ref, wv1_ref, bq1_ref, bk1_ref, bv1_ref, wo1_ref, bo1_ref,
    wq2_ref, wk2_ref, wv2_ref, bq2_ref, bk2_ref, bv2_ref, wo2_ref, bo2_ref,
    wff1_ref, wff2_ref,
    ln1w_ref, ln1b_ref, ln2w_ref, ln2b_ref, ln3w_ref, ln3b_ref,
    out_ref, attn_ref,
    *, n_heads,
):
    # TODO(synk): key_padding_mask path not implemented (forward is called with mask=None).
    B, T, D = dec_ref.shape
    S = enc_ref.shape[1]
    hd = D // n_heads
    scale = 1.0 / (hd ** 0.5)

    # Fold batch into the matmul M dimension: every dense layer sees a
    # (B*T, D) / (B*S, D) slab (one MXU pass, no per-batch loop).
    x = dec_ref[...].reshape(B * T, D)   # f32 (residual path stays f32)
    e = enc_ref[...].reshape(B * S, D)

    def mm(a, w_ref):
        # bf16 MXU operands (weights are pre-cast host-side), f32 accumulation.
        return jnp.dot(a.astype(jnp.bfloat16), w_ref[...],
                       preferred_element_type=jnp.float32)

    def split_heads(m, L):
        # (B*L, D) -> (H*B, L, hd), head-major batch z = h*B + b.
        # One static lane slice per head feeding a single leading-axis concat;
        # the attention einsums below then run ONCE over all heads.
        return jnp.concatenate(
            [m[:, h * hd:(h + 1) * hd].reshape(B, L, hd) for h in range(n_heads)],
            axis=0)

    def attention(Q, K, V, Lk, wo_ref, bo_ref, return_weights):
        """Q: (B*T, D); K, V: (B*Lk, D) -> (out (B*T, D) f32, attn (B,T,Lk) | None)."""
        qz = split_heads(Q, T)    # (H*B, T,  hd)
        kz = split_heads(K, Lk)   # (H*B, Lk, hd)
        vz = split_heads(V, Lk)

        # One batched score matmul and one batched context matmul for ALL heads.
        s = jnp.einsum("zqd,zkd->zqk", qz, kz,
                       preferred_element_type=jnp.float32) * scale
        s = s - jnp.max(s, axis=-1, keepdims=True)
        p = jnp.exp(s)
        denom = jnp.sum(p, axis=-1, keepdims=True)

        if return_weights:
            # Exact normalization: these weights are a kernel output and must
            # sum to 1 (review correctness concern).
            p = p / denom
            attn = p[0:B]
            for h in range(1, n_heads):               # cheap VPU adds only
                attn = attn + p[h * B:(h + 1) * B]
            attn = attn * (1.0 / n_heads)             # head-averaged (PyTorch default)
        else:
            # Internal-only weights: approximate reciprocal on the idle EUP slot.
            p = p * pl.reciprocal(denom, approx=True)
            attn = None

        ctx = jnp.einsum("zqk,zkd->zqd", p, vz,
                         preferred_element_type=jnp.float32)   # (H*B, T, hd)

        # Folded output projection: sum_h ctx_h @ Wo[h] == ctx @ Wo.
        # Wo is host-prepared as (H, hd, D), so only leading-dim indexing here.
        wo_all = wo_ref[...]                                   # (H, hd, D) bf16
        out = jnp.zeros((B * T, D), jnp.float32)
        for h in range(n_heads):
            ctx_h = ctx[h * B:(h + 1) * B].reshape(B * T, hd)
            out = out + jnp.dot(ctx_h.astype(jnp.bfloat16), wo_all[h],
                                preferred_element_type=jnp.float32)
        return out + bo_ref[...], attn

    # --- self attention + residual + LN1 ---
    q1 = mm(x, wq1_ref) + bq1_ref[...]
    k1 = mm(x, wk1_ref) + bk1_ref[...]
    v1 = mm(x, wv1_ref) + bv1_ref[...]
    sa, _ = attention(q1, k1, v1, T, wo1_ref, bo1_ref, return_weights=False)
    h1 = _layernorm(sa + x, ln1w_ref[...], ln1b_ref[...])

    # --- cross attention (Q from decoder stream, K/V from encoder) + LN2 ---
    q2 = mm(h1, wq2_ref) + bq2_ref[...]
    k2 = mm(e, wk2_ref) + bk2_ref[...]
    v2 = mm(e, wv2_ref) + bv2_ref[...]
    ca, attn = attention(q2, k2, v2, S, wo2_ref, bo2_ref, return_weights=True)
    h2 = _layernorm(h1 + ca, ln2w_ref[...], ln2b_ref[...])

    # --- position-wise FFN; its internal nn.LayerNorm is freshly constructed
    #     every forward -> affine exactly (1, 0), eps = 1e-5 default. ---
    ff = jnp.maximum(mm(h2, wff1_ref), 0.0)
    ff = mm(ff, wff2_ref)
    ffn_out = _layernorm(ff + h2, 1.0, 0.0)

    # --- residual + LN3 ---
    h3 = _layernorm(h2 + ffn_out, ln3w_ref[...], ln3b_ref[...])

    out_ref[...] = h3.reshape(B, T, D)
    attn_ref[...] = attn


def prepare_params(params, n_heads):
    """One-time, host-side parameter prep (OUTSIDE the jitted per-call path):
      * matmul weight slabs -> bfloat16 (halves weight DMA bytes, bf16 MXU rate);
        biases and LayerNorm affines stay float32,
      * attention out-projections reshaped to (H, hd, D) so the kernel's folded
        per-head out-projection only indexes a leading dim.
    No per-call jnp.concatenate weight fusion remains."""
    d_model = params["wq1"].shape[0]
    hd = d_model // n_heads
    kp = dict(params)
    for k in ("wq1", "wk1", "wv1", "wq2", "wk2", "wv2", "wff1", "wff2"):
        kp[k] = kp[k].astype(jnp.bfloat16)
    for k in ("wo1", "wo2"):
        kp[k] = kp[k].astype(jnp.bfloat16).reshape(n_heads, hd, d_model)
    return kp


@functools.partial(jax.jit, static_argnames=("n_heads",))
def decoder_layer(dec, enc, params, n_heads):
    B, T, D = dec.shape
    S = enc.shape[1]
    hd = D // n_heads
    d_ff = params["wff1"].shape[1]
    p = params

    args = (
        dec, enc,
        p["wq1"], p["wk1"], p["wv1"], p["bq1"], p["bk1"], p["bv1"], p["wo1"], p["bo1"],
        p["wq2"], p["wk2"], p["wv2"], p["bq2"], p["bk2"], p["bv2"], p["wo2"], p["bo2"],
        p["wff1"], p["wff2"],
        p["ln1w"], p["ln1b"], p["ln2w"], p["ln2b"], p["ln3w"], p["ln3b"],
    )

    # Advisory cost estimate so XLA schedules this custom call sensibly.
    flops = int(
        2 * B * T * D * D * 4                     # self-attn Q/K/V/out projections
        + 2 * B * T * D * D * 2                   # cross-attn Q/out projections
        + 2 * B * S * D * D * 2                   # cross-attn K/V projections
        + 4 * B * n_heads * T * (T + S) * hd      # both attentions: scores + context
        + 4 * B * T * D * d_ff                    # FFN
    )
    transcendentals = int(B * n_heads * T * (T + S) + 8 * B * T)
    bytes_accessed = int(sum(a.size * a.dtype.itemsize for a in args)
                         + (B * T * D + B * T * S) * 4)

    kernel = functools.partial(_decoder_layer_kernel, n_heads=n_heads)
    vmem = pl.BlockSpec(memory_space=pltpu.MemorySpace.VMEM)

    # Grid-less: whole problem (<1 MiB) lives in VMEM for a single invocation
    # (no pipeline overhead, single-buffered weights).  See header notes for
    # how this would change at scale on v7x (parallel batch grid / FFN tiling).
    return pl.pallas_call(
        kernel,
        out_shape=(
            jax.ShapeDtypeStruct((B, T, D), jnp.float32),
            jax.ShapeDtypeStruct((B, T, S), jnp.float32),
        ),
        in_specs=[vmem] * len(args),
        out_specs=(vmem, vmem),
        cost_estimate=pl.CostEstimate(flops=flops,
                                      transcendentals=transcendentals,
                                      bytes_accessed=bytes_accessed),
    )(*args)


# ---------------- deterministic parameter init (synthetic, float32) ----------------
def init_params(key, d_model, d_ff):
    ks = jax.random.split(key, 32)
    it = iter(ks)

    def mat(i, o, scale=0.05):
        return jax.random.normal(next(it), (i, o), jnp.float32) * scale

    def vec(o, scale=0.02):
        return jax.random.normal(next(it), (1, o), jnp.float32) * scale

    p = {}
    # self-attention (nn.MultiheadAttention: in_proj weight+bias, out_proj weight+bias)
    p["wq1"], p["wk1"], p["wv1"] = mat(d_model, d_model), mat(d_model, d_model), mat(d_model, d_model)
    p["bq1"], p["bk1"], p["bv1"] = vec(d_model), vec(d_model), vec(d_model)
    p["wo1"], p["bo1"] = mat(d_model, d_model), vec(d_model)
    # cross-attention
    p["wq2"], p["wk2"], p["wv2"] = mat(d_model, d_model), mat(d_model, d_model), mat(d_model, d_model)
    p["bq2"], p["bk2"], p["bv2"] = vec(d_model), vec(d_model), vec(d_model)
    p["wo2"], p["bo2"] = mat(d_model, d_model), vec(d_model)
    # position-wise FFN (both Linear layers are bias=False)
    p["wff1"] = mat(d_model, d_ff)
    p["wff2"] = mat(d_ff, d_model)
    # layernorms 1/2/3 (affine)
    for i in (1, 2, 3):
        p[f"ln{i}w"] = jnp.ones((1, d_model), jnp.float32) + vec(d_model, 0.01)
        p[f"ln{i}b"] = vec(d_model, 0.01)
    return p


# ---------------- pure-JAX float32 reference (module semantics) ----------------
def _mha_ref(xq, xkv, wq, wk, wv, bq, bk, bv, wo, bo, n_heads):
    Q = xq @ wq + bq
    K = xkv @ wk + bk
    V = xkv @ wv + bv
    T, D = Q.shape
    S = K.shape[0]
    hd = D // n_heads
    Qh = Q.reshape(T, n_heads, hd).transpose(1, 0, 2)
    Kh = K.reshape(S, n_heads, hd).transpose(1, 0, 2)
    Vh = V.reshape(S, n_heads, hd).transpose(1, 0, 2)
    s = jnp.einsum("htd,hsd->hts", Qh, Kh) / jnp.sqrt(float(hd))
    p = jax.nn.softmax(s, axis=-1)
    ctx = jnp.einsum("hts,hsd->htd", p, Vh).transpose(1, 0, 2).reshape(T, D)
    return ctx @ wo + bo, p.mean(0)


def decoder_layer_ref(dec, enc, params, n_heads):
    def single(x, e):
        sa, _ = _mha_ref(x, x, params["wq1"], params["wk1"], params["wv1"],
                         params["bq1"], params["bk1"], params["bv1"],
                         params["wo1"], params["bo1"], n_heads)
        h1 = _layernorm(sa + x, params["ln1w"], params["ln1b"])
        ca, attn = _mha_ref(h1, e, params["wq2"], params["wk2"], params["wv2"],
                            params["bq2"], params["bk2"], params["bv2"],
                            params["wo2"], params["bo2"], n_heads)
        h2 = _layernorm(h1 + ca, params["ln2w"], params["ln2b"])
        ff = jnp.maximum(h2 @ params["wff1"], 0.0) @ params["wff2"]
        ffn = _layernorm(ff + h2, 1.0, 0.0)
        h3 = _layernorm(h2 + ffn, params["ln3w"], params["ln3b"])
        return h3, attn

    return jax.vmap(single)(dec, enc)


if __name__ == "__main__":
    B, T, S, D, H = 2, 8, 8, 32, 4
    d_ff = 256 * 4  # matches PoswiseFeedForwardNet(d_model, 256*4)

    key = jax.random.PRNGKey(0)
    kd, ke, kparam = jax.random.split(key, 3)
    dec_inputs = jax.random.normal(kd, (B, T, D), jnp.float32)
    enc_outputs = jax.random.normal(ke, (B, S, D), jnp.float32)
    params = init_params(kparam, D, d_ff)           # float32 (reference)
    kparams = prepare_params(params, n_heads=H)     # bf16 weights, prepared once

    out, attn = decoder_layer(dec_inputs, enc_outputs, kparams, n_heads=H)
    jax.block_until_ready((out, attn))

    ref_out, ref_attn = decoder_layer_ref(dec_inputs, enc_outputs, params, H)
    assert out.shape == (B, T, D) and attn.shape == (B, T, S)
    err_out = float(jnp.max(jnp.abs(out - ref_out)))
    err_attn = float(jnp.max(jnp.abs(attn - ref_attn)))
    # Tolerances account for bfloat16 MXU operands (f32 reference) and the
    # approximate EUP reciprocal on the self-attention softmax.
    assert jnp.allclose(out, ref_out, atol=3e-2, rtol=3e-2), err_out
    assert jnp.allclose(attn, ref_attn, atol=5e-3, rtol=2e-2), err_attn

    print("KERNEL_OK")
</pallas_src>

<mosaic_0001>
module attributes {stable_mosaic.version = 11 : i64} {
  func.func @_decoder_layer_kernel(%arg0: memref<2x8x32xf32, #tpu.memory_space<vmem>>, %arg1: memref<2x8x32xf32, #tpu.memory_space<vmem>>, %arg2: memref<32x32xbf16, #tpu.memory_space<vmem>>, %arg3: memref<32x32xbf16, #tpu.memory_space<vmem>>, %arg4: memref<32x32xbf16, #tpu.memory_space<vmem>>, %arg5: memref<1x32xf32, #tpu.memory_space<vmem>>, %arg6: memref<1x32xf32, #tpu.memory_space<vmem>>, %arg7: memref<1x32xf32, #tpu.memory_space<vmem>>, %arg8: memref<4x8x32xbf16, #tpu.memory_space<vmem>>, %arg9: memref<1x32xf32, #tpu.memory_space<vmem>>, %arg10: memref<32x32xbf16, #tpu.memory_space<vmem>>, %arg11: memref<32x32xbf16, #tpu.memory_space<vmem>>, %arg12: memref<32x32xbf16, #tpu.memory_space<vmem>>, %arg13: memref<1x32xf32, #tpu.memory_space<vmem>>, %arg14: memref<1x32xf32, #tpu.memory_space<vmem>>, %arg15: memref<1x32xf32, #tpu.memory_space<vmem>>, %arg16: memref<4x8x32xbf16, #tpu.memory_space<vmem>>, %arg17: memref<1x32xf32, #tpu.memory_space<vmem>>, %arg18: memref<32x1024xbf16, #tpu.memory_space<vmem>>, %arg19: memref<1024x32xbf16, #tpu.memory_space<vmem>>, %arg20: memref<1x32xf32, #tpu.memory_space<vmem>>, %arg21: memref<1x32xf32, #tpu.memory_space<vmem>>, %arg22: memref<1x32xf32, #tpu.memory_space<vmem>>, %arg23: memref<1x32xf32, #tpu.memory_space<vmem>>, %arg24: memref<1x32xf32, #tpu.memory_space<vmem>>, %arg25: memref<1x32xf32, #tpu.memory_space<vmem>>, %arg26: memref<2x8x32xf32, #tpu.memory_space<vmem>>, %arg27: memref<2x8x8xf32, #tpu.memory_space<vmem>>) attributes {dimension_semantics = [], scalar_prefetch = 0 : i64, scratch_operands = 0 : i64, tpu.core_type = #tpu.core_type<tc>} {
    %c0 = arith.constant 0 : index
    %c0_0 = arith.constant 0 : index
    %c0_1 = arith.constant 0 : index
    %0 = vector.load %arg0[%c0, %c0_0, %c0_1] : memref<2x8x32xf32, #tpu.memory_space<vmem>>, vector<2x8x32xf32>
    %1 = vector.shape_cast %0 : vector<2x8x32xf32> to vector<16x32xf32>
    %c0_2 = arith.constant 0 : index
    %c0_3 = arith.constant 0 : index
    %c0_4 = arith.constant 0 : index
    %2 = vector.load %arg1[%c0_2, %c0_3, %c0_4] : memref<2x8x32xf32, #tpu.memory_space<vmem>>, vector<2x8x32xf32>
    %3 = vector.shape_cast %2 : vector<2x8x32xf32> to vector<16x32xf32>
    %4 = arith.truncf %1 : vector<16x32xf32> to vector<16x32xbf16>
    %c0_5 = arith.constant 0 : index
    %c0_6 = arith.constant 0 : index
    %5 = vector.load %arg2[%c0_5, %c0_6] : memref<32x32xbf16, #tpu.memory_space<vmem>>, vector<32x32xbf16>
    %cst = arith.constant dense<0.000000e+00> : vector<16x32xf32>
    %6 = tpu.matmul %4, %5, %cst {dimension_numbers = #tpu.dot_dimension_numbers<[1], [0], [0], [1], [0, 0, 1, 1], [], []>} : vector<16x32xbf16>, vector<32x32xbf16>, vector<16x32xf32> -> vector<16x32xf32>
    %c0_7 = arith.constant 0 : index
    %c0_8 = arith.constant 0 : index
    %7 = vector.load %arg5[%c0_7, %c0_8] : memref<1x32xf32, #tpu.memory_space<vmem>>, vector<1x32xf32>
    %8 = vector.broadcast %7 : vector<1x32xf32> to vector<16x32xf32>
    %9 = arith.addf %6, %8 : vector<16x32xf32>
    %10 = arith.truncf %1 : vector<16x32xf32> to vector<16x32xbf16>
    %c0_9 = arith.constant 0 : index
    %c0_10 = arith.constant 0 : index
    %11 = vector.load %arg3[%c0_9, %c0_10] : memref<32x32xbf16, #tpu.memory_space<vmem>>, vector<32x32xbf16>
    %cst_11 = arith.constant dense<0.000000e+00> : vector<16x32xf32>
    %12 = tpu.matmul %10, %11, %cst_11 {dimension_numbers = #tpu.dot_dimension_numbers<[1], [0], [0], [1], [0, 0, 1, 1], [], []>} : vector<16x32xbf16>, vector<32x32xbf16>, vector<16x32xf32> -> vector<16x32xf32>
    %c0_12 = arith.constant 0 : index
    %c0_13 = arith.constant 0 : index
    %13 = vector.load %arg6[%c0_12, %c0_13] : memref<1x32xf32, #tpu.memory_space<vmem>>, vector<1x32xf32>
    %14 = vector.broadcast %13 : vector<1x32xf32> to vector<16x32xf32>
    %15 = arith.addf %12, %14 : vector<16x32xf32>
    %16 = arith.truncf %1 : vector<16x32xf32> to vector<16x32xbf16>
    %c0_14 = arith.constant 0 : index
    %c0_15 = arith.constant 0 : index
    %17 = vector.load %arg4[%c0_14, %c0_15] : memref<32x32xbf16, #tpu.memory_space<vmem>>, vector<32x32xbf16>
    %cst_16 = arith.constant dense<0.000000e+00> : vector<16x32xf32>
    %18 = tpu.matmul %16, %17, %cst_16 {dimension_numbers = #tpu.dot_dimension_numbers<[1], [0], [0], [1], [0, 0, 1, 1], [], []>} : vector<16x32xbf16>, vector<32x32xbf16>, vector<16x32xf32> -> vector<16x32xf32>
    %c0_17 = arith.constant 0 : index
    %c0_18 = arith.constant 0 : index
    %19 = vector.load %arg7[%c0_17, %c0_18] : memref<1x32xf32, #tpu.memory_space<vmem>>, vector<1x32xf32>
    %20 = vector.broadcast %19 : vector<1x32xf32> to vector<16x32xf32>
    %21 = arith.addf %18, %20 : vector<16x32xf32>
    %22 = vector.extract_strided_slice %9 {offsets = [0, 0], sizes = [16, 8], strides = [1, 1]} : vector<16x32xf32> to vector<16x8xf32>
    %23 = vector.shape_cast %22 : vector<16x8xf32> to vector<2x8x8xf32>
    %24 = vector.extract_strided_slice %9 {offsets = [0, 8], sizes = [16, 8], strides = [1, 1]} : vector<16x32xf32> to vector<16x8xf32>
    %25 = vector.shape_cast %24 : vector<16x8xf32> to vector<2x8x8xf32>
    %26 = vector.extract_strided_slice %9 {offsets = [0, 16], sizes = [16, 8], strides = [1, 1]} : vector<16x32xf32> to vector<16x8xf32>
    %27 = vector.shape_cast %26 : vector<16x8xf32> to vector<2x8x8xf32>
    %28 = vector.extract_strided_slice %9 {offsets = [0, 24], sizes = [16, 8], strides = [1, 1]} : vector<16x32xf32> to vector<16x8xf32>
    %29 = vector.shape_cast %28 : vector<16x8xf32> to vector<2x8x8xf32>
    %30 = tpu.concatenate %23, %25, %27, %29 in 0 : vector<2x8x8xf32>, vector<2x8x8xf32>, vector<2x8x8xf32>, vector<2x8x8xf32> -> vector<8x8x8xf32>
    %31 = vector.extract_strided_slice %15 {offsets = [0, 0], sizes = [16, 8], strides = [1, 1]} : vector<16x32xf32> to vector<16x8xf32>
    %32 = vector.shape_cast %31 : vector<16x8xf32> to vector<2x8x8xf32>
    %33 = vector.extract_strided_slice %15 {offsets = [0, 8], sizes = [16, 8], strides = [1, 1]} : vector<16x32xf32> to vector<16x8xf32>
    %34 = vector.shape_cast %33 : vector<16x8xf32> to vector<2x8x8xf32>
    %35 = vector.extract_strided_slice %15 {offsets = [0, 16], sizes = [16, 8], strides = [1, 1]} : vector<16x32xf32> to vector<16x8xf32>
    %36 = vector.shape_cast %35 : vector<16x8xf32> to vector<2x8x8xf32>
    %37 = vector.extract_strided_slice %15 {offsets = [0, 24], sizes = [16, 8], strides = [1, 1]} : vector<16x32xf32> to vector<16x8xf32>
    %38 = vector.shape_cast %37 : vector<16x8xf32> to vector<2x8x8xf32>
    %39 = tpu.concatenate %32, %34, %36, %38 in 0 : vector<2x8x8xf32>, vector<2x8x8xf32>, vector<2x8x8xf32>, vector<2x8x8xf32> -> vector<8x8x8xf32>
    %40 = vector.extract_strided_slice %21 {offsets = [0, 0], sizes = [16, 8], strides = [1, 1]} : vector<16x32xf32> to vector<16x8xf32>
    %41 = vector.shape_cast %40 : vector<16x8xf32> to vector<2x8x8xf32>
    %42 = vector.extract_strided_slice %21 {offsets = [0, 8], sizes = [16, 8], strides = [1, 1]} : vector<16x32xf32> to vector<16x8xf32>
    %43 = vector.shape_cast %42 : vector<16x8xf32> to vector<2x8x8xf32>
    %44 = vector.extract_strided_slice %21 {offsets = [0, 16], sizes = [16, 8], strides = [1, 1]} : vector<16x32xf32> to vector<16x8xf32>
    %45 = vector.shape_cast %44 : vector<16x8xf32> to vector<2x8x8xf32>
    %46 = vector.extract_strided_slice %21 {offsets = [0, 24], sizes = [16, 8], strides = [1, 1]} : vector<16x32xf32> to vector<16x8xf32>
    %47 = vector.shape_cast %46 : vector<16x8xf32> to vector<2x8x8xf32>
    %48 = tpu.concatenate %41, %43, %45, %47 in 0 : vector<2x8x8xf32>, vector<2x8x8xf32>, vector<2x8x8xf32>, vector<2x8x8xf32> -> vector<8x8x8xf32>
    "tpu.trace_start"() <{level = 10 : i32, message = "zqd,zkd->zqk"}> : () -> ()
    %cst_19 = arith.constant dense<0.000000e+00> : vector<8x8x8xf32>
    %49 = tpu.matmul %30, %39, %cst_19 {dimension_numbers = #tpu.dot_dimension_numbers<[2], [2], [1], [1], [0, 0, 0, 1, 1, 1], [0], [0]>} : vector<8x8x8xf32>, vector<8x8x8xf32>, vector<8x8x8xf32> -> vector<8x8x8xf32>
    "tpu.trace_stop"() : () -> ()
    %cst_20 = arith.constant 0.353553385 : f32
    %50 = vector.broadcast %cst_20 : f32 to vector<8x8x8xf32>
    %51 = arith.mulf %49, %50 : vector<8x8x8xf32>
    %cst_21 = arith.constant dense<0xFF800000> : vector<8x8xf32>
    %52 = vector.multi_reduction <maximumf>, %51, %cst_21 [2] : vector<8x8x8xf32> to vector<8x8xf32>
    %53 = vector.shape_cast %52 : vector<8x8xf32> to vector<8x8x1xf32>
    %54 = vector.broadcast %53 : vector<8x8x1xf32> to vector<8x8x8xf32>
    %55 = arith.subf %51, %54 : vector<8x8x8xf32>
    %56 = math.exp %55 : vector<8x8x8xf32>
    %cst_22 = arith.constant dense<0.000000e+00> : vector<8x8xf32>
    %57 = vector.multi_reduction <add>, %56, %cst_22 [2] : vector<8x8x8xf32> to vector<8x8xf32>
    %58 = vector.shape_cast %57 : vector<8x8xf32> to vector<8x8x1xf32>
    %59 = tpu.reciprocal %58 {approx = true} : vector<8x8x1xf32> -> vector<8x8x1xf32>
    %60 = vector.broadcast %59 : vector<8x8x1xf32> to vector<8x8x8xf32>
    %61 = arith.mulf %56, %60 : vector<8x8x8xf32>
    "tpu.trace_start"() <{level = 10 : i32, message = "zqk,zkd->zqd"}> : () -> ()
    %cst_23 = arith.constant dense<0.000000e+00> : vector<8x8x8xf32>
    %62 = tpu.matmul %61, %48, %cst_23 {dimension_numbers = #tpu.dot_dimension_numbers<[2], [1], [1], [2], [0, 0, 0, 1, 1, 2], [0], [0]>} : vector<8x8x8xf32>, vector<8x8x8xf32>, vector<8x8x8xf32> -> vector<8x8x8xf32>
    "tpu.trace_stop"() : () -> ()
    %c0_24 = arith.constant 0 : index
    %c0_25 = arith.constant 0 : index
    %c0_26 = arith.constant 0 : index
    %63 = vector.load %arg8[%c0_24, %c0_25, %c0_26] : memref<4x8x32xbf16, #tpu.memory_space<vmem>>, vector<4x8x32xbf16>
    %cst_27 = arith.constant 0.000000e+00 : f32
    %64 = vector.broadcast %cst_27 : f32 to vector<16x32xf32>
    %65 = vector.extract_strided_slice %62 {offsets = [0, 0, 0], sizes = [2, 8, 8], strides = [1, 1, 1]} : vector<8x8x8xf32> to vector<2x8x8xf32>
    %66 = vector.shape_cast %65 : vector<2x8x8xf32> to vector<16x8xf32>
    %67 = arith.truncf %66 : vector<16x8xf32> to vector<16x8xbf16>
    %68 = vector.extract_strided_slice %63 {offsets = [0, 0, 0], sizes = [1, 8, 32], strides = [1, 1, 1]} : vector<4x8x32xbf16> to vector<1x8x32xbf16>
    %69 = vector.shape_cast %68 : vector<1x8x32xbf16> to vector<8x32xbf16>
    %cst_28 = arith.constant dense<0.000000e+00> : vector<16x32xf32>
    %70 = tpu.matmul %67, %69, %cst_28 {dimension_numbers = #tpu.dot_dimension_numbers<[1], [0], [0], [1], [0, 0, 1, 1], [], []>} : vector<16x8xbf16>, vector<8x32xbf16>, vector<16x32xf32> -> vector<16x32xf32>
    %71 = arith.addf %64, %70 : vector<16x32xf32>
    %72 = vector.extract_strided_slice %62 {offsets = [2, 0, 0], sizes = [2, 8, 8], strides = [1, 1, 1]} : vector<8x8x8xf32> to vector<2x8x8xf32>
    %73 = vector.shape_cast %72 : vector<2x8x8xf32> to vector<16x8xf32>
    %74 = arith.truncf %73 : vector<16x8xf32> to vector<16x8xbf16>
    %75 = vector.extract_strided_slice %63 {offsets = [1, 0, 0], sizes = [1, 8, 32], strides = [1, 1, 1]} : vector<4x8x32xbf16> to vector<1x8x32xbf16>
    %76 = vector.shape_cast %75 : vector<1x8x32xbf16> to vector<8x32xbf16>
    %cst_29 = arith.constant dense<0.000000e+00> : vector<16x32xf32>
    %77 = tpu.matmul %74, %76, %cst_29 {dimension_numbers = #tpu.dot_dimension_numbers<[1], [0], [0], [1], [0, 0, 1, 1], [], []>} : vector<16x8xbf16>, vector<8x32xbf16>, vector<16x32xf32> -> vector<16x32xf32>
    %78 = arith.addf %71, %77 : vector<16x32xf32>
    %79 = vector.extract_strided_slice %62 {offsets = [4, 0, 0], sizes = [2, 8, 8], strides = [1, 1, 1]} : vector<8x8x8xf32> to vector<2x8x8xf32>
    %80 = vector.shape_cast %79 : vector<2x8x8xf32> to vector<16x8xf32>
    %81 = arith.truncf %80 : vector<16x8xf32> to vector<16x8xbf16>
    %82 = vector.extract_strided_slice %63 {offsets = [2, 0, 0], sizes = [1, 8, 32], strides = [1, 1, 1]} : vector<4x8x32xbf16> to vector<1x8x32xbf16>
    %83 = vector.shape_cast %82 : vector<1x8x32xbf16> to vector<8x32xbf16>
    %cst_30 = arith.constant dense<0.000000e+00> : vector<16x32xf32>
    %84 = tpu.matmul %81, %83, %cst_30 {dimension_numbers = #tpu.dot_dimension_numbers<[1], [0], [0], [1], [0, 0, 1, 1], [], []>} : vector<16x8xbf16>, vector<8x32xbf16>, vector<16x32xf32> -> vector<16x32xf32>
    %85 = arith.addf %78, %84 : vector<16x32xf32>
    %86 = vector.extract_strided_slice %62 {offsets = [6, 0, 0], sizes = [2, 8, 8], strides = [1, 1, 1]} : vector<8x8x8xf32> to vector<2x8x8xf32>
    %87 = vector.shape_cast %86 : vector<2x8x8xf32> to vector<16x8xf32>
    %88 = arith.truncf %87 : vector<16x8xf32> to vector<16x8xbf16>
    %89 = vector.extract_strided_slice %63 {offsets = [3, 0, 0], sizes = [1, 8, 32], strides = [1, 1, 1]} : vector<4x8x32xbf16> to vector<1x8x32xbf16>
    %90 = vector.shape_cast %89 : vector<1x8x32xbf16> to vector<8x32xbf16>
    %cst_31 = arith.constant dense<0.000000e+00> : vector<16x32xf32>
    %91 = tpu.matmul %88, %90, %cst_31 {dimension_numbers = #tpu.dot_dimension_numbers<[1], [0], [0], [1], [0, 0, 1, 1], [], []>} : vector<16x8xbf16>, vector<8x32xbf16>, vector<16x32xf32> -> vector<16x32xf32>
    %92 = arith.addf %85, %91 : vector<16x32xf32>
    %c0_32 = arith.constant 0 : index
    %c0_33 = arith.constant 0 : index
    %93 = vector.load %arg9[%c0_32, %c0_33] : memref<1x32xf32, #tpu.memory_space<vmem>>, vector<1x32xf32>
    %94 = vector.broadcast %93 : vector<1x32xf32> to vector<16x32xf32>
    %95 = arith.addf %92, %94 : vector<16x32xf32>
    %96 = arith.addf %95, %1 : vector<16x32xf32>
    %c0_34 = arith.constant 0 : index
    %c0_35 = arith.constant 0 : index
    %97 = vector.load %arg20[%c0_34, %c0_35] : memref<1x32xf32, #tpu.memory_space<vmem>>, vector<1x32xf32>
    %c0_36 = arith.constant 0 : index
    %c0_37 = arith.constant 0 : index
    %98 = vector.load %arg21[%c0_36, %c0_37] : memref<1x32xf32, #tpu.memory_space<vmem>>, vector<1x32xf32>
    %cst_38 = arith.constant dense<0.000000e+00> : vector<16xf32>
    %99 = vector.multi_reduction <add>, %96, %cst_38 [1] : vector<16x32xf32> to vector<16xf32>
    %100 = vector.shape_cast %99 : vector<16xf32> to vector<16x1xf32>
    %cst_39 = arith.constant 3.200000e+01 : f32
    %101 = vector.broadcast %cst_39 : f32 to vector<16x1xf32>
    %102 = arith.divf %100, %101 : vector<16x1xf32>
    %103 = vector.broadcast %102 : vector<16x1xf32> to vector<16x32xf32>
    %104 = arith.subf %96, %103 : vector<16x32xf32>
    %105 = arith.mulf %104, %104 : vector<16x32xf32>
    %cst_40 = arith.constant dense<0.000000e+00> : vector<16xf32>
    %106 = vector.multi_reduction <add>, %105, %cst_40 [1] : vector<16x32xf32> to vector<16xf32>
    %107 = vector.shape_cast %106 : vector<16xf32> to vector<16x1xf32>
    %cst_41 = arith.constant 3.200000e+01 : f32
    %108 = vector.broadcast %cst_41 : f32 to vector<16x1xf32>
    %109 = arith.divf %107, %108 : vector<16x1xf32>
    %110 = vector.broadcast %102 : vector<16x1xf32> to vector<16x32xf32>
    %111 = arith.subf %96, %110 : vector<16x32xf32>
    %cst_42 = arith.constant 9.99999974E-6 : f32
    %112 = vector.broadcast %cst_42 : f32 to vector<16x1xf32>
    %113 = arith.addf %109, %112 : vector<16x1xf32>
    %114 = math.rsqrt %113 : vector<16x1xf32>
    %115 = vector.broadcast %114 : vector<16x1xf32> to vector<16x32xf32>
    %116 = arith.mulf %111, %115 : vector<16x32xf32>
    %117 = vector.broadcast %97 : vector<1x32xf32> to vector<16x32xf32>
    %118 = arith.mulf %116, %117 : vector<16x32xf32>
    %119 = vector.broadcast %98 : vector<1x32xf32> to vector<16x32xf32>
    %120 = arith.addf %118, %119 : vector<16x32xf32>
    %121 = arith.truncf %120 : vector<16x32xf32> to vector<16x32xbf16>
    %c0_43 = arith.constant 0 : index
    %c0_44 = arith.constant 0 : index
    %122 = vector.load %arg10[%c0_43, %c0_44] : memref<32x32xbf16, #tpu.memory_space<vmem>>, vector<32x32xbf16>
    %cst_45 = arith.constant dense<0.000000e+00> : vector<16x32xf32>
    %123 = tpu.matmul %121, %122, %cst_45 {dimension_numbers = #tpu.dot_dimension_numbers<[1], [0], [0], [1], [0, 0, 1, 1], [], []>} : vector<16x32xbf16>, vector<32x32xbf16>, vector<16x32xf32> -> vector<16x32xf32>
    %c0_46 = arith.constant 0 : index
    %c0_47 = arith.constant 0 : index
    %124 = vector.load %arg13[%c0_46, %c0_47] : memref<1x32xf32, #tpu.memory_space<vmem>>, vector<1x32xf32>
    %125 = vector.broadcast %124 : vector<1x32xf32> to vector<16x32xf32>
    %126 = arith.addf %123, %125 : vector<16x32xf32>
    %127 = arith.truncf %3 : vector<16x32xf32> to vector<16x32xbf16>
    %c0_48 = arith.constant 0 : index
    %c0_49 = arith.constant 0 : index
    %128 = vector.load %arg11[%c0_48, %c0_49] : memref<32x32xbf16, #tpu.memory_space<vmem>>, vector<32x32xbf16>
    %cst_50 = arith.constant dense<0.000000e+00> : vector<16x32xf32>
    %129 = tpu.matmul %127, %128, %cst_50 {dimension_numbers = #tpu.dot_dimension_numbers<[1], [0], [0], [1], [0, 0, 1, 1], [], []>} : vector<16x32xbf16>, vector<32x32xbf16>, vector<16x32xf32> -> vector<16x32xf32>
    %c0_51 = arith.constant 0 : index
    %c0_52 = arith.constant 0 : index
    %130 = vector.load %arg14[%c0_51, %c0_52] : memref<1x32xf32, #tpu.memory_space<vmem>>, vector<1x32xf32>
    %131 = vector.broadcast %130 : vector<1x32xf32> to vector<16x32xf32>
    %132 = arith.addf %129, %131 : vector<16x32xf32>
    %133 = arith.truncf %3 : vector<16x32xf32> to vector<16x32xbf16>
    %c0_53 = arith.constant 0 : index
    %c0_54 = arith.constant 0 : index
    %134 = vector.load %arg12[%c0_53, %c0_54] : memref<32x32xbf16, #tpu.memory_space<vmem>>, vector<32x32xbf16>
    %cst_55 = arith.constant dense<0.000000e+00> : vector<16x32xf32>
    %135 = tpu.matmul %133, %134, %cst_55 {dimension_numbers = #tpu.dot_dimension_numbers<[1], [0], [0], [1], [0, 0, 1, 1], [], []>} : vector<16x32xbf16>, vector<32x32xbf16>, vector<16x32xf32> -> vector<16x32xf32>
    %c0_56 = arith.constant 0 : index
    %c0_57 = arith.constant 0 : index
    %136 = vector.load %arg15[%c0_56, %c0_57] : memref<1x32xf32, #tpu.memory_space<vmem>>, vector<1x32xf32>
    %137 = vector.broadcast %136 : vector<1x32xf32> to vector<16x32xf32>
    %138 = arith.addf %135, %137 : vector<16x32xf32>
    %139 = vector.extract_strided_slice %126 {offsets = [0, 0], sizes = [16, 8], strides = [1, 1]} : vector<16x32xf32> to vector<16x8xf32>
    %140 = vector.shape_cast %139 : vector<16x8xf32> to vector<2x8x8xf32>
    %141 = vector.extract_strided_slice %126 {offsets = [0, 8], sizes = [16, 8], strides = [1, 1]} : vector<16x32xf32> to vector<16x8xf32>
    %142 = vector.shape_cast %141 : vector<16x8xf32> to vector<2x8x8xf32>
    %143 = vector.extract_strided_slice %126 {offsets = [0, 16], sizes = [16, 8], strides = [1, 1]} : vector<16x32xf32> to vector<16x8xf32>
    %144 = vector.shape_cast %143 : vector<16x8xf32> to vector<2x8x8xf32>
    %145 = vector.extract_strided_slice %126 {offsets = [0, 24], sizes = [16, 8], strides = [1, 1]} : vector<16x32xf32> to vector<16x8xf32>
    %146 = vector.shape_cast %145 : vector<16x8xf32> to vector<2x8x8xf32>
    %147 = tpu.concatenate %140, %142, %144, %146 in 0 : vector<2x8x8xf32>, vector<2x8x8xf32>, vector<2x8x8xf32>, vector<2x8x8xf32> -> vector<8x8x8xf32>
    %148 = vector.extract_strided_slice %132 {offsets = [0, 0], sizes = [16, 8], strides = [1, 1]} : vector<16x32xf32> to vector<16x8xf32>
    %149 = vector.shape_cast %148 : vector<16x8xf32> to vector<2x8x8xf32>
    %150 = vector.extract_strided_slice %132 {offsets = [0, 8], sizes = [16, 8], strides = [1, 1]} : vector<16x32xf32> to vector<16x8xf32>
    %151 = vector.shape_cast %150 : vector<16x8xf32> to vector<2x8x8xf32>
    %152 = vector.extract_strided_slice %132 {offsets = [0, 16], sizes = [16, 8], strides = [1, 1]} : vector<16x32xf32> to vector<16x8xf32>
    %153 = vector.shape_cast %152 : vector<16x8xf32> to vector<2x8x8xf32>
    %154 = vector.extract_strided_slice %132 {offsets = [0, 24], sizes = [16, 8], strides = [1, 1]} : vector<16x32xf32> to vector<16x8xf32>
    %155 = vector.shape_cast %154 : vector<16x8xf32> to vector<2x8x8xf32>
    %156 = tpu.concatenate %149, %151, %153, %155 in 0 : vector<2x8x8xf32>, vector<2x8x8xf32>, vector<2x8x8xf32>, vector<2x8x8xf32> -> vector<8x8x8xf32>
    %157 = vector.extract_strided_slice %138 {offsets = [0, 0], sizes = [16, 8], strides = [1, 1]} : vector<16x32xf32> to vector<16x8xf32>
    %158 = vector.shape_cast %157 : vector<16x8xf32> to vector<2x8x8xf32>
    %159 = vector.extract_strided_slice %138 {offsets = [0, 8], sizes = [16, 8], strides = [1, 1]} : vector<16x32xf32> to vector<16x8xf32>
    %160 = vector.shape_cast %159 : vector<16x8xf32> to vector<2x8x8xf32>
    %161 = vector.extract_strided_slice %138 {offsets = [0, 16], sizes = [16, 8], strides = [1, 1]} : vector<16x32xf32> to vector<16x8xf32>
    %162 = vector.shape_cast %161 : vector<16x8xf32> to vector<2x8x8xf32>
    %163 = vector.extract_strided_slice %138 {offsets = [0, 24], sizes = [16, 8], strides = [1, 1]} : vector<16x32xf32> to vector<16x8xf32>
    %164 = vector.shape_cast %163 : vector<16x8xf32> to vector<2x8x8xf32>
    %165 = tpu.concatenate %158, %160, %162, %164 in 0 : vector<2x8x8xf32>, vector<2x8x8xf32>, vector<2x8x8xf32>, vector<2x8x8xf32> -> vector<8x8x8xf32>
    "tpu.trace_start"() <{level = 10 : i32, message = "zqd,zkd->zqk"}> : () -> ()
    %cst_58 = arith.constant dense<0.000000e+00> : vector<8x8x8xf32>
    %166 = tpu.matmul %147, %156, %cst_58 {dimension_numbers = #tpu.dot_dimension_numbers<[2], [2], [1], [1], [0, 0, 0, 1, 1, 1], [0], [0]>} : vector<8x8x8xf32>, vector<8x8x8xf32>, vector<8x8x8xf32> -> vector<8x8x8xf32>
    "tpu.trace_stop"() : () -> ()
    %cst_59 = arith.constant 0.353553385 : f32
    %167 = vector.broadcast %cst_59 : f32 to vector<8x8x8xf32>
    %168 = arith.mulf %166, %167 : vector<8x8x8xf32>
    %cst_60 = arith.constant dense<0xFF800000> : vector<8x8xf32>
    %169 = vector.multi_reduction <maximumf>, %168, %cst_60 [2] : vector<8x8x8xf32> to vector<8x8xf32>
    %170 = vector.shape_cast %169 : vector<8x8xf32> to vector<8x8x1xf32>
    %171 = vector.broadcast %170 : vector<8x8x1xf32> to vector<8x8x8xf32>
    %172 = arith.subf %168, %171 : vector<8x8x8xf32>
    %173 = math.exp %172 : vector<8x8x8xf32>
    %cst_61 = arith.constant dense<0.000000e+00> : vector<8x8xf32>
    %174 = vector.multi_reduction <add>, %173, %cst_61 [2] : vector<8x8x8xf32> to vector<8x8xf32>
    %175 = vector.shape_cast %174 : vector<8x8xf32> to vector<8x8x1xf32>
    %176 = vector.broadcast %175 : vector<8x8x1xf32> to vector<8x8x8xf32>
    %177 = arith.divf %173, %176 : vector<8x8x8xf32>
    %178 = vector.extract_strided_slice %177 {offsets = [0, 0, 0], sizes = [2, 8, 8], strides = [1, 1, 1]} : vector<8x8x8xf32> to vector<2x8x8xf32>
    %179 = vector.extract_strided_slice %177 {offsets = [2, 0, 0], sizes = [2, 8, 8], strides = [1, 1, 1]} : vector<8x8x8xf32> to vector<2x8x8xf32>
    %180 = arith.addf %178, %179 : vector<2x8x8xf32>
    %181 = vector.extract_strided_slice %177 {offsets = [4, 0, 0], sizes = [2, 8, 8], strides = [1, 1, 1]} : vector<8x8x8xf32> to vector<2x8x8xf32>
    %182 = arith.addf %180, %181 : vector<2x8x8xf32>
    %183 = vector.extract_strided_slice %177 {offsets = [6, 0, 0], sizes = [2, 8, 8], strides = [1, 1, 1]} : vector<8x8x8xf32> to vector<2x8x8xf32>
    %184 = arith.addf %182, %183 : vector<2x8x8xf32>
    %cst_62 = arith.constant 2.500000e-01 : f32
    %185 = vector.broadcast %cst_62 : f32 to vector<2x8x8xf32>
    %186 = arith.mulf %184, %185 : vector<2x8x8xf32>
    "tpu.trace_start"() <{level = 10 : i32, message = "zqk,zkd->zqd"}> : () -> ()
    %cst_63 = arith.constant dense<0.000000e+00> : vector<8x8x8xf32>
    %187 = tpu.matmul %177, %165, %cst_63 {dimension_numbers = #tpu.dot_dimension_numbers<[2], [1], [1], [2], [0, 0, 0, 1, 1, 2], [0], [0]>} : vector<8x8x8xf32>, vector<8x8x8xf32>, vector<8x8x8xf32> -> vector<8x8x8xf32>
    "tpu.trace_stop"() : () -> ()
    %c0_64 = arith.constant 0 : index
    %c0_65 = arith.constant 0 : index
    %c0_66 = arith.constant 0 : index
    %188 = vector.load %arg16[%c0_64, %c0_65, %c0_66] : memref<4x8x32xbf16, #tpu.memory_space<vmem>>, vector<4x8x32xbf16>
    %cst_67 = arith.constant 0.000000e+00 : f32
    %189 = vector.broadcast %cst_67 : f32 to vector<16x32xf32>
    %190 = vector.extract_strided_slice %187 {offsets = [0, 0, 0], sizes = [2, 8, 8], strides = [1, 1, 1]} : vector<8x8x8xf32> to vector<2x8x8xf32>
    %191 = vector.shape_cast %190 : vector<2x8x8xf32> to vector<16x8xf32>
    %192 = arith.truncf %191 : vector<16x8xf32> to vector<16x8xbf16>
    %193 = vector.extract_strided_slice %188 {offsets = [0, 0, 0], sizes = [1, 8, 32], strides = [1, 1, 1]} : vector<4x8x32xbf16> to vector<1x8x32xbf16>
    %194 = vector.shape_cast %193 : vector<1x8x32xbf16> to vector<8x32xbf16>
    %cst_68 = arith.constant dense<0.000000e+00> : vector<16x32xf32>
    %195 = tpu.matmul %192, %194, %cst_68 {dimension_numbers = #tpu.dot_dimension_numbers<[1], [0], [0], [1], [0, 0, 1, 1], [], []>} : vector<16x8xbf16>, vector<8x32xbf16>, vector<16x32xf32> -> vector<16x32xf32>
    %196 = arith.addf %189, %195 : vector<16x32xf32>
    %197 = vector.extract_strided_slice %187 {offsets = [2, 0, 0], sizes = [2, 8, 8], strides = [1, 1, 1]} : vector<8x8x8xf32> to vector<2x8x8xf32>
    %198 = vector.shape_cast %197 : vector<2x8x8xf32> to vector<16x8xf32>
    %199 = arith.truncf %198 : vector<16x8xf32> to vector<16x8xbf16>
    %200 = vector.extract_strided_slice %188 {offsets = [1, 0, 0], sizes = [1, 8, 32], strides = [1, 1, 1]} : vector<4x8x32xbf16> to vector<1x8x32xbf16>
    %201 = vector.shape_cast %200 : vector<1x8x32xbf16> to vector<8x32xbf16>
    %cst_69 = arith.constant dense<0.000000e+00> : vector<16x32xf32>
    %202 = tpu.matmul %199, %201, %cst_69 {dimension_numbers = #tpu.dot_dimension_numbers<[1], [0], [0], [1], [0, 0, 1, 1], [], []>} : vector<16x8xbf16>, vector<8x32xbf16>, vector<16x32xf32> -> vector<16x32xf32>
    %203 = arith.addf %196, %202 : vector<16x32xf32>
    %204 = vector.extract_strided_slice %187 {offsets = [4, 0, 0], sizes = [2, 8, 8], strides = [1, 1, 1]} : vector<8x8x8xf32> to vector<2x8x8xf32>
    %205 = vector.shape_cast %204 : vector<2x8x8xf32> to vector<16x8xf32>
    %206 = arith.truncf %205 : vector<16x8xf32> to vector<16x8xbf16>
    %207 = vector.extract_strided_slice %188 {offsets = [2, 0, 0], sizes = [1, 8, 32], strides = [1, 1, 1]} : vector<4x8x32xbf16> to vector<1x8x32xbf16>
    %208 = vector.shape_cast %207 : vector<1x8x32xbf16> to vector<8x32xbf16>
    %cst_70 = arith.constant dense<0.000000e+00> : vector<16x32xf32>
    %209 = tpu.matmul %206, %208, %cst_70 {dimension_numbers = #tpu.dot_dimension_numbers<[1], [0], [0], [1], [0, 0, 1, 1], [], []>} : vector<16x8xbf16>, vector<8x32xbf16>, vector<16x32xf32> -> vector<16x32xf32>
    %210 = arith.addf %203, %209 : vector<16x32xf32>
    %211 = vector.extract_strided_slice %187 {offsets = [6, 0, 0], sizes = [2, 8, 8], strides = [1, 1, 1]} : vector<8x8x8xf32> to vector<2x8x8xf32>
    %212 = vector.shape_cast %211 : vector<2x8x8xf32> to vector<16x8xf32>
    %213 = arith.truncf %212 : vector<16x8xf32> to vector<16x8xbf16>
    %214 = vector.extract_strided_slice %188 {offsets = [3, 0, 0], sizes = [1, 8, 32], strides = [1, 1, 1]} : vector<4x8x32xbf16> to vector<1x8x32xbf16>
    %215 = vector.shape_cast %214 : vector<1x8x32xbf16> to vector<8x32xbf16>
    %cst_71 = arith.constant dense<0.000000e+00> : vector<16x32xf32>
    %216 = tpu.matmul %213, %215, %cst_71 {dimension_numbers = #tpu.dot_dimension_numbers<[1], [0], [0], [1], [0, 0, 1, 1], [], []>} : vector<16x8xbf16>, vector<8x32xbf16>, vector<16x32xf32> -> vector<16x32xf32>
    %217 = arith.addf %210, %216 : vector<16x32xf32>
    %c0_72 = arith.constant 0 : index
    %c0_73 = arith.constant 0 : index
    %218 = vector.load %arg17[%c0_72, %c0_73] : memref<1x32xf32, #tpu.memory_space<vmem>>, vector<1x32xf32>
    %219 = vector.broadcast %218 : vector<1x32xf32> to vector<16x32xf32>
    %220 = arith.addf %217, %219 : vector<16x32xf32>
    %221 = arith.addf %120, %220 : vector<16x32xf32>
    %c0_74 = arith.constant 0 : index
    %c0_75 = arith.constant 0 : index
    %222 = vector.load %arg22[%c0_74, %c0_75] : memref<1x32xf32, #tpu.memory_space<vmem>>, vector<1x32xf32>
    %c0_76 = arith.constant 0 : index
    %c0_77 = arith.constant 0 : index
    %223 = vector.load %arg23[%c0_76, %c0_77] : memref<1x32xf32, #tpu.memory_space<vmem>>, vector<1x32xf32>
    %cst_78 = arith.constant dense<0.000000e+00> : vector<16xf32>
    %224 = vector.multi_reduction <add>, %221, %cst_78 [1] : vector<16x32xf32> to vector<16xf32>
    %225 = vector.shape_cast %224 : vector<16xf32> to vector<16x1xf32>
    %cst_79 = arith.constant 3.200000e+01 : f32
    %226 = vector.broadcast %cst_79 : f32 to vector<16x1xf32>
    %227 = arith.divf %225, %226 : vector<16x1xf32>
    %228 = vector.broadcast %227 : vector<16x1xf32> to vector<16x32xf32>
    %229 = arith.subf %221, %228 : vector<16x32xf32>
    %230 = arith.mulf %229, %229 : vector<16x32xf32>
    %cst_80 = arith.constant dense<0.000000e+00> : vector<16xf32>
    %231 = vector.multi_reduction <add>, %230, %cst_80 [1] : vector<16x32xf32> to vector<16xf32>
    %232 = vector.shape_cast %231 : vector<16xf32> to vector<16x1xf32>
    %cst_81 = arith.constant 3.200000e+01 : f32
    %233 = vector.broadcast %cst_81 : f32 to vector<16x1xf32>
    %234 = arith.divf %232, %233 : vector<16x1xf32>
    %235 = vector.broadcast %227 : vector<16x1xf32> to vector<16x32xf32>
    %236 = arith.subf %221, %235 : vector<16x32xf32>
    %cst_82 = arith.constant 9.99999974E-6 : f32
    %237 = vector.broadcast %cst_82 : f32 to vector<16x1xf32>
    %238 = arith.addf %234, %237 : vector<16x1xf32>
    %239 = math.rsqrt %238 : vector<16x1xf32>
    %240 = vector.broadcast %239 : vector<16x1xf32> to vector<16x32xf32>
    %241 = arith.mulf %236, %240 : vector<16x32xf32>
    %242 = vector.broadcast %222 : vector<1x32xf32> to vector<16x32xf32>
    %243 = arith.mulf %241, %242 : vector<16x32xf32>
    %244 = vector.broadcast %223 : vector<1x32xf32> to vector<16x32xf32>
    %245 = arith.addf %243, %244 : vector<16x32xf32>
    %246 = arith.truncf %245 : vector<16x32xf32> to vector<16x32xbf16>
    %c0_83 = arith.constant 0 : index
    %c0_84 = arith.constant 0 : index
    %247 = vector.load %arg18[%c0_83, %c0_84] : memref<32x1024xbf16, #tpu.memory_space<vmem>>, vector<32x1024xbf16>
    %cst_85 = arith.constant dense<0.000000e+00> : vector<16x1024xf32>
    %248 = tpu.matmul %246, %247, %cst_85 {dimension_numbers = #tpu.dot_dimension_numbers<[1], [0], [0], [1], [0, 0, 1, 1], [], []>} : vector<16x32xbf16>, vector<32x1024xbf16>, vector<16x1024xf32> -> vector<16x1024xf32>
    %cst_86 = arith.constant 0.000000e+00 : f32
    %249 = vector.broadcast %cst_86 : f32 to vector<16x1024xf32>
    %250 = arith.maximumf %248, %249 : vector<16x1024xf32>
    %251 = arith.truncf %250 : vector<16x1024xf32> to vector<16x1024xbf16>
    %c0_87 = arith.constant 0 : index
    %c0_88 = arith.constant 0 : index
    %252 = vector.load %arg19[%c0_87, %c0_88] : memref<1024x32xbf16, #tpu.memory_space<vmem>>, vector<1024x32xbf16>
    %cst_89 = arith.constant dense<0.000000e+00> : vector<16x32xf32>
    %253 = tpu.matmul %251, %252, %cst_89 {dimension_numbers = #tpu.dot_dimension_numbers<[1], [0], [0], [1], [0, 0, 1, 1], [], []>} : vector<16x1024xbf16>, vector<1024x32xbf16>, vector<16x32xf32> -> vector<16x32xf32>
    %254 = arith.addf %253, %245 : vector<16x32xf32>
    %cst_90 = arith.constant dense<0.000000e+00> : vector<16xf32>
    %255 = vector.multi_reduction <add>, %254, %cst_90 [1] : vector<16x32xf32> to vector<16xf32>
    %256 = vector.shape_cast %255 : vector<16xf32> to vector<16x1xf32>
    %cst_91 = arith.constant 3.200000e+01 : f32
    %257 = vector.broadcast %cst_91 : f32 to vector<16x1xf32>
    %258 = arith.divf %256, %257 : vector<16x1xf32>
    %259 = vector.broadcast %258 : vector<16x1xf32> to vector<16x32xf32>
    %260 = arith.subf %254, %259 : vector<16x32xf32>
    %261 = arith.mulf %260, %260 : vector<16x32xf32>
    %cst_92 = arith.constant dense<0.000000e+00> : vector<16xf32>
    %262 = vector.multi_reduction <add>, %261, %cst_92 [1] : vector<16x32xf32> to vector<16xf32>
    %263 = vector.shape_cast %262 : vector<16xf32> to vector<16x1xf32>
    %cst_93 = arith.constant 3.200000e+01 : f32
    %264 = vector.broadcast %cst_93 : f32 to vector<16x1xf32>
    %265 = arith.divf %263, %264 : vector<16x1xf32>
    %266 = vector.broadcast %258 : vector<16x1xf32> to vector<16x32xf32>
    %267 = arith.subf %254, %266 : vector<16x32xf32>
    %cst_94 = arith.constant 9.99999974E-6 : f32
    %268 = vector.broadcast %cst_94 : f32 to vector<16x1xf32>
    %269 = arith.addf %265, %268 : vector<16x1xf32>
    %270 = math.rsqrt %269 : vector<16x1xf32>
    %271 = vector.broadcast %270 : vector<16x1xf32> to vector<16x32xf32>
    %272 = arith.mulf %267, %271 : vector<16x32xf32>
    %cst_95 = arith.constant 1.000000e+00 : f32
    %273 = vector.broadcast %cst_95 : f32 to vector<16x32xf32>
    %274 = arith.mulf %272, %273 : vector<16x32xf32>
    %cst_96 = arith.constant 0.000000e+00 : f32
    %275 = vector.broadcast %cst_96 : f32 to vector<16x32xf32>
    %276 = arith.addf %274, %275 : vector<16x32xf32>
    %277 = arith.addf %245, %276 : vector<16x32xf32>
    %c0_97 = arith.constant 0 : index
    %c0_98 = arith.constant 0 : index
    %278 = vector.load %arg24[%c0_97, %c0_98] : memref<1x32xf32, #tpu.memory_space<vmem>>, vector<1x32xf32>
    %c0_99 = arith.constant 0 : index
    %c0_100 = arith.constant 0 : index
    %279 = vector.load %arg25[%c0_99, %c0_100] : memref<1x32xf32, #tpu.memory_space<vmem>>, vector<1x32xf32>
    %cst_101 = arith.constant dense<0.000000e+00> : vector<16xf32>
    %280 = vector.multi_reduction <add>, %277, %cst_101 [1] : vector<16x32xf32> to vector<16xf32>
    %281 = vector.shape_cast %280 : vector<16xf32> to vector<16x1xf32>
    %cst_102 = arith.constant 3.200000e+01 : f32
    %282 = vector.broadcast %cst_102 : f32 to vector<16x1xf32>
    %283 = arith.divf %281, %282 : vector<16x1xf32>
    %284 = vector.broadcast %283 : vector<16x1xf32> to vector<16x32xf32>
    %285 = arith.subf %277, %284 : vector<16x32xf32>
    %286 = arith.mulf %285, %285 : vector<16x32xf32>
    %cst_103 = arith.constant dense<0.000000e+00> : vector<16xf32>
    %287 = vector.multi_reduction <add>, %286, %cst_103 [1] : vector<16x32xf32> to vector<16xf32>
    %288 = vector.shape_cast %287 : vector<16xf32> to vector<16x1xf32>
    %cst_104 = arith.constant 3.200000e+01 : f32
    %289 = vector.broadcast %cst_104 : f32 to vector<16x1xf32>
    %290 = arith.divf %288, %289 : vector<16x1xf32>
    %291 = vector.broadcast %283 : vector<16x1xf32> to vector<16x32xf32>
    %292 = arith.subf %277, %291 : vector<16x32xf32>
    %cst_105 = arith.constant 9.99999974E-6 : f32
    %293 = vector.broadcast %cst_105 : f32 to vector<16x1xf32>
    %294 = arith.addf %290, %293 : vector<16x1xf32>
    %295 = math.rsqrt %294 : vector<16x1xf32>
    %296 = vector.broadcast %295 : vector<16x1xf32> to vector<16x32xf32>
    %297 = arith.mulf %292, %296 : vector<16x32xf32>
    %298 = vector.broadcast %278 : vector<1x32xf32> to vector<16x32xf32>
    %299 = arith.mulf %297, %298 : vector<16x32xf32>
    %300 = vector.broadcast %279 : vector<1x32xf32> to vector<16x32xf32>
    %301 = arith.addf %299, %300 : vector<16x32xf32>
    %302 = vector.shape_cast %301 : vector<16x32xf32> to vector<2x8x32xf32>
    %c0_106 = arith.constant 0 : index
    %c0_107 = arith.constant 0 : index
    %c0_108 = arith.constant 0 : index
    %303 = vector.load %arg26[%c0_106, %c0_107, %c0_108] : memref<2x8x32xf32, #tpu.memory_space<vmem>>, vector<2x8x32xf32>
    tpu.vector_store %arg26[%c0_106, %c0_107, %c0_108], %302 {strides = array<i32>} : memref<2x8x32xf32, #tpu.memory_space<vmem>>, vector<2x8x32xf32>,
    %c0_109 = arith.constant 0 : index
    %c0_110 = arith.constant 0 : index
    %c0_111 = arith.constant 0 : index
    %304 = vector.load %arg27[%c0_109, %c0_110, %c0_111] : memref<2x8x8xf32, #tpu.memory_space<vmem>>, vector<2x8x8xf32>
    tpu.vector_store %arg27[%c0_109, %c0_110, %c0_111], %186 {strides = array<i32>} : memref<2x8x8xf32, #tpu.memory_space<vmem>>, vector<2x8x8xf32>,
    return
  }
}

</mosaic_0001>

<llo_original>
// kernel: decoder_layer.1
$region0: #{decoder_layer.1}
  #allocation0 [shape = 'u32[]', space=smem, size = 0x4, offset = 0x4, fixed_abs, tag = 'smem constant byte address 0x4 - core index']
  #allocation1 [shape = 'u32[144,128]{1,0:T(1,128)}', space=vmem, size = 0x12000, scoped, tag = 'internal scratch']
  %s0 = inlined_call_operand.vmem [shape: f32[2,8,32], index: 0, kind: input, shape index: {}]
  %s1 = inlined_call_operand.vmem [shape: f32[2,8,32], index: 1, kind: input, shape index: {}]
  %s2 = inlined_call_operand.vmem [shape: bf16[32,32], index: 2, kind: input, shape index: {}]
  %s3 = inlined_call_operand.vmem [shape: bf16[32,32], index: 3, kind: input, shape index: {}]
  %s4 = inlined_call_operand.vmem [shape: bf16[32,32], index: 4, kind: input, shape index: {}]
  %s5 = inlined_call_operand.vmem [shape: f32[1,32], index: 5, kind: input, shape index: {}]
  %s6 = inlined_call_operand.vmem [shape: f32[1,32], index: 6, kind: input, shape index: {}]
  %s7 = inlined_call_operand.vmem [shape: f32[1,32], index: 7, kind: input, shape index: {}]
  %s8 = inlined_call_operand.vmem [shape: bf16[4,8,32], index: 8, kind: input, shape index: {}]
  %s9 = inlined_call_operand.vmem [shape: f32[1,32], index: 9, kind: input, shape index: {}]
  %s10 = inlined_call_operand.vmem [shape: bf16[32,32], index: 10, kind: input, shape index: {}]
  %s11 = inlined_call_operand.vmem [shape: bf16[32,32], index: 11, kind: input, shape index: {}]
  %s12 = inlined_call_operand.vmem [shape: bf16[32,32], index: 12, kind: input, shape index: {}]
  %s13 = inlined_call_operand.vmem [shape: f32[1,32], index: 13, kind: input, shape index: {}]
  %s14 = inlined_call_operand.vmem [shape: f32[1,32], index: 14, kind: input, shape index: {}]
  %s15 = inlined_call_operand.vmem [shape: f32[1,32], index: 15, kind: input, shape index: {}]
  %s16 = inlined_call_operand.vmem [shape: bf16[4,8,32], index: 16, kind: input, shape index: {}]
  %s17 = inlined_call_operand.vmem [shape: f32[1,32], index: 17, kind: input, shape index: {}]
  %s18 = inlined_call_operand.vmem [shape: bf16[32,1024], index: 18, kind: input, shape index: {}]
  %s19 = inlined_call_operand.vmem [shape: bf16[1024,32], index: 19, kind: input, shape index: {}]
  %s20 = inlined_call_operand.vmem [shape: f32[1,32], index: 20, kind: input, shape index: {}]
  %s21 = inlined_call_operand.vmem [shape: f32[1,32], index: 21, kind: input, shape index: {}]
  %s22 = inlined_call_operand.vmem [shape: f32[1,32], index: 22, kind: input, shape index: {}]
  %s23 = inlined_call_operand.vmem [shape: f32[1,32], index: 23, kind: input, shape index: {}]
  %s24 = inlined_call_operand.vmem [shape: f32[1,32], index: 24, kind: input, shape index: {}]
  %s25 = inlined_call_operand.vmem [shape: f32[1,32], index: 25, kind: input, shape index: {}]
  %s26 = inlined_call_operand.hbm [shape: f32[2,8,32], index: 26, kind: output, shape index: {0}]
  %s27 = inlined_call_operand.hbm [shape: f32[2,8,8], index: 27, kind: output, shape index: {1}]
  %28 = xla_tuple %s26, %s27
  %s29 = sld [smem:[#allocation0]]
  $region122: #{decoder_layer.1} parent=0
    _
  %s31 = ssub.s32 1, %s29
  %s32 = scalar_select 0, %s31, %s29
  $region1: #{decoder_layer.1} parent=0
    #allocation2 [shape = 'u8[8192]{0}', space=vmem, size = 0x2000, scoped, tag = 'output window, operand 0, single buffered']
    #allocation3 [shape = 's32[1]{0}', space=sflag, size = 0x4, scoped, tag = 'scoped memory for decoder_layer.1']
    #allocation4 [shape = 'u8[8192]{0}', space=vmem, size = 0x2000, scoped, tag = 'output window, operand 1, single buffered']
    #allocation5 [shape = 's32[1]{0}', space=sflag, size = 0x4, scoped, tag = 'scoped memory for decoder_layer.1']
    %33 = vsyncpa [#allocation3], 0
    %34 = vsyncpa [#allocation5], 0
    // Predicated region
    $region2: #{decoder_layer.1} parent=1 // pred_check
      _
    $region3: #{decoder_layer.1} parent=1 // pred_check_branch
      %36 = sbr.rel (0) target = $region5
    $region4: #{decoder_layer.1} parent=1 // pred_region
      _
    $region5: #{decoder_layer.1} parent=1 // pred_fallthru
      _
    // Predicated region
    $region6: #{decoder_layer.1} parent=1 // pred_check
      _
    $region7: #{decoder_layer.1} parent=1 // pred_check_branch
      %38 = sbr.rel (0) target = $region9
    $region8: #{decoder_layer.1} parent=1 // pred_region
      _
    $region9: #{decoder_layer.1} parent=1 // pred_fallthru
      _
    // Predicated region
    $region10: #{decoder_layer.1} parent=1 // pred_check
      _
    $region11: #{decoder_layer.1} parent=1 // pred_check_branch
      %40 = sbr.rel (0) target = $region13
    $region12: #{decoder_layer.1} parent=1 // pred_region
      _
    $region13: #{decoder_layer.1} parent=1 // pred_fallthru
      _
    // Predicated region
    $region14: #{decoder_layer.1} parent=1 // pred_check
      _
    $region15: #{decoder_layer.1} parent=1 // pred_check_branch
      %42 = sbr.rel (0) target = $region17
    $region16: #{decoder_layer.1} parent=1 // pred_region
      _
    $region17: #{decoder_layer.1} parent=1 // pred_fallthru
      _
    // Predicated region
    $region18: #{decoder_layer.1} parent=1 // pred_check
      _
    $region19: #{decoder_layer.1} parent=1 // pred_check_branch
      %44 = sbr.rel (0) target = $region21
    $region20: #{decoder_layer.1} parent=1 // pred_region
      _
    $region21: #{decoder_layer.1} parent=1 // pred_fallthru
      _
    // Predicated region
    $region22: #{decoder_layer.1} parent=1 // pred_check
      _
    $region23: #{decoder_layer.1} parent=1 // pred_check_branch
      %46 = sbr.rel (0) target = $region25
    $region24: #{decoder_layer.1} parent=1 // pred_region
      _
    $region25: #{decoder_layer.1} parent=1 // pred_fallthru
      _
    // Predicated region
    $region26: #{decoder_layer.1} parent=1 // pred_check
      _
    $region27: #{decoder_layer.1} parent=1 // pred_check_branch
      %48 = sbr.rel (0) target = $region29
    $region28: #{decoder_layer.1} parent=1 // pred_region
      _
    $region29: #{decoder_layer.1} parent=1 // pred_fallthru
      _
    // Predicated region
    $region30: #{decoder_layer.1} parent=1 // pred_check
      _
    $region31: #{decoder_layer.1} parent=1 // pred_check_branch
      %50 = sbr.rel (0) target = $region33
    $region32: #{decoder_layer.1} parent=1 // pred_region
      _
    $region33: #{decoder_layer.1} parent=1 // pred_fallthru
      _
    // Predicated region
    $region34: #{decoder_layer.1} parent=1 // pred_check
      _
    $region35: #{decoder_layer.1} parent=1 // pred_check_branch
      %52 = sbr.rel (0) target = $region37
    $region36: #{decoder_layer.1} parent=1 // pred_region
      _
    $region37: #{decoder_layer.1} parent=1 // pred_fallthru
      _
    // Predicated region
    $region38: #{decoder_layer.1} parent=1 // pred_check
      _
    $region39: #{decoder_layer.1} parent=1 // pred_check_branch
      %54 = sbr.rel (0) target = $region41
    $region40: #{decoder_layer.1} parent=1 // pred_region
      _
    $region41: #{decoder_layer.1} parent=1 // pred_fallthru
      _
    // Predicated region
    $region42: #{decoder_layer.1} parent=1 // pred_check
      _
    $region43: #{decoder_layer.1} parent=1 // pred_check_branch
      %56 = sbr.rel (0) target = $region45
    $region44: #{decoder_layer.1} parent=1 // pred_region
      _
    $region45: #{decoder_layer.1} parent=1 // pred_fallthru
      _
    // Predicated region
    $region46: #{decoder_layer.1} parent=1 // pred_check
      _
    $region47: #{decoder_layer.1} parent=1 // pred_check_branch
      %58 = sbr.rel (0) target = $region49
    $region48: #{decoder_layer.1} parent=1 // pred_region
      _
    $region49: #{decoder_layer.1} parent=1 // pred_fallthru
      _
    // Predicated region
    $region50: #{decoder_layer.1} parent=1 // pred_check
      _
    $region51: #{decoder_layer.1} parent=1 // pred_check_branch
      %60 = sbr.rel (0) target = $region53
    $region52: #{decoder_layer.1} parent=1 // pred_region
      _
    $region53: #{decoder_layer.1} parent=1 // pred_fallthru
      _
    // Predicated region
    $region54: #{decoder_layer.1} parent=1 // pred_check
      _
    $region55: #{decoder_layer.1} parent=1 // pred_check_branch
      %62 = sbr.rel (0) target = $region57
    $region56: #{decoder_layer.1} parent=1 // pred_region
      _
    $region57: #{decoder_layer.1} parent=1 // pred_fallthru
      _
    // Predicated region
    $region58: #{decoder_layer.1} parent=1 // pred_check
      _
    $region59: #{decoder_layer.1} parent=1 // pred_check_branch
      %64 = sbr.rel (0) target = $region61
    $region60: #{decoder_layer.1} parent=1 // pred_region
      _
    $region61: #{decoder_layer.1} parent=1 // pred_fallthru
      _
    // Predicated region
    $region62: #{decoder_layer.1} parent=1 // pred_check
      _
    $region63: #{decoder_layer.1} parent=1 // pred_check_branch
      %66 = sbr.rel (0) target = $region65
    $region64: #{decoder_layer.1} parent=1 // pred_region
      _
    $region65: #{decoder_layer.1} parent=1 // pred_fallthru
      _
    // Predicated region
    $region66: #{decoder_layer.1} parent=1 // pred_check
      _
    $region67: #{decoder_layer.1} parent=1 // pred_check_branch
      %68 = sbr.rel (0) target = $region69
    $region68: #{decoder_layer.1} parent=1 // pred_region
      _
    $region69: #{decoder_layer.1} parent=1 // pred_fallthru
      _
    // Predicated region
    $region70: #{decoder_layer.1} parent=1 // pred_check
      _
    $region71: #{decoder_layer.1} parent=1 // pred_check_branch
      %70 = sbr.rel (0) target = $region73
    $region72: #{decoder_layer.1} parent=1 // pred_region
      _
    $region73: #{decoder_layer.1} parent=1 // pred_fallthru
      _
    // Predicated region
    $region74: #{decoder_layer.1} parent=1 // pred_check
      _
    $region75: #{decoder_layer.1} parent=1 // pred_check_branch
      %72 = sbr.rel (0) target = $region77
    $region76: #{decoder_layer.1} parent=1 // pred_region
      _
    $region77: #{decoder_layer.1} parent=1 // pred_fallthru
      _
    // Predicated region
    $region78: #{decoder_layer.1} parent=1 // pred_check
      _
    $region79: #{decoder_layer.1} parent=1 // pred_check_branch
      %74 = sbr.rel (0) target = $region81
    $region80: #{decoder_layer.1} parent=1 // pred_region
      _
    $region81: #{decoder_layer.1} parent=1 // pred_fallthru
      _
    // Predicated region
    $region82: #{decoder_layer.1} parent=1 // pred_check
      _
    $region83: #{decoder_layer.1} parent=1 // pred_check_branch
      %76 = sbr.rel (0) target = $region85
    $region84: #{decoder_layer.1} parent=1 // pred_region
      _
    $region85: #{decoder_layer.1} parent=1 // pred_fallthru
      _
    // Predicated region
    $region86: #{decoder_layer.1} parent=1 // pred_check
      _
    $region87: #{decoder_layer.1} parent=1 // pred_check_branch
      %78 = sbr.rel (0) target = $region89
    $region88: #{decoder_layer.1} parent=1 // pred_region
      _
    $region89: #{decoder_layer.1} parent=1 // pred_fallthru
      _
    // Predicated region
    $region90: #{decoder_layer.1} parent=1 // pred_check
      _
    $region91: #{decoder_layer.1} parent=1 // pred_check_branch
      %80 = sbr.rel (0) target = $region93
    $region92: #{decoder_layer.1} parent=1 // pred_region
      _
    $region93: #{decoder_layer.1} parent=1 // pred_fallthru
      _
    // Predicated region
    $region94: #{decoder_layer.1} parent=1 // pred_check
      _
    $region95: #{decoder_layer.1} parent=1 // pred_check_branch
      %82 = sbr.rel (0) target = $region97
    $region96: #{decoder_layer.1} parent=1 // pred_region
      _
    $region97: #{decoder_layer.1} parent=1 // pred_fallthru
      _
    // Predicated region
    $region98: #{decoder_layer.1} parent=1 // pred_check
      _
    $region99: #{decoder_layer.1} parent=1 // pred_check_branch
      %84 = sbr.rel (0) target = $region101
    $region100: #{decoder_layer.1} parent=1 // pred_region
      _
    $region101: #{decoder_layer.1} parent=1 // pred_fallthru
      _
    // Predicated region
    $region102: #{decoder_layer.1} parent=1 // pred_check
      _
    $region103: #{decoder_layer.1} parent=1 // pred_check_branch
      %86 = sbr.rel (0) target = $region105
    $region104: #{decoder_layer.1} parent=1 // pred_region
      _
    $region105: #{decoder_layer.1} parent=1 // pred_fallthru
      _
    %v88 = vld [vmem:[%s0] sm:$0xff]
    %v89 = vld [vmem:[%s0 + $0x8] sm:$0xff]
    %v90 = vld [vmem:[%s1] sm:$0xff]
    %v91 = vld [vmem:[%s1 + $0x8] sm:$0xff]
    %v92 = vpack.c.bf16 %v89, %v88
    %v93 = vld [vmem:[%s2] sm:$0xf]
    %v94 = vld [vmem:[%s2 + $0x4] sm:$0xf]
    %v95 = vld [vmem:[%s2 + $0x8] sm:$0xf]
    %v96 = vld [vmem:[%s2 + $0xc] sm:$0xf]
    %v97 = vld [vmem:[%s5] sm:$0x1]
    %v99 = vlaneseq
    %v100 = vshrl.u32 %v99, 7
    %v101 = vsub.s32 0, %v100
    %v102 = vrot.slane %v97, %v101
    %v108 = vunpack.c.l.b16 %v93
    %v109 = vunpack.c.l.b16 %v94
    %v110 = vunpack.c.l.b16 %v95
    %v111 = vunpack.c.l.b16 %v96
    %v112 = vpack.c.b16 %v109, %v108
    %v113 = vpack.c.b16 %v111, %v110
    %vm116 = vcmask 261120
    %v118 = vsel %vm116, %v92, 0
    %120 = vmatprep.subr.bf16.mxu0 0
    %121 = vmatpush1.bf16.msra.mxu0 %v112
    %122 = vmatprep.subr.bf16.mxu0 0
    %123 = vmatpush1.bf16.msra.mxu0 %v113
    %124 = vmatprep.subr.bf16.mxu0 0
    %125 = vmatpush1.bf16.msra.mxu0 0
    %126 = vmatprep.subr.bf16.mxu0 0
    %127 = vmatpush1.bf16.msra.mxu0 0
    %128 = vmatprep.subr.bf16.mxu0 0
    %129 = vmatpush1.bf16.msra.mxu0 0
    %130 = vmatprep.subr.bf16.mxu0 0
    %131 = vmatpush1.bf16.msra.mxu0 0
    %132 = vmatprep.subr.bf16.mxu0 0
    %133 = vmatpush1.bf16.msra.mxu0 0
    %134 = vmatprep.subr.bf16.mxu0 0
    %135 = vmatpush1.bf16.msra.mxu0 0
    %136 = vmatprep.subr.bf16.mxu0 0
    %137 = vmatpush1.bf16.msra.mxu0 0
    %138 = vmatprep.subr.bf16.mxu0 0
    %139 = vmatpush1.bf16.msra.mxu0 0
    %140 = vmatprep.subr.bf16.mxu0 0
    %141 = vmatpush1.bf16.msra.mxu0 0
    %142 = vmatprep.subr.bf16.mxu0 0
    %143 = vmatpush1.bf16.msra.mxu0 0
    %144 = vmatprep.subr.bf16.mxu0 0
    %145 = vmatpush1.bf16.msra.mxu0 0
    %146 = vmatprep.subr.bf16.mxu0 0
    %147 = vmatpush1.bf16.msra.mxu0 0
    %148 = vmatprep.subr.bf16.mxu0 0
    %149 = vmatpush1.bf16.msra.mxu0 0
    %150 = vmatprep.subr.bf16.mxu0 0
    %151 = vmatpush1.bf16.msra.mxu0 0
    %152 = vmatprep.mubr.bf16.mxu0 0
    %153 = vmatmul.mubr.bf16.gmra.mrb[0].mxu0 %v118
    %v154 = vpop.f32.mrb[0].mxu0
    %v155 = vadd.f32 %v102, %v154
    %v156 = vpop.f32.mrb[0].mxu0
    %v157 = vpop.f32.mrb[0].mxu0
    %v158 = vadd.f32 %v102, %v157
    %v159 = vpop.f32.mrb[0].mxu0
    %160 = vdwg.mxu0
    %v161 = vld [vmem:[%s3] sm:$0xf]
    %v162 = vld [vmem:[%s3 + $0x4] sm:$0xf]
    %v163 = vld [vmem:[%s3 + $0x8] sm:$0xf]
    %v164 = vld [vmem:[%s3 + $0xc] sm:$0xf]
    %v165 = vld [vmem:[%s6] sm:$0x1]
    %v167 = vlaneseq
    %v168 = vshrl.u32 %v167, 7
    %v169 = vsub.s32 0, %v168
    %v170 = vrot.slane %v165, %v169
    %v176 = vunpack.c.l.b16 %v161
    %v177 = vunpack.c.l.b16 %v162
    %v178 = vunpack.c.l.b16 %v163
    %v179 = vunpack.c.l.b16 %v164
    %v180 = vpack.c.b16 %v177, %v176
    %v181 = vpack.c.b16 %v179, %v178
    %184 = vmatprep.subr.bf16.mxu0 0
    %185 = vmatpush1.bf16.msra.mxu0 %v180
    %186 = vmatprep.subr.bf16.mxu0 0
    %187 = vmatpush1.bf16.msra.mxu0 %v181
    %188 = vmatprep.subr.bf16.mxu0 0
    %189 = vmatpush1.bf16.msra.mxu0 0
    %190 = vmatprep.subr.bf16.mxu0 0
    %191 = vmatpush1.bf16.msra.mxu0 0
    %192 = vmatprep.subr.bf16.mxu0 0
    %193 = vmatpush1.bf16.msra.mxu0 0
    %194 = vmatprep.subr.bf16.mxu0 0
    %195 = vmatpush1.bf16.msra.mxu0 0
    %196 = vmatprep.subr.bf16.mxu0 0
    %197 = vmatpush1.bf16.msra.mxu0 0
    %198 = vmatprep.subr.bf16.mxu0 0
    %199 = vmatpush1.bf16.msra.mxu0 0
    %200 = vmatprep.subr.bf16.mxu0 0
    %201 = vmatpush1.bf16.msra.mxu0 0
    %202 = vmatprep.subr.bf16.mxu0 0
    %203 = vmatpush1.bf16.msra.mxu0 0
    %204 = vmatprep.subr.bf16.mxu0 0
    %205 = vmatpush1.bf16.msra.mxu0 0
    %206 = vmatprep.subr.bf16.mxu0 0
    %207 = vmatpush1.bf16.msra.mxu0 0
    %208 = vmatprep.subr.bf16.mxu0 0
    %209 = vmatpush1.bf16.msra.mxu0 0
    %210 = vmatprep.subr.bf16.mxu0 0
    %211 = vmatpush1.bf16.msra.mxu0 0
    %212 = vmatprep.subr.bf16.mxu0 0
    %213 = vmatpush1.bf16.msra.mxu0 0
    %214 = vmatprep.subr.bf16.mxu0 0
    %215 = vmatpush1.bf16.msra.mxu0 0
    %216 = vmatprep.mubr.bf16.mxu0 0
    %217 = vmatmul.mubr.bf16.gmra.mrb[0].mxu0 %v118
    %v218 = vpop.f32.mrb[0].mxu0
    %v219 = vadd.f32 %v170, %v218
    %v220 = vpop.f32.mrb[0].mxu0
    %v221 = vpop.f32.mrb[0].mxu0
    %v222 = vadd.f32 %v170, %v221
    %v223 = vpop.f32.mrb[0].mxu0
    %224 = vdwg.mxu0
    %v225 = vld [vmem:[%s4] sm:$0xf]
    %v226 = vld [vmem:[%s4 + $0x4] sm:$0xf]
    %v227 = vld [vmem:[%s4 + $0x8] sm:$0xf]
    %v228 = vld [vmem:[%s4 + $0xc] sm:$0xf]
    %v229 = vld [vmem:[%s7] sm:$0x1]
    %v231 = vlaneseq
    %v232 = vshrl.u32 %v231, 7
    %v233 = vsub.s32 0, %v232
    %v234 = vrot.slane %v229, %v233
    %v240 = vunpack.c.l.b16 %v225
    %v241 = vunpack.c.l.b16 %v226
    %v242 = vunpack.c.l.b16 %v227
    %v243 = vunpack.c.l.b16 %v228
    %v244 = vpack.c.b16 %v241, %v240
    %v245 = vpack.c.b16 %v243, %v242
    %248 = vmatprep.subr.bf16.mxu0 0
    %249 = vmatpush1.bf16.msra.mxu0 %v244
    %250 = vmatprep.subr.bf16.mxu0 0
    %251 = vmatpush1.bf16.msra.mxu0 %v245
    %252 = vmatprep.subr.bf16.mxu0 0
    %253 = vmatpush1.bf16.msra.mxu0 0
    %254 = vmatprep.subr.bf16.mxu0 0
    %255 = vmatpush1.bf16.msra.mxu0 0
    %256 = vmatprep.subr.bf16.mxu0 0
    %257 = vmatpush1.bf16.msra.mxu0 0
    %258 = vmatprep.subr.bf16.mxu0 0
    %259 = vmatpush1.bf16.msra.mxu0 0
    %260 = vmatprep.subr.bf16.mxu0 0
    %261 = vmatpush1.bf16.msra.mxu0 0
    %262 = vmatprep.subr.bf16.mxu0 0
    %263 = vmatpush1.bf16.msra.mxu0 0
    %264 = vmatprep.subr.bf16.mxu0 0
    %265 = vmatpush1.bf16.msra.mxu0 0
    %266 = vmatprep.subr.bf16.mxu0 0
    %267 = vmatpush1.bf16.msra.mxu0 0
    %268 = vmatprep.subr.bf16.mxu0 0
    %269 = vmatpush1.bf16.msra.mxu0 0
    %270 = vmatprep.subr.bf16.mxu0 0
    %271 = vmatpush1.bf16.msra.mxu0 0
    %272 = vmatprep.subr.bf16.mxu0 0
    %273 = vmatpush1.bf16.msra.mxu0 0
    %274 = vmatprep.subr.bf16.mxu0 0
    %275 = vmatpush1.bf16.msra.mxu0 0
    %276 = vmatprep.subr.bf16.mxu0 0
    %277 = vmatpush1.bf16.msra.mxu0 0
    %278 = vmatprep.subr.bf16.mxu0 0
    %279 = vmatpush1.bf16.msra.mxu0 0
    %280 = vmatprep.mubr.bf16.mxu0 0
    %281 = vmatmul.mubr.bf16.gmra.mrb[0].mxu0 %v118
    %v282 = vpop.f32.mrb[0].mxu0
    %v283 = vadd.f32 %v234, %v282
    %v284 = vpop.f32.mrb[0].mxu0
    %v285 = vpop.f32.mrb[0].mxu0
    %v286 = vadd.f32 %v234, %v285
    %v287 = vpop.f32.mrb[0].mxu0
    %288 = vdwg.mxu0
    %291 = vrot.lane.b32.xlu0 %v155, 120
    %v292 = vpop.permute.xlu0 %291
    %293 = vrot.lane.b32.xlu0 %v158, 120
    %v294 = vpop.permute.xlu0 %293
    %295 = vrot.lane.b32.xlu0 %v155, 112
    %v296 = vpop.permute.xlu0 %295
    %297 = vrot.lane.b32.xlu0 %v158, 112
    %v298 = vpop.permute.xlu0 %297
    %299 = vrot.lane.b32.xlu0 %v155, 104
    %v300 = vpop.permute.xlu0 %299
    %301 = vrot.lane.b32.xlu0 %v158, 104
    %v302 = vpop.permute.xlu0 %301
    %305 = vrot.lane.b32.xlu0 %v219, 120
    %v306 = vpop.permute.xlu0 %305
    %307 = vrot.lane.b32.xlu0 %v222, 120
    %v308 = vpop.permute.xlu0 %307
    %309 = vrot.lane.b32.xlu0 %v219, 112
    %v310 = vpop.permute.xlu0 %309
    %311 = vrot.lane.b32.xlu0 %v222, 112
    %v312 = vpop.permute.xlu0 %311
    %313 = vrot.lane.b32.xlu0 %v219, 104
    %v314 = vpop.permute.xlu0 %313
    %315 = vrot.lane.b32.xlu0 %v222, 104
    %v316 = vpop.permute.xlu0 %315
    %319 = vrot.lane.b32.xlu0 %v283, 120
    %v320 = vpop.permute.xlu0 %319
    %321 = vrot.lane.b32.xlu0 %v286, 120
    %v322 = vpop.permute.xlu0 %321
    %325 = vrot.lane.b32.xlu0 %v283, 112
    %v326 = vpop.permute.xlu0 %325
    %327 = vrot.lane.b32.xlu0 %v286, 112
    %v328 = vpop.permute.xlu0 %327
    %331 = vrot.lane.b32.xlu0 %v283, 104
    %v332 = vpop.permute.xlu0 %331
    %333 = vrot.lane.b32.xlu0 %v286, 104
    %v334 = vpop.permute.xlu0 %333
    %vm337 = vcmask 64512
    %v338 = vsel %vm337, %v155, 0
    %v340 = vsel %vm337, %v219, 0
    %342 = vmatprep.subr.mxu0 0.0
    %343 = vmatpush1.xpose.msra.mxu0 %v340
    %344 = vmatprep.subr.mxu0 0.0
    %345 = vmatpush1.xpose.msra.mxu0 0.0
    %346 = vmatprep.subr.mxu0 0.0
    %347 = vmatpush1.xpose.msra.mxu0 0.0
    %348 = vmatprep.subr.mxu0 0.0
    %349 = vmatpush1.xpose.msra.mxu0 0.0
    %350 = vmatprep.subr.mxu0 0.0
    %351 = vmatpush1.xpose.msra.mxu0 0.0
    %352 = vmatprep.subr.mxu0 0.0
    %353 = vmatpush1.xpose.msra.mxu0 0.0
    %354 = vmatprep.subr.mxu0 0.0
    %355 = vmatpush1.xpose.msra.mxu0 0.0
    %356 = vmatprep.subr.mxu0 0.0
    %357 = vmatpush1.xpose.msra.mxu0 0.0
    %358 = vmatprep.subr.mxu0 0.0
    %359 = vmatpush1.xpose.msra.mxu0 0.0
    %360 = vmatprep.subr.mxu0 0.0
    %361 = vmatpush1.xpose.msra.mxu0 0.0
    %362 = vmatprep.subr.mxu0 0.0
    %363 = vmatpush1.xpose.msra.mxu0 0.0
    %364 = vmatprep.subr.mxu0 0.0
    %365 = vmatpush1.xpose.msra.mxu0 0.0
    %366 = vmatprep.subr.mxu0 0.0
    %367 = vmatpush1.xpose.msra.mxu0 0.0
    %368 = vmatprep.subr.mxu0 0.0
    %369 = vmatpush1.xpose.msra.mxu0 0.0
    %370 = vmatprep.subr.mxu0 0.0
    %371 = vmatpush1.xpose.msra.mxu0 0.0
    %372 = vmatprep.subr.mxu0 0.0
    %373 = vmatpush1.xpose.msra.mxu0 0.0
    %374 = vmatprep.subr.mxu0 0.0
    %375 = vmatpush1.xpose.msra.mxu0 0.0
    %376 = vmatprep.subr.mxu0 0.0
    %377 = vmatpush1.xpose.msra.mxu0 0.0
    %378 = vmatprep.subr.mxu0 0.0
    %379 = vmatpush1.xpose.msra.mxu0 0.0
    %380 = vmatprep.subr.mxu0 0.0
    %381 = vmatpush1.xpose.msra.mxu0 0.0
    %382 = vmatprep.subr.mxu0 0.0
    %383 = vmatpush1.xpose.msra.mxu0 0.0
    %384 = vmatprep.subr.mxu0 0.0
    %385 = vmatpush1.xpose.msra.mxu0 0.0
    %386 = vmatprep.subr.mxu0 0.0
    %387 = vmatpush1.xpose.msra.mxu0 0.0
    %388 = vmatprep.subr.mxu0 0.0
    %389 = vmatpush1.xpose.msra.mxu0 0.0
    %390 = vmatprep.subr.mxu0 0.0
    %391 = vmatpush1.xpose.msra.mxu0 0.0
    %392 = vmatprep.subr.mxu0 0.0
    %393 = vmatpush1.xpose.msra.mxu0 0.0
    %394 = vmatprep.subr.mxu0 0.0
    %395 = vmatpush1.xpose.msra.mxu0 0.0
    %396 = vmatprep.subr.mxu0 0.0
    %397 = vmatpush1.xpose.msra.mxu0 0.0
    %398 = vmatprep.subr.mxu0 0.0
    %399 = vmatpush1.xpose.msra.mxu0 0.0
    %400 = vmatprep.subr.mxu0 0.0
    %401 = vmatpush1.xpose.msra.mxu0 0.0
    %402 = vmatprep.subr.mxu0 0.0
    %403 = vmatpush1.xpose.msra.mxu0 0.0
    %404 = vmatprep.subr.mxu0 0.0
    %405 = vmatpush1.xpose.msra.mxu0 0.0
    %406 = vmatprep.mubr.f32.mxu0 0.0
    %407 = vmatmul.mubr.f32.gmra.mrb[0].mxu0 %v338
    %v408 = vpop.f32.mrb[0].mxu0
    %v409 = vadd.f32 0.0, %v408
    %v410 = vpop.f32.mrb[0].mxu0
    %411 = vdwg.mxu0
    %v412 = vsel %vm337, %v158, 0
    %v414 = vsel %vm337, %v222, 0
    %416 = vmatprep.subr.mxu0 0.0
    %417 = vmatpush1.xpose.msra.mxu0 %v414
    %418 = vmatprep.subr.mxu0 0.0
    %419 = vmatpush1.xpose.msra.mxu0 0.0
    %420 = vmatprep.subr.mxu0 0.0
    %421 = vmatpush1.xpose.msra.mxu0 0.0
    %422 = vmatprep.subr.mxu0 0.0
    %423 = vmatpush1.xpose.msra.mxu0 0.0
    %424 = vmatprep.subr.mxu0 0.0
    %425 = vmatpush1.xpose.msra.mxu0 0.0
    %426 = vmatprep.subr.mxu0 0.0
    %427 = vmatpush1.xpose.msra.mxu0 0.0
    %428 = vmatprep.subr.mxu0 0.0
    %429 = vmatpush1.xpose.msra.mxu0 0.0
    %430 = vmatprep.subr.mxu0 0.0
    %431 = vmatpush1.xpose.msra.mxu0 0.0
    %432 = vmatprep.subr.mxu0 0.0
    %433 = vmatpush1.xpose.msra.mxu0 0.0
    %434 = vmatprep.subr.mxu0 0.0
    %435 = vmatpush1.xpose.msra.mxu0 0.0
    %436 = vmatprep.subr.mxu0 0.0
    %437 = vmatpush1.xpose.msra.mxu0 0.0
    %438 = vmatprep.subr.mxu0 0.0
    %439 = vmatpush1.xpose.msra.mxu0 0.0
    %440 = vmatprep.subr.mxu0 0.0
    %441 = vmatpush1.xpose.msra.mxu0 0.0
    %442 = vmatprep.subr.mxu0 0.0
    %443 = vmatpush1.xpose.msra.mxu0 0.0
    %444 = vmatprep.subr.mxu0 0.0
    %445 = vmatpush1.xpose.msra.mxu0 0.0
    %446 = vmatprep.subr.mxu0 0.0
    %447 = vmatpush1.xpose.msra.mxu0 0.0
    %448 = vmatprep.subr.mxu0 0.0
    %449 = vmatpush1.xpose.msra.mxu0 0.0
    %450 = vmatprep.subr.mxu0 0.0
    %451 = vmatpush1.xpose.msra.mxu0 0.0
    %452 = vmatprep.subr.mxu0 0.0
    %453 = vmatpush1.xpose.msra.mxu0 0.0
    %454 = vmatprep.subr.mxu0 0.0
    %455 = vmatpush1.xpose.msra.mxu0 0.0
    %456 = vmatprep.subr.mxu0 0.0
    %457 = vmatpush1.xpose.msra.mxu0 0.0
    %458 = vmatprep.subr.mxu0 0.0
    %459 = vmatpush1.xpose.msra.mxu0 0.0
    %460 = vmatprep.subr.mxu0 0.0
    %461 = vmatpush1.xpose.msra.mxu0 0.0
    %462 = vmatprep.subr.mxu0 0.0
    %463 = vmatpush1.xpose.msra.mxu0 0.0
    %464 = vmatprep.subr.mxu0 0.0
    %465 = vmatpush1.xpose.msra.mxu0 0.0
    %466 = vmatprep.subr.mxu0 0.0
    %467 = vmatpush1.xpose.msra.mxu0 0.0
    %468 = vmatprep.subr.mxu0 0.0
    %469 = vmatpush1.xpose.msra.mxu0 0.0
    %470 = vmatprep.subr.mxu0 0.0
    %471 = vmatpush1.xpose.msra.mxu0 0.0
    %472 = vmatprep.subr.mxu0 0.0
    %473 = vmatpush1.xpose.msra.mxu0 0.0
    %474 = vmatprep.subr.mxu0 0.0
    %475 = vmatpush1.xpose.msra.mxu0 0.0
    %476 = vmatprep.subr.mxu0 0.0
    %477 = vmatpush1.xpose.msra.mxu0 0.0
    %478 = vmatprep.subr.mxu0 0.0
    %479 = vmatpush1.xpose.msra.mxu0 0.0
    %480 = vmatprep.mubr.f32.mxu0 0.0
    %481 = vmatmul.mubr.f32.gmra.mrb[0].mxu0 %v412
    %v482 = vpop.f32.mrb[0].mxu0
    %v483 = vadd.f32 0.0, %v482
    %v484 = vpop.f32.mrb[0].mxu0
    %485 = vdwg.mxu0
    %v486 = vsel %vm337, %v292, 0
    %v488 = vsel %vm337, %v306, 0
    %490 = vmatprep.subr.mxu0 0.0
    %491 = vmatpush1.xpose.msra.mxu0 %v488
    %492 = vmatprep.subr.mxu0 0.0
    %493 = vmatpush1.xpose.msra.mxu0 0.0
    %494 = vmatprep.subr.mxu0 0.0
    %495 = vmatpush1.xpose.msra.mxu0 0.0
    %496 = vmatprep.subr.mxu0 0.0
    %497 = vmatpush1.xpose.msra.mxu0 0.0
    %498 = vmatprep.subr.mxu0 0.0
    %499 = vmatpush1.xpose.msra.mxu0 0.0
    %500 = vmatprep.subr.mxu0 0.0
    %501 = vmatpush1.xpose.msra.mxu0 0.0
    %502 = vmatprep.subr.mxu0 0.0
    %503 = vmatpush1.xpose.msra.mxu0 0.0
    %504 = vmatprep.subr.mxu0 0.0
    %505 = vmatpush1.xpose.msra.mxu0 0.0
    %506 = vmatprep.subr.mxu0 0.0
    %507 = vmatpush1.xpose.msra.mxu0 0.0
    %508 = vmatprep.subr.mxu0 0.0
    %509 = vmatpush1.xpose.msra.mxu0 0.0
    %510 = vmatprep.subr.mxu0 0.0
    %511 = vmatpush1.xpose.msra.mxu0 0.0
    %512 = vmatprep.subr.mxu0 0.0
    %513 = vmatpush1.xpose.msra.mxu0 0.0
    %514 = vmatprep.subr.mxu0 0.0
    %515 = vmatpush1.xpose.msra.mxu0 0.0
    %516 = vmatprep.subr.mxu0 0.0
    %517 = vmatpush1.xpose.msra.mxu0 0.0
    %518 = vmatprep.subr.mxu0 0.0
    %519 = vmatpush1.xpose.msra.mxu0 0.0
    %520 = vmatprep.subr.mxu0 0.0
    %521 = vmatpush1.xpose.msra.mxu0 0.0
    %522 = vmatprep.subr.mxu0 0.0
    %523 = vmatpush1.xpose.msra.mxu0 0.0
    %524 = vmatprep.subr.mxu0 0.0
    %525 = vmatpush1.xpose.msra.mxu0 0.0
    %526 = vmatprep.subr.mxu0 0.0
    %527 = vmatpush1.xpose.msra.mxu0 0.0
    %528 = vmatprep.subr.mxu0 0.0
    %529 = vmatpush1.xpose.msra.mxu0 0.0
    %530 = vmatprep.subr.mxu0 0.0
    %531 = vmatpush1.xpose.msra.mxu0 0.0
    %532 = vmatprep.subr.mxu0 0.0
    %533 = vmatpush1.xpose.msra.mxu0 0.0
    %534 = vmatprep.subr.mxu0 0.0
    %535 = vmatpush1.xpose.msra.mxu0 0.0
    %536 = vmatprep.subr.mxu0 0.0
    %537 = vmatpush1.xpose.msra.mxu0 0.0
    %538 = vmatprep.subr.mxu0 0.0
    %539 = vmatpush1.xpose.msra.mxu0 0.0
    %540 = vmatprep.subr.mxu0 0.0
    %541 = vmatpush1.xpose.msra.mxu0 0.0
    %542 = vmatprep.subr.mxu0 0.0
    %543 = vmatpush1.xpose.msra.mxu0 0.0
    %544 = vmatprep.subr.mxu0 0.0
    %545 = vmatpush1.xpose.msra.mxu0 0.0
    %546 = vmatprep.subr.mxu0 0.0
    %547 = vmatpush1.xpose.msra.mxu0 0.0
    %548 = vmatprep.subr.mxu0 0.0
    %549 = vmatpush1.xpose.msra.mxu0 0.0
    %550 = vmatprep.subr.mxu0 0.0
    %551 = vmatpush1.xpose.msra.mxu0 0.0
    %552 = vmatprep.subr.mxu0 0.0
    %553 = vmatpush1.xpose.msra.mxu0 0.0
    %554 = vmatprep.mubr.f32.mxu0 0.0
    %555 = vmatmul.mubr.f32.gmra.mrb[0].mxu0 %v486
    %v556 = vpop.f32.mrb[0].mxu0
    %v557 = vadd.f32 0.0, %v556
    %v558 = vpop.f32.mrb[0].mxu0
    %559 = vdwg.mxu0
    %v560 = vsel %vm337, %v294, 0
    %v562 = vsel %vm337, %v308, 0
    %564 = vmatprep.subr.mxu0 0.0
    %565 = vmatpush1.xpose.msra.mxu0 %v562
    %566 = vmatprep.subr.mxu0 0.0
    %567 = vmatpush1.xpose.msra.mxu0 0.0
    %568 = vmatprep.subr.mxu0 0.0
    %569 = vmatpush1.xpose.msra.mxu0 0.0
    %570 = vmatprep.subr.mxu0 0.0
    %571 = vmatpush1.xpose.msra.mxu0 0.0
    %572 = vmatprep.subr.mxu0 0.0
    %573 = vmatpush1.xpose.msra.mxu0 0.0
    %574 = vmatprep.subr.mxu0 0.0
    %575 = vmatpush1.xpose.msra.mxu0 0.0
    %576 = vmatprep.subr.mxu0 0.0
    %577 = vmatpush1.xpose.msra.mxu0 0.0
    %578 = vmatprep.subr.mxu0 0.0
    %579 = vmatpush1.xpose.msra.mxu0 0.0
    %580 = vmatprep.subr.mxu0 0.0
    %581 = vmatpush1.xpose.msra.mxu0 0.0
    %582 = vmatprep.subr.mxu0 0.0
    %583 = vmatpush1.xpose.msra.mxu0 0.0
    %584 = vmatprep.subr.mxu0 0.0
    %585 = vmatpush1.xpose.msra.mxu0 0.0
    %586 = vmatprep.subr.mxu0 0.0
    %587 = vmatpush1.xpose.msra.mxu0 0.0
    %588 = vmatprep.subr.mxu0 0.0
    %589 = vmatpush1.xpose.msra.mxu0 0.0
    %590 = vmatprep.subr.mxu0 0.0
    %591 = vmatpush1.xpose.msra.mxu0 0.0
    %592 = vmatprep.subr.mxu0 0.0
    %593 = vmatpush1.xpose.msra.mxu0 0.0
    %594 = vmatprep.subr.mxu0 0.0
    %595 = vmatpush1.xpose.msra.mxu0 0.0
    %596 = vmatprep.subr.mxu0 0.0
    %597 = vmatpush1.xpose.msra.mxu0 0.0
    %598 = vmatprep.subr.mxu0 0.0
    %599 = vmatpush1.xpose.msra.mxu0 0.0
    %600 = vmatprep.subr.mxu0 0.0
    %601 = vmatpush1.xpose.msra.mxu0 0.0
    %602 = vmatprep.subr.mxu0 0.0
    %603 = vmatpush1.xpose.msra.mxu0 0.0
    %604 = vmatprep.subr.mxu0 0.0
    %605 = vmatpush1.xpose.msra.mxu0 0.0
    %606 = vmatprep.subr.mxu0 0.0
    %607 = vmatpush1.xpose.msra.mxu0 0.0
    %608 = vmatprep.subr.mxu0 0.0
    %609 = vmatpush1.xpose.msra.mxu0 0.0
    %610 = vmatprep.subr.mxu0 0.0
    %611 = vmatpush1.xpose.msra.mxu0 0.0
    %612 = vmatprep.subr.mxu0 0.0
    %613 = vmatpush1.xpose.msra.mxu0 0.0
    %614 = vmatprep.subr.mxu0 0.0
    %615 = vmatpush1.xpose.msra.mxu0 0.0
    %616 = vmatprep.subr.mxu0 0.0
    %617 = vmatpush1.xpose.msra.mxu0 0.0
    %618 = vmatprep.subr.mxu0 0.0
    %619 = vmatpush1.xpose.msra.mxu0 0.0
    %620 = vmatprep.subr.mxu0 0.0
    %621 = vmatpush1.xpose.msra.mxu0 0.0
    %622 = vmatprep.subr.mxu0 0.0
    %623 = vmatpush1.xpose.msra.mxu0 0.0
    %624 = vmatprep.subr.mxu0 0.0
    %625 = vmatpush1.xpose.msra.mxu0 0.0
    %626 = vmatprep.subr.mxu0 0.0
    %627 = vmatpush1.xpose.msra.mxu0 0.0
    %628 = vmatprep.mubr.f32.mxu0 0.0
    %629 = vmatmul.mubr.f32.gmra.mrb[0].mxu0 %v560
    %v630 = vpop.f32.mrb[0].mxu0
    %v631 = vadd.f32 0.0, %v630
    %v632 = vpop.f32.mrb[0].mxu0
    %633 = vdwg.mxu0
    %v634 = vsel %vm337, %v296, 0
    %v636 = vsel %vm337, %v310, 0
    %638 = vmatprep.subr.mxu0 0.0
    %639 = vmatpush1.xpose.msra.mxu0 %v636
    %640 = vmatprep.subr.mxu0 0.0
    %641 = vmatpush1.xpose.msra.mxu0 0.0
    %642 = vmatprep.subr.mxu0 0.0
    %643 = vmatpush1.xpose.msra.mxu0 0.0
    %644 = vmatprep.subr.mxu0 0.0
    %645 = vmatpush1.xpose.msra.mxu0 0.0
    %646 = vmatprep.subr.mxu0 0.0
    %647 = vmatpush1.xpose.msra.mxu0 0.0
    %648 = vmatprep.subr.mxu0 0.0
    %649 = vmatpush1.xpose.msra.mxu0 0.0
    %650 = vmatprep.subr.mxu0 0.0
    %651 = vmatpush1.xpose.msra.mxu0 0.0
    %652 = vmatprep.subr.mxu0 0.0
    %653 = vmatpush1.xpose.msra.mxu0 0.0
    %654 = vmatprep.subr.mxu0 0.0
    %655 = vmatpush1.xpose.msra.mxu0 0.0
    %656 = vmatprep.subr.mxu0 0.0
    %657 = vmatpush1.xpose.msra.mxu0 0.0
    %658 = vmatprep.subr.mxu0 0.0
    %659 = vmatpush1.xpose.msra.mxu0 0.0
    %660 = vmatprep.subr.mxu0 0.0
    %661 = vmatpush1.xpose.msra.mxu0 0.0
    %662 = vmatprep.subr.mxu0 0.0
    %663 = vmatpush1.xpose.msra.mxu0 0.0
    %664 = vmatprep.subr.mxu0 0.0
    %665 = vmatpush1.xpose.msra.mxu0 0.0
    %666 = vmatprep.subr.mxu0 0.0
    %667 = vmatpush1.xpose.msra.mxu0 0.0
    %668 = vmatprep.subr.mxu0 0.0
    %669 = vmatpush1.xpose.msra.mxu0 0.0
    %670 = vmatprep.subr.mxu0 0.0
    %671 = vmatpush1.xpose.msra.mxu0 0.0
    %672 = vmatprep.subr.mxu0 0.0
    %673 = vmatpush1.xpose.msra.mxu0 0.0
    %674 = vmatprep.subr.mxu0 0.0
    %675 = vmatpush1.xpose.msra.mxu0 0.0
    %676 = vmatprep.subr.mxu0 0.0
    %677 = vmatpush1.xpose.msra.mxu0 0.0
    %678 = vmatprep.subr.mxu0 0.0
    %679 = vmatpush1.xpose.msra.mxu0 0.0
    %680 = vmatprep.subr.mxu0 0.0
    %681 = vmatpush1.xpose.msra.mxu0 0.0
    %682 = vmatprep.subr.mxu0 0.0
    %683 = vmatpush1.xpose.msra.mxu0 0.0
    %684 = vmatprep.subr.mxu0 0.0
    %685 = vmatpush1.xpose.msra.mxu0 0.0
    %686 = vmatprep.subr.mxu0 0.0
    %687 = vmatpush1.xpose.msra.mxu0 0.0
    %688 = vmatprep.subr.mxu0 0.0
    %689 = vmatpush1.xpose.msra.mxu0 0.0
    %690 = vmatprep.subr.mxu0 0.0
    %691 = vmatpush1.xpose.msra.mxu0 0.0
    %692 = vmatprep.subr.mxu0 0.0
    %693 = vmatpush1.xpose.msra.mxu0 0.0
    %694 = vmatprep.subr.mxu0 0.0
    %695 = vmatpush1.xpose.msra.mxu0 0.0
    %696 = vmatprep.subr.mxu0 0.0
    %697 = vmatpush1.xpose.msra.mxu0 0.0
    %698 = vmatprep.subr.mxu0 0.0
    %699 = vmatpush1.xpose.msra.mxu0 0.0
    %700 = vmatprep.subr.mxu0 0.0
    %701 = vmatpush1.xpose.msra.mxu0 0.0
    %702 = vmatprep.mubr.f32.mxu0 0.0
    %703 = vmatmul.mubr.f32.gmra.mrb[0].mxu0 %v634
    %v704 = vpop.f32.mrb[0].mxu0
    %v705 = vadd.f32 0.0, %v704
    %v706 = vpop.f32.mrb[0].mxu0
    %707 = vdwg.mxu0
    %v708 = vsel %vm337, %v298, 0
    %v710 = vsel %vm337, %v312, 0
    %712 = vmatprep.subr.mxu0 0.0
    %713 = vmatpush1.xpose.msra.mxu0 %v710
    %714 = vmatprep.subr.mxu0 0.0
    %715 = vmatpush1.xpose.msra.mxu0 0.0
    %716 = vmatprep.subr.mxu0 0.0
    %717 = vmatpush1.xpose.msra.mxu0 0.0
    %718 = vmatprep.subr.mxu0 0.0
    %719 = vmatpush1.xpose.msra.mxu0 0.0
    %720 = vmatprep.subr.mxu0 0.0
    %721 = vmatpush1.xpose.msra.mxu0 0.0
    %722 = vmatprep.subr.mxu0 0.0
    %723 = vmatpush1.xpose.msra.mxu0 0.0
    %724 = vmatprep.subr.mxu0 0.0
    %725 = vmatpush1.xpose.msra.mxu0 0.0
    %726 = vmatprep.subr.mxu0 0.0
    %727 = vmatpush1.xpose.msra.mxu0 0.0
    %728 = vmatprep.subr.mxu0 0.0
    %729 = vmatpush1.xpose.msra.mxu0 0.0
    %730 = vmatprep.subr.mxu0 0.0
    %731 = vmatpush1.xpose.msra.mxu0 0.0
    %732 = vmatprep.subr.mxu0 0.0
    %733 = vmatpush1.xpose.msra.mxu0 0.0
    %734 = vmatprep.subr.mxu0 0.0
    %735 = vmatpush1.xpose.msra.mxu0 0.0
    %736 = vmatprep.subr.mxu0 0.0
    %737 = vmatpush1.xpose.msra.mxu0 0.0
    %738 = vmatprep.subr.mxu0 0.0
    %739 = vmatpush1.xpose.msra.mxu0 0.0
    %740 = vmatprep.subr.mxu0 0.0
    %741 = vmatpush1.xpose.msra.mxu0 0.0
    %742 = vmatprep.subr.mxu0 0.0
    %743 = vmatpush1.xpose.msra.mxu0 0.0
    %744 = vmatprep.subr.mxu0 0.0
    %745 = vmatpush1.xpose.msra.mxu0 0.0
    %746 = vmatprep.subr.mxu0 0.0
    %747 = vmatpush1.xpose.msra.mxu0 0.0
    %748 = vmatprep.subr.mxu0 0.0
    %749 = vmatpush1.xpose.msra.mxu0 0.0
    %750 = vmatprep.subr.mxu0 0.0
    %751 = vmatpush1.xpose.msra.mxu0 0.0
    %752 = vmatprep.subr.mxu0 0.0
    %753 = vmatpush1.xpose.msra.mxu0 0.0
    %754 = vmatprep.subr.mxu0 0.0
    %755 = vmatpush1.xpose.msra.mxu0 0.0
    %756 = vmatprep.subr.mxu0 0.0
    %757 = vmatpush1.xpose.msra.mxu0 0.0
    %758 = vmatprep.subr.mxu0 0.0
    %759 = vmatpush1.xpose.msra.mxu0 0.0
    %760 = vmatprep.subr.mxu0 0.0
    %761 = vmatpush1.xpose.msra.mxu0 0.0
    %762 = vmatprep.subr.mxu0 0.0
    %763 = vmatpush1.xpose.msra.mxu0 0.0
    %764 = vmatprep.subr.mxu0 0.0
    %765 = vmatpush1.xpose.msra.mxu0 0.0
    %766 = vmatprep.subr.mxu0 0.0
    %767 = vmatpush1.xpose.msra.mxu0 0.0
    %768 = vmatprep.subr.mxu0 0.0
    %769 = vmatpush1.xpose.msra.mxu0 0.0
    %770 = vmatprep.subr.mxu0 0.0
    %771 = vmatpush1.xpose.msra.mxu0 0.0
    %772 = vmatprep.subr.mxu0 0.0
    %773 = vmatpush1.xpose.msra.mxu0 0.0
    %774 = vmatprep.subr.mxu0 0.0
    %775 = vmatpush1.xpose.msra.mxu0 0.0
    %776 = vmatprep.mubr.f32.mxu0 0.0
    %777 = vmatmul.mubr.f32.gmra.mrb[0].mxu0 %v708
    %v778 = vpop.f32.mrb[0].mxu0
    %v779 = vadd.f32 0.0, %v778
    %v780 = vpop.f32.mrb[0].mxu0
    %781 = vdwg.mxu0
    %v782 = vsel %vm337, %v300, 0
    %v784 = vsel %vm337, %v314, 0
    %786 = vmatprep.subr.mxu0 0.0
    %787 = vmatpush1.xpose.msra.mxu0 %v784
    %788 = vmatprep.subr.mxu0 0.0
    %789 = vmatpush1.xpose.msra.mxu0 0.0
    %790 = vmatprep.subr.mxu0 0.0
    %791 = vmatpush1.xpose.msra.mxu0 0.0
    %792 = vmatprep.subr.mxu0 0.0
    %793 = vmatpush1.xpose.msra.mxu0 0.0
    %794 = vmatprep.subr.mxu0 0.0
    %795 = vmatpush1.xpose.msra.mxu0 0.0
    %796 = vmatprep.subr.mxu0 0.0
    %797 = vmatpush1.xpose.msra.mxu0 0.0
    %798 = vmatprep.subr.mxu0 0.0
    %799 = vmatpush1.xpose.msra.mxu0 0.0
    %800 = vmatprep.subr.mxu0 0.0
    %801 = vmatpush1.xpose.msra.mxu0 0.0
    %802 = vmatprep.subr.mxu0 0.0
    %803 = vmatpush1.xpose.msra.mxu0 0.0
    %804 = vmatprep.subr.mxu0 0.0
    %805 = vmatpush1.xpose.msra.mxu0 0.0
    %806 = vmatprep.subr.mxu0 0.0
    %807 = vmatpush1.xpose.msra.mxu0 0.0
    %808 = vmatprep.subr.mxu0 0.0
    %809 = vmatpush1.xpose.msra.mxu0 0.0
    %810 = vmatprep.subr.mxu0 0.0
    %811 = vmatpush1.xpose.msra.mxu0 0.0
    %812 = vmatprep.subr.mxu0 0.0
    %813 = vmatpush1.xpose.msra.mxu0 0.0
    %814 = vmatprep.subr.mxu0 0.0
    %815 = vmatpush1.xpose.msra.mxu0 0.0
    %816 = vmatprep.subr.mxu0 0.0
    %817 = vmatpush1.xpose.msra.mxu0 0.0
    %818 = vmatprep.subr.mxu0 0.0
    %819 = vmatpush1.xpose.msra.mxu0 0.0
    %820 = vmatprep.subr.mxu0 0.0
    %821 = vmatpush1.xpose.msra.mxu0 0.0
    %822 = vmatprep.subr.mxu0 0.0
    %823 = vmatpush1.xpose.msra.mxu0 0.0
    %824 = vmatprep.subr.mxu0 0.0
    %825 = vmatpush1.xpose.msra.mxu0 0.0
    %826 = vmatprep.subr.mxu0 0.0
    %827 = vmatpush1.xpose.msra.mxu0 0.0
    %828 = vmatprep.subr.mxu0 0.0
    %829 = vmatpush1.xpose.msra.mxu0 0.0
    %830 = vmatprep.subr.mxu0 0.0
    %831 = vmatpush1.xpose.msra.mxu0 0.0
    %832 = vmatprep.subr.mxu0 0.0
    %833 = vmatpush1.xpose.msra.mxu0 0.0
    %834 = vmatprep.subr.mxu0 0.0
    %835 = vmatpush1.xpose.msra.mxu0 0.0
    %836 = vmatprep.subr.mxu0 0.0
    %837 = vmatpush1.xpose.msra.mxu0 0.0
    %838 = vmatprep.subr.mxu0 0.0
    %839 = vmatpush1.xpose.msra.mxu0 0.0
    %840 = vmatprep.subr.mxu0 0.0
    %841 = vmatpush1.xpose.msra.mxu0 0.0
    %842 = vmatprep.subr.mxu0 0.0
    %843 = vmatpush1.xpose.msra.mxu0 0.0
    %844 = vmatprep.subr.mxu0 0.0
    %845 = vmatpush1.xpose.msra.mxu0 0.0
    %846 = vmatprep.subr.mxu0 0.0
    %847 = vmatpush1.xpose.msra.mxu0 0.0
    %848 = vmatprep.subr.mxu0 0.0
    %849 = vmatpush1.xpose.msra.mxu0 0.0
    %850 = vmatprep.mubr.f32.mxu0 0.0
    %851 = vmatmul.mubr.f32.gmra.mrb[0].mxu0 %v782
    %v852 = vpop.f32.mrb[0].mxu0
    %v853 = vadd.f32 0.0, %v852
    %v854 = vpop.f32.mrb[0].mxu0
    %855 = vdwg.mxu0
    %v856 = vsel %vm337, %v302, 0
    %v858 = vsel %vm337, %v316, 0
    %860 = vmatprep.subr.mxu0 0.0
    %861 = vmatpush1.xpose.msra.mxu0 %v858
    %862 = vmatprep.subr.mxu0 0.0
    %863 = vmatpush1.xpose.msra.mxu0 0.0
    %864 = vmatprep.subr.mxu0 0.0
    %865 = vmatpush1.xpose.msra.mxu0 0.0
    %866 = vmatprep.subr.mxu0 0.0
    %867 = vmatpush1.xpose.msra.mxu0 0.0
    %868 = vmatprep.subr.mxu0 0.0
    %869 = vmatpush1.xpose.msra.mxu0 0.0
    %870 = vmatprep.subr.mxu0 0.0
    %871 = vmatpush1.xpose.msra.mxu0 0.0
    %872 = vmatprep.subr.mxu0 0.0
    %873 = vmatpush1.xpose.msra.mxu0 0.0
    %874 = vmatprep.subr.mxu0 0.0
    %875 = vmatpush1.xpose.msra.mxu0 0.0
    %876 = vmatprep.subr.mxu0 0.0
    %877 = vmatpush1.xpose.msra.mxu0 0.0
    %878 = vmatprep.subr.mxu0 0.0
    %879 = vmatpush1.xpose.msra.mxu0 0.0
    %880 = vmatprep.subr.mxu0 0.0
    %881 = vmatpush1.xpose.msra.mxu0 0.0
    %882 = vmatprep.subr.mxu0 0.0
    %883 = vmatpush1.xpose.msra.mxu0 0.0
    %884 = vmatprep.subr.mxu0 0.0
    %885 = vmatpush1.xpose.msra.mxu0 0.0
    %886 = vmatprep.subr.mxu0 0.0
    %887 = vmatpush1.xpose.msra.mxu0 0.0
    %888 = vmatprep.subr.mxu0 0.0
    %889 = vmatpush1.xpose.msra.mxu0 0.0
    %890 = vmatprep.subr.mxu0 0.0
    %891 = vmatpush1.xpose.msra.mxu0 0.0
    %892 = vmatprep.subr.mxu0 0.0
    %893 = vmatpush1.xpose.msra.mxu0 0.0
    %894 = vmatprep.subr.mxu0 0.0
    %895 = vmatpush1.xpose.msra.mxu0 0.0
    %896 = vmatprep.subr.mxu0 0.0
    %897 = vmatpush1.xpose.msra.mxu0 0.0
    %898 = vmatprep.subr.mxu0 0.0
    %899 = vmatpush1.xpose.msra.mxu0 0.0
    %900 = vmatprep.subr.mxu0 0.0
    %901 = vmatpush1.xpose.msra.mxu0 0.0
    %902 = vmatprep.subr.mxu0 0.0
    %903 = vmatpush1.xpose.msra.mxu0 0.0
    %904 = vmatprep.subr.mxu0 0.0
    %905 = vmatpush1.xpose.msra.mxu0 0.0
    %906 = vmatprep.subr.mxu0 0.0
    %907 = vmatpush1.xpose.msra.mxu0 0.0
    %908 = vmatprep.subr.mxu0 0.0
    %909 = vmatpush1.xpose.msra.mxu0 0.0
    %910 = vmatprep.subr.mxu0 0.0
    %911 = vmatpush1.xpose.msra.mxu0 0.0
    %912 = vmatprep.subr.mxu0 0.0
    %913 = vmatpush1.xpose.msra.mxu0 0.0
    %914 = vmatprep.subr.mxu0 0.0
    %915 = vmatpush1.xpose.msra.mxu0 0.0
    %916 = vmatprep.subr.mxu0 0.0
    %917 = vmatpush1.xpose.msra.mxu0 0.0
    %918 = vmatprep.subr.mxu0 0.0
    %919 = vmatpush1.xpose.msra.mxu0 0.0
    %920 = vmatprep.subr.mxu0 0.0
    %921 = vmatpush1.xpose.msra.mxu0 0.0
    %922 = vmatprep.subr.mxu0 0.0
    %923 = vmatpush1.xpose.msra.mxu0 0.0
    %924 = vmatprep.mubr.f32.mxu0 0.0
    %925 = vmatmul.mubr.f32.gmra.mrb[0].mxu0 %v856
    %v926 = vpop.f32.mrb[0].mxu0
    %v927 = vadd.f32 0.0, %v926
    %v928 = vpop.f32.mrb[0].mxu0
    %929 = vdwg.mxu0
    %v930 = vmul.f32 %v409, 0.35355338
    %v931 = vmul.f32 %v483, 0.35355338
    %v932 = vmul.f32 %v557, 0.35355338
    %v933 = vmul.f32 %v631, 0.35355338
    %v934 = vmul.f32 %v705, 0.35355338
    %v935 = vmul.f32 %v779, 0.35355338
    %v936 = vmul.f32 %v853, 0.35355338
    %v937 = vmul.f32 %v927, 0.35355338
    %v938 = vsel %vm337, %v930, -inf
    %939 = vmax.xlane.f32.xlu0 %v938
    %v940 = vpop.xlane.xlu0 %939
    %v941 = vsel %vm337, %v931, -inf
    %942 = vmax.xlane.f32.xlu0 %v941
    %v943 = vpop.xlane.xlu0 %942
    %v944 = vsel %vm337, %v932, -inf
    %945 = vmax.xlane.f32.xlu0 %v944
    %v946 = vpop.xlane.xlu0 %945
    %v947 = vsel %vm337, %v933, -inf
    %948 = vmax.xlane.f32.xlu0 %v947
    %v949 = vpop.xlane.xlu0 %948
    %v950 = vsel %vm337, %v934, -inf
    %951 = vmax.xlane.f32.xlu0 %v950
    %v952 = vpop.xlane.xlu0 %951
    %v953 = vsel %vm337, %v935, -inf
    %954 = vmax.xlane.f32.xlu0 %v953
    %v955 = vpop.xlane.xlu0 %954
    %v956 = vsel %vm337, %v936, -inf
    %957 = vmax.xlane.f32.xlu0 %v956
    %v958 = vpop.xlane.xlu0 %957
    %v959 = vsel %vm337, %v937, -inf
    %960 = vmax.xlane.f32.xlu0 %v959
    %v961 = vpop.xlane.xlu0 %960
    %v962 = vsub.f32 %v930, %v940
    %v963 = vsub.f32 %v931, %v943
    %v964 = vsub.f32 %v932, %v946
    %v965 = vsub.f32 %v933, %v949
    %v966 = vsub.f32 %v934, %v952
    %v967 = vsub.f32 %v935, %v955
    %v968 = vsub.f32 %v936, %v958
    %v969 = vsub.f32 %v937, %v961
    %v970 = vmul.f32 %v962, 1.442695
    %v971 = vpow.pop %v970
    %v972 = vmul.f32 %v963, 1.442695
    %v973 = vpow.pop %v972
    %v974 = vmul.f32 %v964, 1.442695
    %v975 = vpow.pop %v974
    %v976 = vmul.f32 %v965, 1.442695
    %v977 = vpow.pop %v976
    %v978 = vmul.f32 %v966, 1.442695
    %v979 = vpow.pop %v978
    %v980 = vmul.f32 %v967, 1.442695
    %v981 = vpow.pop %v980
    %v982 = vmul.f32 %v968, 1.442695
    %v983 = vpow.pop %v982
    %v984 = vmul.f32 %v969, 1.442695
    %v985 = vpow.pop %v984
    %v986 = vsel %vm337, %v971, 0.0
    %987 = vadd.xlane.f32.xlu0 %v986
    %v988 = vpop.xlane.xlu0 %987
    %v989 = vsel %vm337, %v973, 0.0
    %990 = vadd.xlane.f32.xlu0 %v989
    %v991 = vpop.xlane.xlu0 %990
    %v992 = vsel %vm337, %v975, 0.0
    %993 = vadd.xlane.f32.xlu0 %v992
    %v994 = vpop.xlane.xlu0 %993
    %v995 = vsel %vm337, %v977, 0.0
    %996 = vadd.xlane.f32.xlu0 %v995
    %v997 = vpop.xlane.xlu0 %996
    %v998 = vsel %vm337, %v979, 0.0
    %999 = vadd.xlane.f32.xlu0 %v998
    %v1000 = vpop.xlane.xlu0 %999
    %v1001 = vsel %vm337, %v981, 0.0
    %1002 = vadd.xlane.f32.xlu0 %v1001
    %v1003 = vpop.xlane.xlu0 %1002
    %v1004 = vsel %vm337, %v983, 0.0
    %1005 = vadd.xlane.f32.xlu0 %v1004
    %v1006 = vpop.xlane.xlu0 %1005
    %v1007 = vsel %vm337, %v985, 0.0
    %1008 = vadd.xlane.f32.xlu0 %v1007
    %v1009 = vpop.xlane.xlu0 %1008
    %v1010 = vrcp.pop %v988
    %v1011 = vrcp.pop %v991
    %v1012 = vrcp.pop %v994
    %v1013 = vrcp.pop %v997
    %v1014 = vrcp.pop %v1000
    %v1015 = vrcp.pop %v1003
    %v1016 = vrcp.pop %v1006
    %v1017 = vrcp.pop %v1009
    %v1018 = vmul.f32 %v971, %v1010
    %v1019 = vmul.f32 %v973, %v1011
    %v1020 = vmul.f32 %v975, %v1012
    %v1021 = vmul.f32 %v977, %v1013
    %v1022 = vmul.f32 %v979, %v1014
    %v1023 = vmul.f32 %v981, %v1015
    %v1024 = vmul.f32 %v983, %v1016
    %v1025 = vmul.f32 %v985, %v1017
    %v1027 = vsel %vm337, %v1018, 0
    %1029 = vmatprep.subr.mxu0 0.0
    %1030 = vmatpush1.msra.mxu0 %v283
    %1031 = vmatprep.subr.mxu0 0.0
    %1032 = vmatpush1.msra.mxu0 0.0
    %1033 = vmatprep.subr.mxu0 0.0
    %1034 = vmatpush1.msra.mxu0 0.0
    %1035 = vmatprep.subr.mxu0 0.0
    %1036 = vmatpush1.msra.mxu0 0.0
    %1037 = vmatprep.subr.mxu0 0.0
    %1038 = vmatpush1.msra.mxu0 0.0
    %1039 = vmatprep.subr.mxu0 0.0
    %1040 = vmatpush1.msra.mxu0 0.0
    %1041 = vmatprep.subr.mxu0 0.0
    %1042 = vmatpush1.msra.mxu0 0.0
    %1043 = vmatprep.subr.mxu0 0.0
    %1044 = vmatpush1.msra.mxu0 0.0
    %1045 = vmatprep.subr.mxu0 0.0
    %1046 = vmatpush1.msra.mxu0 0.0
    %1047 = vmatprep.subr.mxu0 0.0
    %1048 = vmatpush1.msra.mxu0 0.0
    %1049 = vmatprep.subr.mxu0 0.0
    %1050 = vmatpush1.msra.mxu0 0.0
    %1051 = vmatprep.subr.mxu0 0.0
    %1052 = vmatpush1.msra.mxu0 0.0
    %1053 = vmatprep.subr.mxu0 0.0
    %1054 = vmatpush1.msra.mxu0 0.0
    %1055 = vmatprep.subr.mxu0 0.0
    %1056 = vmatpush1.msra.mxu0 0.0
    %1057 = vmatprep.subr.mxu0 0.0
    %1058 = vmatpush1.msra.mxu0 0.0
    %1059 = vmatprep.subr.mxu0 0.0
    %1060 = vmatpush1.msra.mxu0 0.0
    %1061 = vmatprep.subr.mxu0 0.0
    %1062 = vmatpush1.msra.mxu0 0.0
    %1063 = vmatprep.subr.mxu0 0.0
    %1064 = vmatpush1.msra.mxu0 0.0
    %1065 = vmatprep.subr.mxu0 0.0
    %1066 = vmatpush1.msra.mxu0 0.0
    %1067 = vmatprep.subr.mxu0 0.0
    %1068 = vmatpush1.msra.mxu0 0.0
    %1069 = vmatprep.subr.mxu0 0.0
    %1070 = vmatpush1.msra.mxu0 0.0
    %1071 = vmatprep.subr.mxu0 0.0
    %1072 = vmatpush1.msra.mxu0 0.0
    %1073 = vmatprep.subr.mxu0 0.0
    %1074 = vmatpush1.msra.mxu0 0.0
    %1075 = vmatprep.subr.mxu0 0.0
    %1076 = vmatpush1.msra.mxu0 0.0
    %1077 = vmatprep.subr.mxu0 0.0
    %1078 = vmatpush1.msra.mxu0 0.0
    %1079 = vmatprep.subr.mxu0 0.0
    %1080 = vmatpush1.msra.mxu0 0.0
    %1081 = vmatprep.subr.mxu0 0.0
    %1082 = vmatpush1.msra.mxu0 0.0
    %1083 = vmatprep.subr.mxu0 0.0
    %1084 = vmatpush1.msra.mxu0 0.0
    %1085 = vmatprep.subr.mxu0 0.0
    %1086 = vmatpush1.msra.mxu0 0.0
    %1087 = vmatprep.subr.mxu0 0.0
    %1088 = vmatpush1.msra.mxu0 0.0
    %1089 = vmatprep.subr.mxu0 0.0
    %1090 = vmatpush1.msra.mxu0 0.0
    %1091 = vmatprep.subr.mxu0 0.0
    %1092 = vmatpush1.msra.mxu0 0.0
    %1093 = vmatprep.mubr.f32.mxu0 0.0
    %1094 = vmatmul.mubr.f32.gmra.mrb[0].mxu0 %v1027
    %v1095 = vpop.f32.mrb[0].mxu0
    %v1096 = vadd.f32 0.0, %v1095
    %v1097 = vpop.f32.mrb[0].mxu0
    %1098 = vdwg.mxu0
    %v1100 = vsel %vm337, %v1019, 0
    %1102 = vmatprep.subr.mxu0 0.0
    %1103 = vmatpush1.msra.mxu0 %v286
    %1104 = vmatprep.subr.mxu0 0.0
    %1105 = vmatpush1.msra.mxu0 0.0
    %1106 = vmatprep.subr.mxu0 0.0
    %1107 = vmatpush1.msra.mxu0 0.0
    %1108 = vmatprep.subr.mxu0 0.0
    %1109 = vmatpush1.msra.mxu0 0.0
    %1110 = vmatprep.subr.mxu0 0.0
    %1111 = vmatpush1.msra.mxu0 0.0
    %1112 = vmatprep.subr.mxu0 0.0
    %1113 = vmatpush1.msra.mxu0 0.0
    %1114 = vmatprep.subr.mxu0 0.0
    %1115 = vmatpush1.msra.mxu0 0.0
    %1116 = vmatprep.subr.mxu0 0.0
    %1117 = vmatpush1.msra.mxu0 0.0
    %1118 = vmatprep.subr.mxu0 0.0
    %1119 = vmatpush1.msra.mxu0 0.0
    %1120 = vmatprep.subr.mxu0 0.0
    %1121 = vmatpush1.msra.mxu0 0.0
    %1122 = vmatprep.subr.mxu0 0.0
    %1123 = vmatpush1.msra.mxu0 0.0
    %1124 = vmatprep.subr.mxu0 0.0
    %1125 = vmatpush1.msra.mxu0 0.0
    %1126 = vmatprep.subr.mxu0 0.0
    %1127 = vmatpush1.msra.mxu0 0.0
    %1128 = vmatprep.subr.mxu0 0.0
    %1129 = vmatpush1.msra.mxu0 0.0
    %1130 = vmatprep.subr.mxu0 0.0
    %1131 = vmatpush1.msra.mxu0 0.0
    %1132 = vmatprep.subr.mxu0 0.0
    %1133 = vmatpush1.msra.mxu0 0.0
    %1134 = vmatprep.subr.mxu0 0.0
    %1135 = vmatpush1.msra.mxu0 0.0
    %1136 = vmatprep.subr.mxu0 0.0
    %1137 = vmatpush1.msra.mxu0 0.0
    %1138 = vmatprep.subr.mxu0 0.0
    %1139 = vmatpush1.msra.mxu0 0.0
    %1140 = vmatprep.subr.mxu0 0.0
    %1141 = vmatpush1.msra.mxu0 0.0
    %1142 = vmatprep.subr.mxu0 0.0
    %1143 = vmatpush1.msra.mxu0 0.0
    %1144 = vmatprep.subr.mxu0 0.0
    %1145 = vmatpush1.msra.mxu0 0.0
    %1146 = vmatprep.subr.mxu0 0.0
    %1147 = vmatpush1.msra.mxu0 0.0
    %1148 = vmatprep.subr.mxu0 0.0
    %1149 = vmatpush1.msra.mxu0 0.0
    %1150 = vmatprep.subr.mxu0 0.0
    %1151 = vmatpush1.msra.mxu0 0.0
    %1152 = vmatprep.subr.mxu0 0.0
    %1153 = vmatpush1.msra.mxu0 0.0
    %1154 = vmatprep.subr.mxu0 0.0
    %1155 = vmatpush1.msra.mxu0 0.0
    %1156 = vmatprep.subr.mxu0 0.0
    %1157 = vmatpush1.msra.mxu0 0.0
    %1158 = vmatprep.subr.mxu0 0.0
    %1159 = vmatpush1.msra.mxu0 0.0
    %1160 = vmatprep.subr.mxu0 0.0
    %1161 = vmatpush1.msra.mxu0 0.0
    %1162 = vmatprep.subr.mxu0 0.0
    %1163 = vmatpush1.msra.mxu0 0.0
    %1164 = vmatprep.subr.mxu0 0.0
    %1165 = vmatpush1.msra.mxu0 0.0
    %1166 = vmatprep.mubr.f32.mxu0 0.0
    %1167 = vmatmul.mubr.f32.gmra.mrb[0].mxu0 %v1100
    %v1168 = vpop.f32.mrb[0].mxu0
    %v1169 = vadd.f32 0.0, %v1168
    %v1170 = vpop.f32.mrb[0].mxu0
    %1171 = vdwg.mxu0
    %v1173 = vsel %vm337, %v1020, 0
    %1175 = vmatprep.subr.mxu0 0.0
    %1176 = vmatpush1.msra.mxu0 %v320
    %1177 = vmatprep.subr.mxu0 0.0
    %1178 = vmatpush1.msra.mxu0 0.0
    %1179 = vmatprep.subr.mxu0 0.0
    %1180 = vmatpush1.msra.mxu0 0.0
    %1181 = vmatprep.subr.mxu0 0.0
    %1182 = vmatpush1.msra.mxu0 0.0
    %1183 = vmatprep.subr.mxu0 0.0
    %1184 = vmatpush1.msra.mxu0 0.0
    %1185 = vmatprep.subr.mxu0 0.0
    %1186 = vmatpush1.msra.mxu0 0.0
    %1187 = vmatprep.subr.mxu0 0.0
    %1188 = vmatpush1.msra.mxu0 0.0
    %1189 = vmatprep.subr.mxu0 0.0
    %1190 = vmatpush1.msra.mxu0 0.0
    %1191 = vmatprep.subr.mxu0 0.0
    %1192 = vmatpush1.msra.mxu0 0.0
    %1193 = vmatprep.subr.mxu0 0.0
    %1194 = vmatpush1.msra.mxu0 0.0
    %1195 = vmatprep.subr.mxu0 0.0
    %1196 = vmatpush1.msra.mxu0 0.0
    %1197 = vmatprep.subr.mxu0 0.0
    %1198 = vmatpush1.msra.mxu0 0.0
    %1199 = vmatprep.subr.mxu0 0.0
    %1200 = vmatpush1.msra.mxu0 0.0
    %1201 = vmatprep.subr.mxu0 0.0
    %1202 = vmatpush1.msra.mxu0 0.0
    %1203 = vmatprep.subr.mxu0 0.0
    %1204 = vmatpush1.msra.mxu0 0.0
    %1205 = vmatprep.subr.mxu0 0.0
    %1206 = vmatpush1.msra.mxu0 0.0
    %1207 = vmatprep.subr.mxu0 0.0
    %1208 = vmatpush1.msra.mxu0 0.0
    %1209 = vmatprep.subr.mxu0 0.0
    %1210 = vmatpush1.msra.mxu0 0.0
    %1211 = vmatprep.subr.mxu0 0.0
    %1212 = vmatpush1.msra.mxu0 0.0
    %1213 = vmatprep.subr.mxu0 0.0
    %1214 = vmatpush1.msra.mxu0 0.0
    %1215 = vmatprep.subr.mxu0 0.0
    %1216 = vmatpush1.msra.mxu0 0.0
    %1217 = vmatprep.subr.mxu0 0.0
    %1218 = vmatpush1.msra.mxu0 0.0
    %1219 = vmatprep.subr.mxu0 0.0
    %1220 = vmatpush1.msra.mxu0 0.0
    %1221 = vmatprep.subr.mxu0 0.0
    %1222 = vmatpush1.msra.mxu0 0.0
    %1223 = vmatprep.subr.mxu0 0.0
    %1224 = vmatpush1.msra.mxu0 0.0
    %1225 = vmatprep.subr.mxu0 0.0
    %1226 = vmatpush1.msra.mxu0 0.0
    %1227 = vmatprep.subr.mxu0 0.0
    %1228 = vmatpush1.msra.mxu0 0.0
    %1229 = vmatprep.subr.mxu0 0.0
    %1230 = vmatpush1.msra.mxu0 0.0
    %1231 = vmatprep.subr.mxu0 0.0
    %1232 = vmatpush1.msra.mxu0 0.0
    %1233 = vmatprep.subr.mxu0 0.0
    %1234 = vmatpush1.msra.mxu0 0.0
    %1235 = vmatprep.subr.mxu0 0.0
    %1236 = vmatpush1.msra.mxu0 0.0
    %1237 = vmatprep.subr.mxu0 0.0
    %1238 = vmatpush1.msra.mxu0 0.0
    %1239 = vmatprep.mubr.f32.mxu0 0.0
    %1240 = vmatmul.mubr.f32.gmra.mrb[0].mxu0 %v1173
    %v1241 = vpop.f32.mrb[0].mxu0
    %v1242 = vadd.f32 0.0, %v1241
    %v1243 = vpop.f32.mrb[0].mxu0
    %1244 = vdwg.mxu0
    %v1246 = vsel %vm337, %v1021, 0
    %1248 = vmatprep.subr.mxu0 0.0
    %1249 = vmatpush1.msra.mxu0 %v322
    %1250 = vmatprep.subr.mxu0 0.0
    %1251 = vmatpush1.msra.mxu0 0.0
    %1252 = vmatprep.subr.mxu0 0.0
    %1253 = vmatpush1.msra.mxu0 0.0
    %1254 = vmatprep.subr.mxu0 0.0
    %1255 = vmatpush1.msra.mxu0 0.0
    %1256 = vmatprep.subr.mxu0 0.0
    %1257 = vmatpush1.msra.mxu0 0.0
    %1258 = vmatprep.subr.mxu0 0.0
    %1259 = vmatpush1.msra.mxu0 0.0
    %1260 = vmatprep.subr.mxu0 0.0
    %1261 = vmatpush1.msra.mxu0 0.0
    %1262 = vmatprep.subr.mxu0 0.0
    %1263 = vmatpush1.msra.mxu0 0.0
    %1264 = vmatprep.subr.mxu0 0.0
    %1265 = vmatpush1.msra.mxu0 0.0
    %1266 = vmatprep.subr.mxu0 0.0
    %1267 = vmatpush1.msra.mxu0 0.0
    %1268 = vmatprep.subr.mxu0 0.0
    %1269 = vmatpush1.msra.mxu0 0.0
    %1270 = vmatprep.subr.mxu0 0.0
    %1271 = vmatpush1.msra.mxu0 0.0
    %1272 = vmatprep.subr.mxu0 0.0
    %1273 = vmatpush1.msra.mxu0 0.0
    %1274 = vmatprep.subr.mxu0 0.0
    %1275 = vmatpush1.msra.mxu0 0.0
    %1276 = vmatprep.subr.mxu0 0.0
    %1277 = vmatpush1.msra.mxu0 0.0
    %1278 = vmatprep.subr.mxu0 0.0
    %1279 = vmatpush1.msra.mxu0 0.0
    %1280 = vmatprep.subr.mxu0 0.0
    %1281 = vmatpush1.msra.mxu0 0.0
    %1282 = vmatprep.subr.mxu0 0.0
    %1283 = vmatpush1.msra.mxu0 0.0
    %1284 = vmatprep.subr.mxu0 0.0
    %1285 = vmatpush1.msra.mxu0 0.0
    %1286 = vmatprep.subr.mxu0 0.0
    %1287 = vmatpush1.msra.mxu0 0.0
    %1288 = vmatprep.subr.mxu0 0.0
    %1289 = vmatpush1.msra.mxu0 0.0
    %1290 = vmatprep.subr.mxu0 0.0
    %1291 = vmatpush1.msra.mxu0 0.0
    %1292 = vmatprep.subr.mxu0 0.0
    %1293 = vmatpush1.msra.mxu0 0.0
    %1294 = vmatprep.subr.mxu0 0.0
    %1295 = vmatpush1.msra.mxu0 0.0
    %1296 = vmatprep.subr.mxu0 0.0
    %1297 = vmatpush1.msra.mxu0 0.0
    %1298 = vmatprep.subr.mxu0 0.0
    %1299 = vmatpush1.msra.mxu0 0.0
    %1300 = vmatprep.subr.mxu0 0.0
    %1301 = vmatpush1.msra.mxu0 0.0
    %1302 = vmatprep.subr.mxu0 0.0
    %1303 = vmatpush1.msra.mxu0 0.0
    %1304 = vmatprep.subr.mxu0 0.0
    %1305 = vmatpush1.msra.mxu0 0.0
    %1306 = vmatprep.subr.mxu0 0.0
    %1307 = vmatpush1.msra.mxu0 0.0
    %1308 = vmatprep.subr.mxu0 0.0
    %1309 = vmatpush1.msra.mxu0 0.0
    %1310 = vmatprep.subr.mxu0 0.0
    %1311 = vmatpush1.msra.mxu0 0.0
    %1312 = vmatprep.mubr.f32.mxu0 0.0
    %1313 = vmatmul.mubr.f32.gmra.mrb[0].mxu0 %v1246
    %v1314 = vpop.f32.mrb[0].mxu0
    %v1315 = vadd.f32 0.0, %v1314
    %v1316 = vpop.f32.mrb[0].mxu0
    %1317 = vdwg.mxu0
    %v1319 = vsel %vm337, %v1022, 0
    %1321 = vmatprep.subr.mxu0 0.0
    %1322 = vmatpush1.msra.mxu0 %v326
    %1323 = vmatprep.subr.mxu0 0.0
    %1324 = vmatpush1.msra.mxu0 0.0
    %1325 = vmatprep.subr.mxu0 0.0
    %1326 = vmatpush1.msra.mxu0 0.0
    %1327 = vmatprep.subr.mxu0 0.0
    %1328 = vmatpush1.msra.mxu0 0.0
    %1329 = vmatprep.subr.mxu0 0.0
    %1330 = vmatpush1.msra.mxu0 0.0
    %1331 = vmatprep.subr.mxu0 0.0
    %1332 = vmatpush1.msra.mxu0 0.0
    %1333 = vmatprep.subr.mxu0 0.0
    %1334 = vmatpush1.msra.mxu0 0.0
    %1335 = vmatprep.subr.mxu0 0.0
    %1336 = vmatpush1.msra.mxu0 0.0
    %1337 = vmatprep.subr.mxu0 0.0
    %1338 = vmatpush1.msra.mxu0 0.0
    %1339 = vmatprep.subr.mxu0 0.0
    %1340 = vmatpush1.msra.mxu0 0.0
    %1341 = vmatprep.subr.mxu0 0.0
    %1342 = vmatpush1.msra.mxu0 0.0
    %1343 = vmatprep.subr.mxu0 0.0
    %1344 = vmatpush1.msra.mxu0 0.0
    %1345 = vmatprep.subr.mxu0 0.0
    %1346 = vmatpush1.msra.mxu0 0.0
    %1347 = vmatprep.subr.mxu0 0.0
    %1348 = vmatpush1.msra.mxu0 0.0
    %1349 = vmatprep.subr.mxu0 0.0
    %1350 = vmatpush1.msra.mxu0 0.0
    %1351 = vmatprep.subr.mxu0 0.0
    %1352 = vmatpush1.msra.mxu0 0.0
    %1353 = vmatprep.subr.mxu0 0.0
    %1354 = vmatpush1.msra.mxu0 0.0
    %1355 = vmatprep.subr.mxu0 0.0
    %1356 = vmatpush1.msra.mxu0 0.0
    %1357 = vmatprep.subr.mxu0 0.0
    %1358 = vmatpush1.msra.mxu0 0.0
    %1359 = vmatprep.subr.mxu0 0.0
    %1360 = vmatpush1.msra.mxu0 0.0
    %1361 = vmatprep.subr.mxu0 0.0
    %1362 = vmatpush1.msra.mxu0 0.0
    %1363 = vmatprep.subr.mxu0 0.0
    %1364 = vmatpush1.msra.mxu0 0.0
    %1365 = vmatprep.subr.mxu0 0.0
    %1366 = vmatpush1.msra.mxu0 0.0
    %1367 = vmatprep.subr.mxu0 0.0
    %1368 = vmatpush1.msra.mxu0 0.0
    %1369 = vmatprep.subr.mxu0 0.0
    %1370 = vmatpush1.msra.mxu0 0.0
    %1371 = vmatprep.subr.mxu0 0.0
    %1372 = vmatpush1.msra.mxu0 0.0
    %1373 = vmatprep.subr.mxu0 0.0
    %1374 = vmatpush1.msra.mxu0 0.0
    %1375 = vmatprep.subr.mxu0 0.0
    %1376 = vmatpush1.msra.mxu0 0.0
    %1377 = vmatprep.subr.mxu0 0.0
    %1378 = vmatpush1.msra.mxu0 0.0
    %1379 = vmatprep.subr.mxu0 0.0
    %1380 = vmatpush1.msra.mxu0 0.0
    %1381 = vmatprep.subr.mxu0 0.0
    %1382 = vmatpush1.msra.mxu0 0.0
    %1383 = vmatprep.subr.mxu0 0.0
    %1384 = vmatpush1.msra.mxu0 0.0
    %1385 = vmatprep.mubr.f32.mxu0 0.0
    %1386 = vmatmul.mubr.f32.gmra.mrb[0].mxu0 %v1319
    %v1387 = vpop.f32.mrb[0].mxu0
    %v1388 = vadd.f32 0.0, %v1387
    %v1389 = vpop.f32.mrb[0].mxu0
    %1390 = vdwg.mxu0
    %v1392 = vsel %vm337, %v1023, 0
    %1394 = vmatprep.subr.mxu0 0.0
    %1395 = vmatpush1.msra.mxu0 %v328
    %1396 = vmatprep.subr.mxu0 0.0
    %1397 = vmatpush1.msra.mxu0 0.0
    %1398 = vmatprep.subr.mxu0 0.0
    %1399 = vmatpush1.msra.mxu0 0.0
    %1400 = vmatprep.subr.mxu0 0.0
    %1401 = vmatpush1.msra.mxu0 0.0
    %1402 = vmatprep.subr.mxu0 0.0
    %1403 = vmatpush1.msra.mxu0 0.0
    %1404 = vmatprep.subr.mxu0 0.0
    %1405 = vmatpush1.msra.mxu0 0.0
    %1406 = vmatprep.subr.mxu0 0.0
    %1407 = vmatpush1.msra.mxu0 0.0
    %1408 = vmatprep.subr.mxu0 0.0
    %1409 = vmatpush1.msra.mxu0 0.0
    %1410 = vmatprep.subr.mxu0 0.0
    %1411 = vmatpush1.msra.mxu0 0.0
    %1412 = vmatprep.subr.mxu0 0.0
    %1413 = vmatpush1.msra.mxu0 0.0
    %1414 = vmatprep.subr.mxu0 0.0
    %1415 = vmatpush1.msra.mxu0 0.0
    %1416 = vmatprep.subr.mxu0 0.0
    %1417 = vmatpush1.msra.mxu0 0.0
    %1418 = vmatprep.subr.mxu0 0.0
    %1419 = vmatpush1.msra.mxu0 0.0
    %1420 = vmatprep.subr.mxu0 0.0
    %1421 = vmatpush1.msra.mxu0 0.0
    %1422 = vmatprep.subr.mxu0 0.0
    %1423 = vmatpush1.msra.mxu0 0.0
    %1424 = vmatprep.subr.mxu0 0.0
    %1425 = vmatpush1.msra.mxu0 0.0
    %1426 = vmatprep.subr.mxu0 0.0
    %1427 = vmatpush1.msra.mxu0 0.0
    %1428 = vmatprep.subr.mxu0 0.0
    %1429 = vmatpush1.msra.mxu0 0.0
    %1430 = vmatprep.subr.mxu0 0.0
    %1431 = vmatpush1.msra.mxu0 0.0
    %1432 = vmatprep.subr.mxu0 0.0
    %1433 = vmatpush1.msra.mxu0 0.0
    %1434 = vmatprep.subr.mxu0 0.0
    %1435 = vmatpush1.msra.mxu0 0.0
    %1436 = vmatprep.subr.mxu0 0.0
    %1437 = vmatpush1.msra.mxu0 0.0
    %1438 = vmatprep.subr.mxu0 0.0
    %1439 = vmatpush1.msra.mxu0 0.0
    %1440 = vmatprep.subr.mxu0 0.0
    %1441 = vmatpush1.msra.mxu0 0.0
    %1442 = vmatprep.subr.mxu0 0.0
    %1443 = vmatpush1.msra.mxu0 0.0
    %1444 = vmatprep.subr.mxu0 0.0
    %1445 = vmatpush1.msra.mxu0 0.0
    %1446 = vmatprep.subr.mxu0 0.0
    %1447 = vmatpush1.msra.mxu0 0.0
    %1448 = vmatprep.subr.mxu0 0.0
    %1449 = vmatpush1.msra.mxu0 0.0
    %1450 = vmatprep.subr.mxu0 0.0
    %1451 = vmatpush1.msra.mxu0 0.0
    %1452 = vmatprep.subr.mxu0 0.0
    %1453 = vmatpush1.msra.mxu0 0.0
    %1454 = vmatprep.subr.mxu0 0.0
    %1455 = vmatpush1.msra.mxu0 0.0
    %1456 = vmatprep.subr.mxu0 0.0
    %1457 = vmatpush1.msra.mxu0 0.0
    %1458 = vmatprep.mubr.f32.mxu0 0.0
    %1459 = vmatmul.mubr.f32.gmra.mrb[0].mxu0 %v1392
    %v1460 = vpop.f32.mrb[0].mxu0
    %v1461 = vadd.f32 0.0, %v1460
    %v1462 = vpop.f32.mrb[0].mxu0
    %1463 = vdwg.mxu0
    %v1465 = vsel %vm337, %v1024, 0
    %1467 = vmatprep.subr.mxu0 0.0
    %1468 = vmatpush1.msra.mxu0 %v332
    %1469 = vmatprep.subr.mxu0 0.0
    %1470 = vmatpush1.msra.mxu0 0.0
    %1471 = vmatprep.subr.mxu0 0.0
    %1472 = vmatpush1.msra.mxu0 0.0
    %1473 = vmatprep.subr.mxu0 0.0
    %1474 = vmatpush1.msra.mxu0 0.0
    %1475 = vmatprep.subr.mxu0 0.0
    %1476 = vmatpush1.msra.mxu0 0.0
    %1477 = vmatprep.subr.mxu0 0.0
    %1478 = vmatpush1.msra.mxu0 0.0
    %1479 = vmatprep.subr.mxu0 0.0
    %1480 = vmatpush1.msra.mxu0 0.0
    %1481 = vmatprep.subr.mxu0 0.0
    %1482 = vmatpush1.msra.mxu0 0.0
    %1483 = vmatprep.subr.mxu0 0.0
    %1484 = vmatpush1.msra.mxu0 0.0
    %1485 = vmatprep.subr.mxu0 0.0
    %1486 = vmatpush1.msra.mxu0 0.0
    %1487 = vmatprep.subr.mxu0 0.0
    %1488 = vmatpush1.msra.mxu0 0.0
    %1489 = vmatprep.subr.mxu0 0.0
    %1490 = vmatpush1.msra.mxu0 0.0
    %1491 = vmatprep.subr.mxu0 0.0
    %1492 = vmatpush1.msra.mxu0 0.0
    %1493 = vmatprep.subr.mxu0 0.0
    %1494 = vmatpush1.msra.mxu0 0.0
    %1495 = vmatprep.subr.mxu0 0.0
    %1496 = vmatpush1.msra.mxu0 0.0
    %1497 = vmatprep.subr.mxu0 0.0
    %1498 = vmatpush1.msra.mxu0 0.0
    %1499 = vmatprep.subr.mxu0 0.0
    %1500 = vmatpush1.msra.mxu0 0.0
    %1501 = vmatprep.subr.mxu0 0.0
    %1502 = vmatpush1.msra.mxu0 0.0
    %1503 = vmatprep.subr.mxu0 0.0
    %1504 = vmatpush1.msra.mxu0 0.0
    %1505 = vmatprep.subr.mxu0 0.0
    %1506 = vmatpush1.msra.mxu0 0.0
    %1507 = vmatprep.subr.mxu0 0.0
    %1508 = vmatpush1.msra.mxu0 0.0
    %1509 = vmatprep.subr.mxu0 0.0
    %1510 = vmatpush1.msra.mxu0 0.0
    %1511 = vmatprep.subr.mxu0 0.0
    %1512 = vmatpush1.msra.mxu0 0.0
    %1513 = vmatprep.subr.mxu0 0.0
    %1514 = vmatpush1.msra.mxu0 0.0
    %1515 = vmatprep.subr.mxu0 0.0
    %1516 = vmatpush1.msra.mxu0 0.0
    %1517 = vmatprep.subr.mxu0 0.0
    %1518 = vmatpush1.msra.mxu0 0.0
    %1519 = vmatprep.subr.mxu0 0.0
    %1520 = vmatpush1.msra.mxu0 0.0
    %1521 = vmatprep.subr.mxu0 0.0
    %1522 = vmatpush1.msra.mxu0 0.0
    %1523 = vmatprep.subr.mxu0 0.0
    %1524 = vmatpush1.msra.mxu0 0.0
    %1525 = vmatprep.subr.mxu0 0.0
    %1526 = vmatpush1.msra.mxu0 0.0
    %1527 = vmatprep.subr.mxu0 0.0
    %1528 = vmatpush1.msra.mxu0 0.0
    %1529 = vmatprep.subr.mxu0 0.0
    %1530 = vmatpush1.msra.mxu0 0.0
    %1531 = vmatprep.mubr.f32.mxu0 0.0
    %1532 = vmatmul.mubr.f32.gmra.mrb[0].mxu0 %v1465
    %v1533 = vpop.f32.mrb[0].mxu0
    %v1534 = vadd.f32 0.0, %v1533
    %v1535 = vpop.f32.mrb[0].mxu0
    %1536 = vdwg.mxu0
    %v1538 = vsel %vm337, %v1025, 0
    %1540 = vmatprep.subr.mxu0 0.0
    %1541 = vmatpush1.msra.mxu0 %v334
    %1542 = vmatprep.subr.mxu0 0.0
    %1543 = vmatpush1.msra.mxu0 0.0
    %1544 = vmatprep.subr.mxu0 0.0
    %1545 = vmatpush1.msra.mxu0 0.0
    %1546 = vmatprep.subr.mxu0 0.0
    %1547 = vmatpush1.msra.mxu0 0.0
    %1548 = vmatprep.subr.mxu0 0.0
    %1549 = vmatpush1.msra.mxu0 0.0
    %1550 = vmatprep.subr.mxu0 0.0
    %1551 = vmatpush1.msra.mxu0 0.0
    %1552 = vmatprep.subr.mxu0 0.0
    %1553 = vmatpush1.msra.mxu0 0.0
    %1554 = vmatprep.subr.mxu0 0.0
    %1555 = vmatpush1.msra.mxu0 0.0
    %1556 = vmatprep.subr.mxu0 0.0
    %1557 = vmatpush1.msra.mxu0 0.0
    %1558 = vmatprep.subr.mxu0 0.0
    %1559 = vmatpush1.msra.mxu0 0.0
    %1560 = vmatprep.subr.mxu0 0.0
    %1561 = vmatpush1.msra.mxu0 0.0
    %1562 = vmatprep.subr.mxu0 0.0
    %1563 = vmatpush1.msra.mxu0 0.0
    %1564 = vmatprep.subr.mxu0 0.0
    %1565 = vmatpush1.msra.mxu0 0.0
    %1566 = vmatprep.subr.mxu0 0.0
    %1567 = vmatpush1.msra.mxu0 0.0
    %1568 = vmatprep.subr.mxu0 0.0
    %1569 = vmatpush1.msra.mxu0 0.0
    %1570 = vmatprep.subr.mxu0 0.0
    %1571 = vmatpush1.msra.mxu0 0.0
    %1572 = vmatprep.subr.mxu0 0.0
    %1573 = vmatpush1.msra.mxu0 0.0
    %1574 = vmatprep.subr.mxu0 0.0
    %1575 = vmatpush1.msra.mxu0 0.0
    %1576 = vmatprep.subr.mxu0 0.0
    %1577 = vmatpush1.msra.mxu0 0.0
    %1578 = vmatprep.subr.mxu0 0.0
    %1579 = vmatpush1.msra.mxu0 0.0
    %1580 = vmatprep.subr.mxu0 0.0
    %1581 = vmatpush1.msra.mxu0 0.0
    %1582 = vmatprep.subr.mxu0 0.0
    %1583 = vmatpush1.msra.mxu0 0.0
    %1584 = vmatprep.subr.mxu0 0.0
    %1585 = vmatpush1.msra.mxu0 0.0
    %1586 = vmatprep.subr.mxu0 0.0
    %1587 = vmatpush1.msra.mxu0 0.0
    %1588 = vmatprep.subr.mxu0 0.0
    %1589 = vmatpush1.msra.mxu0 0.0
    %1590 = vmatprep.subr.mxu0 0.0
    %1591 = vmatpush1.msra.mxu0 0.0
    %1592 = vmatprep.subr.mxu0 0.0
    %1593 = vmatpush1.msra.mxu0 0.0
    %1594 = vmatprep.subr.mxu0 0.0
    %1595 = vmatpush1.msra.mxu0 0.0
    %1596 = vmatprep.subr.mxu0 0.0
    %1597 = vmatpush1.msra.mxu0 0.0
    %1598 = vmatprep.subr.mxu0 0.0
    %1599 = vmatpush1.msra.mxu0 0.0
    %1600 = vmatprep.subr.mxu0 0.0
    %1601 = vmatpush1.msra.mxu0 0.0
    %1602 = vmatprep.subr.mxu0 0.0
    %1603 = vmatpush1.msra.mxu0 0.0
    %1604 = vmatprep.mubr.f32.mxu0 0.0
    %1605 = vmatmul.mubr.f32.gmra.mrb[0].mxu0 %v1538
    %v1606 = vpop.f32.mrb[0].mxu0
    %v1607 = vadd.f32 0.0, %v1606
    %v1608 = vpop.f32.mrb[0].mxu0
    %1609 = vdwg.mxu0
    %v1610 = vld [vmem:[%s8] sm:$0xf]
    %v1611 = vld [vmem:[%s8 + $0x4] sm:$0xf]
    %v1612 = vld [vmem:[%s8 + $0x8] sm:$0xf]
    %v1613 = vld [vmem:[%s8 + $0xc] sm:$0xf]
    %v1614 = vpack.c.bf16 %v1169, %v1096
    %v1615 = vpack.c.bf16 %v1315, %v1242
    %v1617 = vsel %vm337, %v1615, 0
    %vm1619 = vcmask 1043456
    %v1621 = vsel %vm1619, %v1611, 0
    %1623 = vmatprep.subr.bf16.mxu0 0
    %1624 = vmatpush1.bf16.msra.mxu0 %v1621
    %1625 = vmatprep.subr.bf16.mxu0 0
    %1626 = vmatpush1.bf16.msra.mxu0 0
    %1627 = vmatprep.subr.bf16.mxu0 0
    %1628 = vmatpush1.bf16.msra.mxu0 0
    %1629 = vmatprep.subr.bf16.mxu0 0
    %1630 = vmatpush1.bf16.msra.mxu0 0
    %1631 = vmatprep.subr.bf16.mxu0 0
    %1632 = vmatpush1.bf16.msra.mxu0 0
    %1633 = vmatprep.subr.bf16.mxu0 0
    %1634 = vmatpush1.bf16.msra.mxu0 0
    %1635 = vmatprep.subr.bf16.mxu0 0
    %1636 = vmatpush1.bf16.msra.mxu0 0
    %1637 = vmatprep.subr.bf16.mxu0 0
    %1638 = vmatpush1.bf16.msra.mxu0 0
    %1639 = vmatprep.subr.bf16.mxu0 0
    %1640 = vmatpush1.bf16.msra.mxu0 0
    %1641 = vmatprep.subr.bf16.mxu0 0
    %1642 = vmatpush1.bf16.msra.mxu0 0
    %1643 = vmatprep.subr.bf16.mxu0 0
    %1644 = vmatpush1.bf16.msra.mxu0 0
    %1645 = vmatprep.subr.bf16.mxu0 0
    %1646 = vmatpush1.bf16.msra.mxu0 0
    %1647 = vmatprep.subr.bf16.mxu0 0
    %1648 = vmatpush1.bf16.msra.mxu0 0
    %1649 = vmatprep.subr.bf16.mxu0 0
    %1650 = vmatpush1.bf16.msra.mxu0 0
    %1651 = vmatprep.subr.bf16.mxu0 0
    %1652 = vmatpush1.bf16.msra.mxu0 0
    %1653 = vmatprep.subr.bf16.mxu0 0
    %1654 = vmatpush1.bf16.msra.mxu0 0
    %1655 = vmatprep.mubr.bf16.mxu0 0
    %1656 = vmatmul.mubr.bf16.gmra.mrb[0].mxu0 %v1617
    %v1657 = vpop.f32.mrb[0].mxu0
    %v1658 = vadd.f32 0.0, %v1657
    %v1659 = vpop.f32.mrb[0].mxu0
    %v1660 = vpop.f32.mrb[0].mxu0
    %v1661 = vadd.f32 0.0, %v1660
    %v1662 = vpop.f32.mrb[0].mxu0
    %1663 = vdwg.mxu0
    %v1665 = vsel %vm337, %v1614, 0
    %v1668 = vsel %vm1619, %v1610, 0
    %1670 = vmatprep.subr.bf16.mxu0 0
    %1671 = vmatpush1.bf16.msra.mxu0 %v1668
    %1672 = vmatprep.subr.bf16.mxu0 0
    %1673 = vmatpush1.bf16.msra.mxu0 0
    %1674 = vmatprep.subr.bf16.mxu0 0
    %1675 = vmatpush1.bf16.msra.mxu0 0
    %1676 = vmatprep.subr.bf16.mxu0 0
    %1677 = vmatpush1.bf16.msra.mxu0 0
    %1678 = vmatprep.subr.bf16.mxu0 0
    %1679 = vmatpush1.bf16.msra.mxu0 0
    %1680 = vmatprep.subr.bf16.mxu0 0
    %1681 = vmatpush1.bf16.msra.mxu0 0
    %1682 = vmatprep.subr.bf16.mxu0 0
    %1683 = vmatpush1.bf16.msra.mxu0 0
    %1684 = vmatprep.subr.bf16.mxu0 0
    %1685 = vmatpush1.bf16.msra.mxu0 0
    %1686 = vmatprep.subr.bf16.mxu0 0
    %1687 = vmatpush1.bf16.msra.mxu0 0
    %1688 = vmatprep.subr.bf16.mxu0 0
    %1689 = vmatpush1.bf16.msra.mxu0 0
    %1690 = vmatprep.subr.bf16.mxu0 0
    %1691 = vmatpush1.bf16.msra.mxu0 0
    %1692 = vmatprep.subr.bf16.mxu0 0
    %1693 = vmatpush1.bf16.msra.mxu0 0
    %1694 = vmatprep.subr.bf16.mxu0 0
    %1695 = vmatpush1.bf16.msra.mxu0 0
    %1696 = vmatprep.subr.bf16.mxu0 0
    %1697 = vmatpush1.bf16.msra.mxu0 0
    %1698 = vmatprep.subr.bf16.mxu0 0
    %1699 = vmatpush1.bf16.msra.mxu0 0
    %1700 = vmatprep.subr.bf16.mxu0 0
    %1701 = vmatpush1.bf16.msra.mxu0 0
    %1702 = vmatprep.mubr.bf16.mxu0 0
    %1703 = vmatmul.mubr.bf16.gmra.mrb[0].mxu0 %v1665
    %v1704 = vpop.f32.mrb[0].mxu0
    %v1705 = vadd.f32 %v1658, %v1704
    %v1706 = vpop.f32.mrb[0].mxu0
    %v1707 = vpop.f32.mrb[0].mxu0
    %v1708 = vadd.f32 %v1661, %v1707
    %v1709 = vpop.f32.mrb[0].mxu0
    %1710 = vdwg.mxu0
    %v1711 = vpack.c.bf16 %v1461, %v1388
    %v1713 = vsel %vm337, %v1711, 0
    %v1716 = vsel %vm1619, %v1612, 0
    %1718 = vmatprep.subr.bf16.mxu0 0
    %1719 = vmatpush1.bf16.msra.mxu0 %v1716
    %1720 = vmatprep.subr.bf16.mxu0 0
    %1721 = vmatpush1.bf16.msra.mxu0 0
    %1722 = vmatprep.subr.bf16.mxu0 0
    %1723 = vmatpush1.bf16.msra.mxu0 0
    %1724 = vmatprep.subr.bf16.mxu0 0
    %1725 = vmatpush1.bf16.msra.mxu0 0
    %1726 = vmatprep.subr.bf16.mxu0 0
    %1727 = vmatpush1.bf16.msra.mxu0 0
    %1728 = vmatprep.subr.bf16.mxu0 0
    %1729 = vmatpush1.bf16.msra.mxu0 0
    %1730 = vmatprep.subr.bf16.mxu0 0
    %1731 = vmatpush1.bf16.msra.mxu0 0
    %1732 = vmatprep.subr.bf16.mxu0 0
    %1733 = vmatpush1.bf16.msra.mxu0 0
    %1734 = vmatprep.subr.bf16.mxu0 0
    %1735 = vmatpush1.bf16.msra.mxu0 0
    %1736 = vmatprep.subr.bf16.mxu0 0
    %1737 = vmatpush1.bf16.msra.mxu0 0
    %1738 = vmatprep.subr.bf16.mxu0 0
    %1739 = vmatpush1.bf16.msra.mxu0 0
    %1740 = vmatprep.subr.bf16.mxu0 0
    %1741 = vmatpush1.bf16.msra.mxu0 0
    %1742 = vmatprep.subr.bf16.mxu0 0
    %1743 = vmatpush1.bf16.msra.mxu0 0
    %1744 = vmatprep.subr.bf16.mxu0 0
    %1745 = vmatpush1.bf16.msra.mxu0 0
    %1746 = vmatprep.subr.bf16.mxu0 0
    %1747 = vmatpush1.bf16.msra.mxu0 0
    %1748 = vmatprep.subr.bf16.mxu0 0
    %1749 = vmatpush1.bf16.msra.mxu0 0
    %1750 = vmatprep.mubr.bf16.mxu0 0
    %1751 = vmatmul.mubr.bf16.gmra.mrb[0].mxu0 %v1713
    %v1752 = vpop.f32.mrb[0].mxu0
    %v1753 = vadd.f32 0.0, %v1752
    %v1754 = vpop.f32.mrb[0].mxu0
    %v1755 = vpop.f32.mrb[0].mxu0
    %v1756 = vadd.f32 0.0, %v1755
    %v1757 = vpop.f32.mrb[0].mxu0
    %1758 = vdwg.mxu0
    %v1759 = vadd.f32 %v1705, %v1753
    %v1760 = vadd.f32 %v1708, %v1756
    %v1761 = vpack.c.bf16 %v1607, %v1534
    %v1763 = vsel %vm337, %v1761, 0
    %v1766 = vsel %vm1619, %v1613, 0
    %1768 = vmatprep.subr.bf16.mxu0 0
    %1769 = vmatpush1.bf16.msra.mxu0 %v1766
    %1770 = vmatprep.subr.bf16.mxu0 0
    %1771 = vmatpush1.bf16.msra.mxu0 0
    %1772 = vmatprep.subr.bf16.mxu0 0
    %1773 = vmatpush1.bf16.msra.mxu0 0
    %1774 = vmatprep.subr.bf16.mxu0 0
    %1775 = vmatpush1.bf16.msra.mxu0 0
    %1776 = vmatprep.subr.bf16.mxu0 0
    %1777 = vmatpush1.bf16.msra.mxu0 0
    %1778 = vmatprep.subr.bf16.mxu0 0
    %1779 = vmatpush1.bf16.msra.mxu0 0
    %1780 = vmatprep.subr.bf16.mxu0 0
    %1781 = vmatpush1.bf16.msra.mxu0 0
    %1782 = vmatprep.subr.bf16.mxu0 0
    %1783 = vmatpush1.bf16.msra.mxu0 0
    %1784 = vmatprep.subr.bf16.mxu0 0
    %1785 = vmatpush1.bf16.msra.mxu0 0
    %1786 = vmatprep.subr.bf16.mxu0 0
    %1787 = vmatpush1.bf16.msra.mxu0 0
    %1788 = vmatprep.subr.bf16.mxu0 0
    %1789 = vmatpush1.bf16.msra.mxu0 0
    %1790 = vmatprep.subr.bf16.mxu0 0
    %1791 = vmatpush1.bf16.msra.mxu0 0
    %1792 = vmatprep.subr.bf16.mxu0 0
    %1793 = vmatpush1.bf16.msra.mxu0 0
    %1794 = vmatprep.subr.bf16.mxu0 0
    %1795 = vmatpush1.bf16.msra.mxu0 0
    %1796 = vmatprep.subr.bf16.mxu0 0
    %1797 = vmatpush1.bf16.msra.mxu0 0
    %1798 = vmatprep.subr.bf16.mxu0 0
    %1799 = vmatpush1.bf16.msra.mxu0 0
    %1800 = vmatprep.mubr.bf16.mxu0 0
    %1801 = vmatmul.mubr.bf16.gmra.mrb[0].mxu0 %v1763
    %v1802 = vpop.f32.mrb[0].mxu0
    %v1803 = vadd.f32 0.0, %v1802
    %v1804 = vpop.f32.mrb[0].mxu0
    %v1805 = vpop.f32.mrb[0].mxu0
    %v1806 = vadd.f32 0.0, %v1805
    %v1807 = vpop.f32.mrb[0].mxu0
    %1808 = vdwg.mxu0
    %v1809 = vadd.f32 %v1759, %v1803
    %v1810 = vadd.f32 %v1760, %v1806
    %v1811 = vld [vmem:[%s9] sm:$0x1]
    %v1813 = vlaneseq
    %v1814 = vshrl.u32 %v1813, 7
    %v1815 = vsub.s32 0, %v1814
    %v1816 = vrot.slane %v1811, %v1815
    %v1818 = vadd.f32 %v1809, %v1816
    %v1819 = vadd.f32 %v1810, %v1816
    %v1820 = vadd.f32 %v1818, %v88
    %v1821 = vadd.f32 %v1819, %v89
    %v1822 = vld [vmem:[%s20] sm:$0x1]
    %v1823 = vld [vmem:[%s21] sm:$0x1]
    %v1824 = vsel %vm116, %v1820, 0.0
    %1825 = vadd.xlane.f32.xlu0 %v1824
    %v1826 = vpop.xlane.xlu0 %1825
    %v1827 = vsel %vm116, %v1821, 0.0
    %1828 = vadd.xlane.f32.xlu0 %v1827
    %v1829 = vpop.xlane.xlu0 %1828
    %v1830 = vrcp.pop 32.0
    %v1831 = vmul.f32 %v1826, %v1830
    %v1832 = vmul.f32 %v1829, %v1830
    %v1833 = vsub.f32 %v1820, %v1831
    %v1834 = vsub.f32 %v1821, %v1832
    %v1835 = vmul.f32 %v1833, %v1833
    %v1836 = vmul.f32 %v1834, %v1834
    %v1837 = vsel %vm116, %v1835, 0.0
    %1838 = vadd.xlane.f32.xlu0 %v1837
    %v1839 = vpop.xlane.xlu0 %1838
    %v1840 = vsel %vm116, %v1836, 0.0
    %1841 = vadd.xlane.f32.xlu0 %v1840
    %v1842 = vpop.xlane.xlu0 %1841
    %v1843 = vmul.f32 %v1839, %v1830
    %v1844 = vmul.f32 %v1842, %v1830
    %v1845 = vadd.f32 %v1843, 1e-05
    %v1846 = vadd.f32 %v1844, 1e-05
    %v1847 = vrsqrt.pop %v1845
    %v1848 = vrsqrt.pop %v1846
    %v1849 = vmul.f32 %v1833, %v1847
    %v1850 = vmul.f32 %v1834, %v1848
    %v1852 = vlaneseq
    %v1853 = vshrl.u32 %v1852, 7
    %v1854 = vsub.s32 0, %v1853
    %v1855 = vrot.slane %v1822, %v1854
    %v1857 = vmul.f32 %v1849, %v1855
    %v1858 = vmul.f32 %v1850, %v1855
    %v1860 = vlaneseq
    %v1861 = vshrl.u32 %v1860, 7
    %v1862 = vsub.s32 0, %v1861
    %v1863 = vrot.slane %v1823, %v1862
    %v1865 = vadd.f32 %v1857, %v1863
    %v1866 = vadd.f32 %v1858, %v1863
    %v1867 = vpack.c.bf16 %v1866, %v1865
    %v1868 = vld [vmem:[%s10] sm:$0xf]
    %v1869 = vld [vmem:[%s10 + $0x4] sm:$0xf]
    %v1870 = vld [vmem:[%s10 + $0x8] sm:$0xf]
    %v1871 = vld [vmem:[%s10 + $0xc] sm:$0xf]
    %v1872 = vld [vmem:[%s13] sm:$0x1]
    %v1874 = vlaneseq
    %v1875 = vshrl.u32 %v1874, 7
    %v1876 = vsub.s32 0, %v1875
    %v1877 = vrot.slane %v1872, %v1876
    %v1883 = vunpack.c.l.b16 %v1868
    %v1884 = vunpack.c.l.b16 %v1869
    %v1885 = vunpack.c.l.b16 %v1870
    %v1886 = vunpack.c.l.b16 %v1871
    %v1887 = vpack.c.b16 %v1884, %v1883
    %v1888 = vpack.c.b16 %v1886, %v1885
    %v1892 = vsel %vm116, %v1867, 0
    %1894 = vmatprep.subr.bf16.mxu0 0
    %1895 = vmatpush1.bf16.msra.mxu0 %v1887
    %1896 = vmatprep.subr.bf16.mxu0 0
    %1897 = vmatpush1.bf16.msra.mxu0 %v1888
    %1898 = vmatprep.subr.bf16.mxu0 0
    %1899 = vmatpush1.bf16.msra.mxu0 0
    %1900 = vmatprep.subr.bf16.mxu0 0
    %1901 = vmatpush1.bf16.msra.mxu0 0
    %1902 = vmatprep.subr.bf16.mxu0 0
    %1903 = vmatpush1.bf16.msra.mxu0 0
    %1904 = vmatprep.subr.bf16.mxu0 0
    %1905 = vmatpush1.bf16.msra.mxu0 0
    %1906 = vmatprep.subr.bf16.mxu0 0
    %1907 = vmatpush1.bf16.msra.mxu0 0
    %1908 = vmatprep.subr.bf16.mxu0 0
    %1909 = vmatpush1.bf16.msra.mxu0 0
    %1910 = vmatprep.subr.bf16.mxu0 0
    %1911 = vmatpush1.bf16.msra.mxu0 0
    %1912 = vmatprep.subr.bf16.mxu0 0
    %1913 = vmatpush1.bf16.msra.mxu0 0
    %1914 = vmatprep.subr.bf16.mxu0 0
    %1915 = vmatpush1.bf16.msra.mxu0 0
    %1916 = vmatprep.subr.bf16.mxu0 0
    %1917 = vmatpush1.bf16.msra.mxu0 0
    %1918 = vmatprep.subr.bf16.mxu0 0
    %1919 = vmatpush1.bf16.msra.mxu0 0
    %1920 = vmatprep.subr.bf16.mxu0 0
    %1921 = vmatpush1.bf16.msra.mxu0 0
    %1922 = vmatprep.subr.bf16.mxu0 0
    %1923 = vmatpush1.bf16.msra.mxu0 0
    %1924 = vmatprep.subr.bf16.mxu0 0
    %1925 = vmatpush1.bf16.msra.mxu0 0
    %1926 = vmatprep.mubr.bf16.mxu0 0
    %1927 = vmatmul.mubr.bf16.gmra.mrb[0].mxu0 %v1892
    %v1928 = vpop.f32.mrb[0].mxu0
    %v1929 = vadd.f32 %v1877, %v1928
    %v1930 = vpop.f32.mrb[0].mxu0
    %v1931 = vpop.f32.mrb[0].mxu0
    %v1932 = vadd.f32 %v1877, %v1931
    %v1933 = vpop.f32.mrb[0].mxu0
    %1934 = vdwg.mxu0
    %v1935 = vpack.c.bf16 %v91, %v90
    %v1936 = vld [vmem:[%s11] sm:$0xf]
    %v1937 = vld [vmem:[%s11 + $0x4] sm:$0xf]
    %v1938 = vld [vmem:[%s11 + $0x8] sm:$0xf]
    %v1939 = vld [vmem:[%s11 + $0xc] sm:$0xf]
    %v1940 = vld [vmem:[%s14] sm:$0x1]
    %v1942 = vlaneseq
    %v1943 = vshrl.u32 %v1942, 7
    %v1944 = vsub.s32 0, %v1943
    %v1945 = vrot.slane %v1940, %v1944
    %v1951 = vunpack.c.l.b16 %v1936
    %v1952 = vunpack.c.l.b16 %v1937
    %v1953 = vunpack.c.l.b16 %v1938
    %v1954 = vunpack.c.l.b16 %v1939
    %v1955 = vpack.c.b16 %v1952, %v1951
    %v1956 = vpack.c.b16 %v1954, %v1953
    %v1960 = vsel %vm116, %v1935, 0
    %1962 = vmatprep.subr.bf16.mxu0 0
    %1963 = vmatpush1.bf16.msra.mxu0 %v1955
    %1964 = vmatprep.subr.bf16.mxu0 0
    %1965 = vmatpush1.bf16.msra.mxu0 %v1956
    %1966 = vmatprep.subr.bf16.mxu0 0
    %1967 = vmatpush1.bf16.msra.mxu0 0
    %1968 = vmatprep.subr.bf16.mxu0 0
    %1969 = vmatpush1.bf16.msra.mxu0 0
    %1970 = vmatprep.subr.bf16.mxu0 0
    %1971 = vmatpush1.bf16.msra.mxu0 0
    %1972 = vmatprep.subr.bf16.mxu0 0
    %1973 = vmatpush1.bf16.msra.mxu0 0
    %1974 = vmatprep.subr.bf16.mxu0 0
    %1975 = vmatpush1.bf16.msra.mxu0 0
    %1976 = vmatprep.subr.bf16.mxu0 0
    %1977 = vmatpush1.bf16.msra.mxu0 0
    %1978 = vmatprep.subr.bf16.mxu0 0
    %1979 = vmatpush1.bf16.msra.mxu0 0
    %1980 = vmatprep.subr.bf16.mxu0 0
    %1981 = vmatpush1.bf16.msra.mxu0 0
    %1982 = vmatprep.subr.bf16.mxu0 0
    %1983 = vmatpush1.bf16.msra.mxu0 0
    %1984 = vmatprep.subr.bf16.mxu0 0
    %1985 = vmatpush1.bf16.msra.mxu0 0
    %1986 = vmatprep.subr.bf16.mxu0 0
    %1987 = vmatpush1.bf16.msra.mxu0 0
    %1988 = vmatprep.subr.bf16.mxu0 0
    %1989 = vmatpush1.bf16.msra.mxu0 0
    %1990 = vmatprep.subr.bf16.mxu0 0
    %1991 = vmatpush1.bf16.msra.mxu0 0
    %1992 = vmatprep.subr.bf16.mxu0 0
    %1993 = vmatpush1.bf16.msra.mxu0 0
    %1994 = vmatprep.mubr.bf16.mxu0 0
    %1995 = vmatmul.mubr.bf16.gmra.mrb[0].mxu0 %v1960
    %v1996 = vpop.f32.mrb[0].mxu0
    %v1997 = vadd.f32 %v1945, %v1996
    %v1998 = vpop.f32.mrb[0].mxu0
    %v1999 = vpop.f32.mrb[0].mxu0
    %v2000 = vadd.f32 %v1945, %v1999
    %v2001 = vpop.f32.mrb[0].mxu0
    %2002 = vdwg.mxu0
    %v2003 = vld [vmem:[%s12] sm:$0xf]
    %v2004 = vld [vmem:[%s12 + $0x4] sm:$0xf]
    %v2005 = vld [vmem:[%s12 + $0x8] sm:$0xf]
    %v2006 = vld [vmem:[%s12 + $0xc] sm:$0xf]
    %v2007 = vld [vmem:[%s15] sm:$0x1]
    %v2009 = vlaneseq
    %v2010 = vshrl.u32 %v2009, 7
    %v2011 = vsub.s32 0, %v2010
    %v2012 = vrot.slane %v2007, %v2011
    %v2018 = vunpack.c.l.b16 %v2003
    %v2019 = vunpack.c.l.b16 %v2004
    %v2020 = vunpack.c.l.b16 %v2005
    %v2021 = vunpack.c.l.b16 %v2006
    %v2022 = vpack.c.b16 %v2019, %v2018
    %v2023 = vpack.c.b16 %v2021, %v2020
    %2026 = vmatprep.subr.bf16.mxu0 0
    %2027 = vmatpush1.bf16.msra.mxu0 %v2022
    %2028 = vmatprep.subr.bf16.mxu0 0
    %2029 = vmatpush1.bf16.msra.mxu0 %v2023
    %2030 = vmatprep.subr.bf16.mxu0 0
    %2031 = vmatpush1.bf16.msra.mxu0 0
    %2032 = vmatprep.subr.bf16.mxu0 0
    %2033 = vmatpush1.bf16.msra.mxu0 0
    %2034 = vmatprep.subr.bf16.mxu0 0
    %2035 = vmatpush1.bf16.msra.mxu0 0
    %2036 = vmatprep.subr.bf16.mxu0 0
    %2037 = vmatpush1.bf16.msra.mxu0 0
    %2038 = vmatprep.subr.bf16.mxu0 0
    %2039 = vmatpush1.bf16.msra.mxu0 0
    %2040 = vmatprep.subr.bf16.mxu0 0
    %2041 = vmatpush1.bf16.msra.mxu0 0
    %2042 = vmatprep.subr.bf16.mxu0 0
    %2043 = vmatpush1.bf16.msra.mxu0 0
    %2044 = vmatprep.subr.bf16.mxu0 0
    %2045 = vmatpush1.bf16.msra.mxu0 0
    %2046 = vmatprep.subr.bf16.mxu0 0
    %2047 = vmatpush1.bf16.msra.mxu0 0
    %2048 = vmatprep.subr.bf16.mxu0 0
    %2049 = vmatpush1.bf16.msra.mxu0 0
    %2050 = vmatprep.subr.bf16.mxu0 0
    %2051 = vmatpush1.bf16.msra.mxu0 0
    %2052 = vmatprep.subr.bf16.mxu0 0
    %2053 = vmatpush1.bf16.msra.mxu0 0
    %2054 = vmatprep.subr.bf16.mxu0 0
    %2055 = vmatpush1.bf16.msra.mxu0 0
    %2056 = vmatprep.subr.bf16.mxu0 0
    %2057 = vmatpush1.bf16.msra.mxu0 0
    %2058 = vmatprep.mubr.bf16.mxu0 0
    %2059 = vmatmul.mubr.bf16.gmra.mrb[0].mxu0 %v1960
    %v2060 = vpop.f32.mrb[0].mxu0
    %v2061 = vadd.f32 %v2012, %v2060
    %v2062 = vpop.f32.mrb[0].mxu0
    %v2063 = vpop.f32.mrb[0].mxu0
    %v2064 = vadd.f32 %v2012, %v2063
    %v2065 = vpop.f32.mrb[0].mxu0
    %2066 = vdwg.mxu0
    %2069 = vrot.lane.b32.xlu0 %v1929, 120
    %v2070 = vpop.permute.xlu0 %2069
    %2071 = vrot.lane.b32.xlu0 %v1932, 120
    %v2072 = vpop.permute.xlu0 %2071
    %2073 = vrot.lane.b32.xlu0 %v1929, 112
    %v2074 = vpop.permute.xlu0 %2073
    %2075 = vrot.lane.b32.xlu0 %v1932, 112
    %v2076 = vpop.permute.xlu0 %2075
    %2077 = vrot.lane.b32.xlu0 %v1929, 104
    %v2078 = vpop.permute.xlu0 %2077
    %2079 = vrot.lane.b32.xlu0 %v1932, 104
    %v2080 = vpop.permute.xlu0 %2079
    %2083 = vrot.lane.b32.xlu0 %v1997, 120
    %v2084 = vpop.permute.xlu0 %2083
    %2085 = vrot.lane.b32.xlu0 %v2000, 120
    %v2086 = vpop.permute.xlu0 %2085
    %2087 = vrot.lane.b32.xlu0 %v1997, 112
    %v2088 = vpop.permute.xlu0 %2087
    %2089 = vrot.lane.b32.xlu0 %v2000, 112
    %v2090 = vpop.permute.xlu0 %2089
    %2091 = vrot.lane.b32.xlu0 %v1997, 104
    %v2092 = vpop.permute.xlu0 %2091
    %2093 = vrot.lane.b32.xlu0 %v2000, 104
    %v2094 = vpop.permute.xlu0 %2093
    %2097 = vrot.lane.b32.xlu0 %v2061, 120
    %v2098 = vpop.permute.xlu0 %2097
    %2099 = vrot.lane.b32.xlu0 %v2064, 120
    %v2100 = vpop.permute.xlu0 %2099
    %2103 = vrot.lane.b32.xlu0 %v2061, 112
    %v2104 = vpop.permute.xlu0 %2103
    %2105 = vrot.lane.b32.xlu0 %v2064, 112
    %v2106 = vpop.permute.xlu0 %2105
    %2109 = vrot.lane.b32.xlu0 %v2061, 104
    %v2110 = vpop.permute.xlu0 %2109
    %2111 = vrot.lane.b32.xlu0 %v2064, 104
    %v2112 = vpop.permute.xlu0 %2111
    %v2115 = vsel %vm337, %v1929, 0
    %v2117 = vsel %vm337, %v1997, 0
    %2119 = vmatprep.subr.mxu0 0.0
    %2120 = vmatpush1.xpose.msra.mxu0 %v2117
    %2121 = vmatprep.subr.mxu0 0.0
    %2122 = vmatpush1.xpose.msra.mxu0 0.0
    %2123 = vmatprep.subr.mxu0 0.0
    %2124 = vmatpush1.xpose.msra.mxu0 0.0
    %2125 = vmatprep.subr.mxu0 0.0
    %2126 = vmatpush1.xpose.msra.mxu0 0.0
    %2127 = vmatprep.subr.mxu0 0.0
    %2128 = vmatpush1.xpose.msra.mxu0 0.0
    %2129 = vmatprep.subr.mxu0 0.0
    %2130 = vmatpush1.xpose.msra.mxu0 0.0
    %2131 = vmatprep.subr.mxu0 0.0
    %2132 = vmatpush1.xpose.msra.mxu0 0.0
    %2133 = vmatprep.subr.mxu0 0.0
    %2134 = vmatpush1.xpose.msra.mxu0 0.0
    %2135 = vmatprep.subr.mxu0 0.0
    %2136 = vmatpush1.xpose.msra.mxu0 0.0
    %2137 = vmatprep.subr.mxu0 0.0
    %2138 = vmatpush1.xpose.msra.mxu0 0.0
    %2139 = vmatprep.subr.mxu0 0.0
    %2140 = vmatpush1.xpose.msra.mxu0 0.0
    %2141 = vmatprep.subr.mxu0 0.0
    %2142 = vmatpush1.xpose.msra.mxu0 0.0
    %2143 = vmatprep.subr.mxu0 0.0
    %2144 = vmatpush1.xpose.msra.mxu0 0.0
    %2145 = vmatprep.subr.mxu0 0.0
    %2146 = vmatpush1.xpose.msra.mxu0 0.0
    %2147 = vmatprep.subr.mxu0 0.0
    %2148 = vmatpush1.xpose.msra.mxu0 0.0
    %2149 = vmatprep.subr.mxu0 0.0
    %2150 = vmatpush1.xpose.msra.mxu0 0.0
    %2151 = vmatprep.subr.mxu0 0.0
    %2152 = vmatpush1.xpose.msra.mxu0 0.0
    %2153 = vmatprep.subr.mxu0 0.0
    %2154 = vmatpush1.xpose.msra.mxu0 0.0
    %2155 = vmatprep.subr.mxu0 0.0
    %2156 = vmatpush1.xpose.msra.mxu0 0.0
    %2157 = vmatprep.subr.mxu0 0.0
    %2158 = vmatpush1.xpose.msra.mxu0 0.0
    %2159 = vmatprep.subr.mxu0 0.0
    %2160 = vmatpush1.xpose.msra.mxu0 0.0
    %2161 = vmatprep.subr.mxu0 0.0
    %2162 = vmatpush1.xpose.msra.mxu0 0.0
    %2163 = vmatprep.subr.mxu0 0.0
    %2164 = vmatpush1.xpose.msra.mxu0 0.0
    %2165 = vmatprep.subr.mxu0 0.0
    %2166 = vmatpush1.xpose.msra.mxu0 0.0
    %2167 = vmatprep.subr.mxu0 0.0
    %2168 = vmatpush1.xpose.msra.mxu0 0.0
    %2169 = vmatprep.subr.mxu0 0.0
    %2170 = vmatpush1.xpose.msra.mxu0 0.0
    %2171 = vmatprep.subr.mxu0 0.0
    %2172 = vmatpush1.xpose.msra.mxu0 0.0
    %2173 = vmatprep.subr.mxu0 0.0
    %2174 = vmatpush1.xpose.msra.mxu0 0.0
    %2175 = vmatprep.subr.mxu0 0.0
    %2176 = vmatpush1.xpose.msra.mxu0 0.0
    %2177 = vmatprep.subr.mxu0 0.0
    %2178 = vmatpush1.xpose.msra.mxu0 0.0
    %2179 = vmatprep.subr.mxu0 0.0
    %2180 = vmatpush1.xpose.msra.mxu0 0.0
    %2181 = vmatprep.subr.mxu0 0.0
    %2182 = vmatpush1.xpose.msra.mxu0 0.0
    %2183 = vmatprep.mubr.f32.mxu0 0.0
    %2184 = vmatmul.mubr.f32.gmra.mrb[0].mxu0 %v2115
    %v2185 = vpop.f32.mrb[0].mxu0
    %v2186 = vadd.f32 0.0, %v2185
    %v2187 = vpop.f32.mrb[0].mxu0
    %2188 = vdwg.mxu0
    %v2189 = vsel %vm337, %v1932, 0
    %v2191 = vsel %vm337, %v2000, 0
    %2193 = vmatprep.subr.mxu0 0.0
    %2194 = vmatpush1.xpose.msra.mxu0 %v2191
    %2195 = vmatprep.subr.mxu0 0.0
    %2196 = vmatpush1.xpose.msra.mxu0 0.0
    %2197 = vmatprep.subr.mxu0 0.0
    %2198 = vmatpush1.xpose.msra.mxu0 0.0
    %2199 = vmatprep.subr.mxu0 0.0
    %2200 = vmatpush1.xpose.msra.mxu0 0.0
    %2201 = vmatprep.subr.mxu0 0.0
    %2202 = vmatpush1.xpose.msra.mxu0 0.0
    %2203 = vmatprep.subr.mxu0 0.0
    %2204 = vmatpush1.xpose.msra.mxu0 0.0
    %2205 = vmatprep.subr.mxu0 0.0
    %2206 = vmatpush1.xpose.msra.mxu0 0.0
    %2207 = vmatprep.subr.mxu0 0.0
    %2208 = vmatpush1.xpose.msra.mxu0 0.0
    %2209 = vmatprep.subr.mxu0 0.0
    %2210 = vmatpush1.xpose.msra.mxu0 0.0
    %2211 = vmatprep.subr.mxu0 0.0
    %2212 = vmatpush1.xpose.msra.mxu0 0.0
    %2213 = vmatprep.subr.mxu0 0.0
    %2214 = vmatpush1.xpose.msra.mxu0 0.0
    %2215 = vmatprep.subr.mxu0 0.0
    %2216 = vmatpush1.xpose.msra.mxu0 0.0
    %2217 = vmatprep.subr.mxu0 0.0
    %2218 = vmatpush1.xpose.msra.mxu0 0.0
    %2219 = vmatprep.subr.mxu0 0.0
    %2220 = vmatpush1.xpose.msra.mxu0 0.0
    %2221 = vmatprep.subr.mxu0 0.0
    %2222 = vmatpush1.xpose.msra.mxu0 0.0
    %2223 = vmatprep.subr.mxu0 0.0
    %2224 = vmatpush1.xpose.msra.mxu0 0.0
    %2225 = vmatprep.subr.mxu0 0.0
    %2226 = vmatpush1.xpose.msra.mxu0 0.0
    %2227 = vmatprep.subr.mxu0 0.0
    %2228 = vmatpush1.xpose.msra.mxu0 0.0
    %2229 = vmatprep.subr.mxu0 0.0
    %2230 = vmatpush1.xpose.msra.mxu0 0.0
    %2231 = vmatprep.subr.mxu0 0.0
    %2232 = vmatpush1.xpose.msra.mxu0 0.0
    %2233 = vmatprep.subr.mxu0 0.0
    %2234 = vmatpush1.xpose.msra.mxu0 0.0
    %2235 = vmatprep.subr.mxu0 0.0
    %2236 = vmatpush1.xpose.msra.mxu0 0.0
    %2237 = vmatprep.subr.mxu0 0.0
    %2238 = vmatpush1.xpose.msra.mxu0 0.0
    %2239 = vmatprep.subr.mxu0 0.0
    %2240 = vmatpush1.xpose.msra.mxu0 0.0
    %2241 = vmatprep.subr.mxu0 0.0
    %2242 = vmatpush1.xpose.msra.mxu0 0.0
    %2243 = vmatprep.subr.mxu0 0.0
    %2244 = vmatpush1.xpose.msra.mxu0 0.0
    %2245 = vmatprep.subr.mxu0 0.0
    %2246 = vmatpush1.xpose.msra.mxu0 0.0
    %2247 = vmatprep.subr.mxu0 0.0
    %2248 = vmatpush1.xpose.msra.mxu0 0.0
    %2249 = vmatprep.subr.mxu0 0.0
    %2250 = vmatpush1.xpose.msra.mxu0 0.0
    %2251 = vmatprep.subr.mxu0 0.0
    %2252 = vmatpush1.xpose.msra.mxu0 0.0
    %2253 = vmatprep.subr.mxu0 0.0
    %2254 = vmatpush1.xpose.msra.mxu0 0.0
    %2255 = vmatprep.subr.mxu0 0.0
    %2256 = vmatpush1.xpose.msra.mxu0 0.0
    %2257 = vmatprep.mubr.f32.mxu0 0.0
    %2258 = vmatmul.mubr.f32.gmra.mrb[0].mxu0 %v2189
    %v2259 = vpop.f32.mrb[0].mxu0
    %v2260 = vadd.f32 0.0, %v2259
    %v2261 = vpop.f32.mrb[0].mxu0
    %2262 = vdwg.mxu0
    %v2263 = vsel %vm337, %v2070, 0
    %v2265 = vsel %vm337, %v2084, 0
    %2267 = vmatprep.subr.mxu0 0.0
    %2268 = vmatpush1.xpose.msra.mxu0 %v2265
    %2269 = vmatprep.subr.mxu0 0.0
    %2270 = vmatpush1.xpose.msra.mxu0 0.0
    %2271 = vmatprep.subr.mxu0 0.0
    %2272 = vmatpush1.xpose.msra.mxu0 0.0
    %2273 = vmatprep.subr.mxu0 0.0
    %2274 = vmatpush1.xpose.msra.mxu0 0.0
    %2275 = vmatprep.subr.mxu0 0.0
    %2276 = vmatpush1.xpose.msra.mxu0 0.0
    %2277 = vmatprep.subr.mxu0 0.0
    %2278 = vmatpush1.xpose.msra.mxu0 0.0
    %2279 = vmatprep.subr.mxu0 0.0
    %2280 = vmatpush1.xpose.msra.mxu0 0.0
    %2281 = vmatprep.subr.mxu0 0.0
    %2282 = vmatpush1.xpose.msra.mxu0 0.0
    %2283 = vmatprep.subr.mxu0 0.0
    %2284 = vmatpush1.xpose.msra.mxu0 0.0
    %2285 = vmatprep.subr.mxu0 0.0
    %2286 = vmatpush1.xpose.msra.mxu0 0.0
    %2287 = vmatprep.subr.mxu0 0.0
    %2288 = vmatpush1.xpose.msra.mxu0 0.0
    %2289 = vmatprep.subr.mxu0 0.0
    %2290 = vmatpush1.xpose.msra.mxu0 0.0
    %2291 = vmatprep.subr.mxu0 0.0
    %2292 = vmatpush1.xpose.msra.mxu0 0.0
    %2293 = vmatprep.subr.mxu0 0.0
    %2294 = vmatpush1.xpose.msra.mxu0 0.0
    %2295 = vmatprep.subr.mxu0 0.0
    %2296 = vmatpush1.xpose.msra.mxu0 0.0
    %2297 = vmatprep.subr.mxu0 0.0
    %2298 = vmatpush1.xpose.msra.mxu0 0.0
    %2299 = vmatprep.subr.mxu0 0.0
    %2300 = vmatpush1.xpose.msra.mxu0 0.0
    %2301 = vmatprep.subr.mxu0 0.0
    %2302 = vmatpush1.xpose.msra.mxu0 0.0
    %2303 = vmatprep.subr.mxu0 0.0
    %2304 = vmatpush1.xpose.msra.mxu0 0.0
    %2305 = vmatprep.subr.mxu0 0.0
    %2306 = vmatpush1.xpose.msra.mxu0 0.0
    %2307 = vmatprep.subr.mxu0 0.0
    %2308 = vmatpush1.xpose.msra.mxu0 0.0
    %2309 = vmatprep.subr.mxu0 0.0
    %2310 = vmatpush1.xpose.msra.mxu0 0.0
    %2311 = vmatprep.subr.mxu0 0.0
    %2312 = vmatpush1.xpose.msra.mxu0 0.0
    %2313 = vmatprep.subr.mxu0 0.0
    %2314 = vmatpush1.xpose.msra.mxu0 0.0
    %2315 = vmatprep.subr.mxu0 0.0
    %2316 = vmatpush1.xpose.msra.mxu0 0.0
    %2317 = vmatprep.subr.mxu0 0.0
    %2318 = vmatpush1.xpose.msra.mxu0 0.0
    %2319 = vmatprep.subr.mxu0 0.0
    %2320 = vmatpush1.xpose.msra.mxu0 0.0
    %2321 = vmatprep.subr.mxu0 0.0
    %2322 = vmatpush1.xpose.msra.mxu0 0.0
    %2323 = vmatprep.subr.mxu0 0.0
    %2324 = vmatpush1.xpose.msra.mxu0 0.0
    %2325 = vmatprep.subr.mxu0 0.0
    %2326 = vmatpush1.xpose.msra.mxu0 0.0
    %2327 = vmatprep.subr.mxu0 0.0
    %2328 = vmatpush1.xpose.msra.mxu0 0.0
    %2329 = vmatprep.subr.mxu0 0.0
    %2330 = vmatpush1.xpose.msra.mxu0 0.0
    %2331 = vmatprep.mubr.f32.mxu0 0.0
    %2332 = vmatmul.mubr.f32.gmra.mrb[0].mxu0 %v2263
    %v2333 = vpop.f32.mrb[0].mxu0
    %v2334 = vadd.f32 0.0, %v2333
    %v2335 = vpop.f32.mrb[0].mxu0
    %2336 = vdwg.mxu0
    %v2337 = vsel %vm337, %v2072, 0
    %v2339 = vsel %vm337, %v2086, 0
    %2341 = vmatprep.subr.mxu0 0.0
    %2342 = vmatpush1.xpose.msra.mxu0 %v2339
    %2343 = vmatprep.subr.mxu0 0.0
    %2344 = vmatpush1.xpose.msra.mxu0 0.0
    %2345 = vmatprep.subr.mxu0 0.0
    %2346 = vmatpush1.xpose.msra.mxu0 0.0
    %2347 = vmatprep.subr.mxu0 0.0
    %2348 = vmatpush1.xpose.msra.mxu0 0.0
    %2349 = vmatprep.subr.mxu0 0.0
    %2350 = vmatpush1.xpose.msra.mxu0 0.0
    %2351 = vmatprep.subr.mxu0 0.0
    %2352 = vmatpush1.xpose.msra.mxu0 0.0
    %2353 = vmatprep.subr.mxu0 0.0
    %2354 = vmatpush1.xpose.msra.mxu0 0.0
    %2355 = vmatprep.subr.mxu0 0.0
    %2356 = vmatpush1.xpose.msra.mxu0 0.0
    %2357 = vmatprep.subr.mxu0 0.0
    %2358 = vmatpush1.xpose.msra.mxu0 0.0
    %2359 = vmatprep.subr.mxu0 0.0
    %2360 = vmatpush1.xpose.msra.mxu0 0.0
    %2361 = vmatprep.subr.mxu0 0.0
    %2362 = vmatpush1.xpose.msra.mxu0 0.0
    %2363 = vmatprep.subr.mxu0 0.0
    %2364 = vmatpush1.xpose.msra.mxu0 0.0
    %2365 = vmatprep.subr.mxu0 0.0
    %2366 = vmatpush1.xpose.msra.mxu0 0.0
    %2367 = vmatprep.subr.mxu0 0.0
    %2368 = vmatpush1.xpose.msra.mxu0 0.0
    %2369 = vmatprep.subr.mxu0 0.0
    %2370 = vmatpush1.xpose.msra.mxu0 0.0
    %2371 = vmatprep.subr.mxu0 0.0
    %2372 = vmatpush1.xpose.msra.mxu0 0.0
    %2373 = vmatprep.subr.mxu0 0.0
    %2374 = vmatpush1.xpose.msra.mxu0 0.0
    %2375 = vmatprep.subr.mxu0 0.0
    %2376 = vmatpush1.xpose.msra.mxu0 0.0
    %2377 = vmatprep.subr.mxu0 0.0
    %2378 = vmatpush1.xpose.msra.mxu0 0.0
    %2379 = vmatprep.subr.mxu0 0.0
    %2380 = vmatpush1.xpose.msra.mxu0 0.0
    %2381 = vmatprep.subr.mxu0 0.0
    %2382 = vmatpush1.xpose.msra.mxu0 0.0
    %2383 = vmatprep.subr.mxu0 0.0
    %2384 = vmatpush1.xpose.msra.mxu0 0.0
    %2385 = vmatprep.subr.mxu0 0.0
    %2386 = vmatpush1.xpose.msra.mxu0 0.0
    %2387 = vmatprep.subr.mxu0 0.0
    %2388 = vmatpush1.xpose.msra.mxu0 0.0
    %2389 = vmatprep.subr.mxu0 0.0
    %2390 = vmatpush1.xpose.msra.mxu0 0.0
    %2391 = vmatprep.subr.mxu0 0.0
    %2392 = vmatpush1.xpose.msra.mxu0 0.0
    %2393 = vmatprep.subr.mxu0 0.0
    %2394 = vmatpush1.xpose.msra.mxu0 0.0
    %2395 = vmatprep.subr.mxu0 0.0
    %2396 = vmatpush1.xpose.msra.mxu0 0.0
    %2397 = vmatprep.subr.mxu0 0.0
    %2398 = vmatpush1.xpose.msra.mxu0 0.0
    %2399 = vmatprep.subr.mxu0 0.0
    %2400 = vmatpush1.xpose.msra.mxu0 0.0
    %2401 = vmatprep.subr.mxu0 0.0
    %2402 = vmatpush1.xpose.msra.mxu0 0.0
    %2403 = vmatprep.subr.mxu0 0.0
    %2404 = vmatpush1.xpose.msra.mxu0 0.0
    %2405 = vmatprep.mubr.f32.mxu0 0.0
    %2406 = vmatmul.mubr.f32.gmra.mrb[0].mxu0 %v2337
    %v2407 = vpop.f32.mrb[0].mxu0
    %v2408 = vadd.f32 0.0, %v2407
    %v2409 = vpop.f32.mrb[0].mxu0
    %2410 = vdwg.mxu0
    %v2411 = vsel %vm337, %v2074, 0
    %v2413 = vsel %vm337, %v2088, 0
    %2415 = vmatprep.subr.mxu0 0.0
    %2416 = vmatpush1.xpose.msra.mxu0 %v2413
    %2417 = vmatprep.subr.mxu0 0.0
    %2418 = vmatpush1.xpose.msra.mxu0 0.0
    %2419 = vmatprep.subr.mxu0 0.0
    %2420 = vmatpush1.xpose.msra.mxu0 0.0
    %2421 = vmatprep.subr.mxu0 0.0
    %2422 = vmatpush1.xpose.msra.mxu0 0.0
    %2423 = vmatprep.subr.mxu0 0.0
    %2424 = vmatpush1.xpose.msra.mxu0 0.0
    %2425 = vmatprep.subr.mxu0 0.0
    %2426 = vmatpush1.xpose.msra.mxu0 0.0
    %2427 = vmatprep.subr.mxu0 0.0
    %2428 = vmatpush1.xpose.msra.mxu0 0.0
    %2429 = vmatprep.subr.mxu0 0.0
    %2430 = vmatpush1.xpose.msra.mxu0 0.0
    %2431 = vmatprep.subr.mxu0 0.0
    %2432 = vmatpush1.xpose.msra.mxu0 0.0
    %2433 = vmatprep.subr.mxu0 0.0
    %2434 = vmatpush1.xpose.msra.mxu0 0.0
    %2435 = vmatprep.subr.mxu0 0.0
    %2436 = vmatpush1.xpose.msra.mxu0 0.0
    %2437 = vmatprep.subr.mxu0 0.0
    %2438 = vmatpush1.xpose.msra.mxu0 0.0
    %2439 = vmatprep.subr.mxu0 0.0
    %2440 = vmatpush1.xpose.msra.mxu0 0.0
    %2441 = vmatprep.subr.mxu0 0.0
    %2442 = vmatpush1.xpose.msra.mxu0 0.0
    %2443 = vmatprep.subr.mxu0 0.0
    %2444 = vmatpush1.xpose.msra.mxu0 0.0
    %2445 = vmatprep.subr.mxu0 0.0
    %2446 = vmatpush1.xpose.msra.mxu0 0.0
    %2447 = vmatprep.subr.mxu0 0.0
    %2448 = vmatpush1.xpose.msra.mxu0 0.0
    %2449 = vmatprep.subr.mxu0 0.0
    %2450 = vmatpush1.xpose.msra.mxu0 0.0
    %2451 = vmatprep.subr.mxu0 0.0
    %2452 = vmatpush1.xpose.msra.mxu0 0.0
    %2453 = vmatprep.subr.mxu0 0.0
    %2454 = vmatpush1.xpose.msra.mxu0 0.0
    %2455 = vmatprep.subr.mxu0 0.0
    %2456 = vmatpush1.xpose.msra.mxu0 0.0
    %2457 = vmatprep.subr.mxu0 0.0
    %2458 = vmatpush1.xpose.msra.mxu0 0.0
    %2459 = vmatprep.subr.mxu0 0.0
    %2460 = vmatpush1.xpose.msra.mxu0 0.0
    %2461 = vmatprep.subr.mxu0 0.0
    %2462 = vmatpush1.xpose.msra.mxu0 0.0
    %2463 = vmatprep.subr.mxu0 0.0
    %2464 = vmatpush1.xpose.msra.mxu0 0.0
    %2465 = vmatprep.subr.mxu0 0.0
    %2466 = vmatpush1.xpose.msra.mxu0 0.0
    %2467 = vmatprep.subr.mxu0 0.0
    %2468 = vmatpush1.xpose.msra.mxu0 0.0
    %2469 = vmatprep.subr.mxu0 0.0
    %2470 = vmatpush1.xpose.msra.mxu0 0.0
    %2471 = vmatprep.subr.mxu0 0.0
    %2472 = vmatpush1.xpose.msra.mxu0 0.0
    %2473 = vmatprep.subr.mxu0 0.0
    %2474 = vmatpush1.xpose.msra.mxu0 0.0
    %2475 = vmatprep.subr.mxu0 0.0
    %2476 = vmatpush1.xpose.msra.mxu0 0.0
    %2477 = vmatprep.subr.mxu0 0.0
    %2478 = vmatpush1.xpose.msra.mxu0 0.0
    %2479 = vmatprep.mubr.f32.mxu0 0.0
    %2480 = vmatmul.mubr.f32.gmra.mrb[0].mxu0 %v2411
    %v2481 = vpop.f32.mrb[0].mxu0
    %v2482 = vadd.f32 0.0, %v2481
    %v2483 = vpop.f32.mrb[0].mxu0
    %2484 = vdwg.mxu0
    %v2485 = vsel %vm337, %v2076, 0
    %v2487 = vsel %vm337, %v2090, 0
    %2489 = vmatprep.subr.mxu0 0.0
    %2490 = vmatpush1.xpose.msra.mxu0 %v2487
    %2491 = vmatprep.subr.mxu0 0.0
    %2492 = vmatpush1.xpose.msra.mxu0 0.0
    %2493 = vmatprep.subr.mxu0 0.0
    %2494 = vmatpush1.xpose.msra.mxu0 0.0
    %2495 = vmatprep.subr.mxu0 0.0
    %2496 = vmatpush1.xpose.msra.mxu0 0.0
    %2497 = vmatprep.subr.mxu0 0.0
    %2498 = vmatpush1.xpose.msra.mxu0 0.0
    %2499 = vmatprep.subr.mxu0 0.0
    %2500 = vmatpush1.xpose.msra.mxu0 0.0
    %2501 = vmatprep.subr.mxu0 0.0
    %2502 = vmatpush1.xpose.msra.mxu0 0.0
    %2503 = vmatprep.subr.mxu0 0.0
    %2504 = vmatpush1.xpose.msra.mxu0 0.0
    %2505 = vmatprep.subr.mxu0 0.0
    %2506 = vmatpush1.xpose.msra.mxu0 0.0
    %2507 = vmatprep.subr.mxu0 0.0
    %2508 = vmatpush1.xpose.msra.mxu0 0.0
    %2509 = vmatprep.subr.mxu0 0.0
    %2510 = vmatpush1.xpose.msra.mxu0 0.0
    %2511 = vmatprep.subr.mxu0 0.0
    %2512 = vmatpush1.xpose.msra.mxu0 0.0
    %2513 = vmatprep.subr.mxu0 0.0
    %2514 = vmatpush1.xpose.msra.mxu0 0.0
    %2515 = vmatprep.subr.mxu0 0.0
    %2516 = vmatpush1.xpose.msra.mxu0 0.0
    %2517 = vmatprep.subr.mxu0 0.0
    %2518 = vmatpush1.xpose.msra.mxu0 0.0
    %2519 = vmatprep.subr.mxu0 0.0
    %2520 = vmatpush1.xpose.msra.mxu0 0.0
    %2521 = vmatprep.subr.mxu0 0.0
    %2522 = vmatpush1.xpose.msra.mxu0 0.0
    %2523 = vmatprep.subr.mxu0 0.0
    %2524 = vmatpush1.xpose.msra.mxu0 0.0
    %2525 = vmatprep.subr.mxu0 0.0
    %2526 = vmatpush1.xpose.msra.mxu0 0.0
    %2527 = vmatprep.subr.mxu0 0.0
    %2528 = vmatpush1.xpose.msra.mxu0 0.0
    %2529 = vmatprep.subr.mxu0 0.0
    %2530 = vmatpush1.xpose.msra.mxu0 0.0
    %2531 = vmatprep.subr.mxu0 0.0
    %2532 = vmatpush1.xpose.msra.mxu0 0.0
    %2533 = vmatprep.subr.mxu0 0.0
    %2534 = vmatpush1.xpose.msra.mxu0 0.0
    %2535 = vmatprep.subr.mxu0 0.0
    %2536 = vmatpush1.xpose.msra.mxu0 0.0
    %2537 = vmatprep.subr.mxu0 0.0
    %2538 = vmatpush1.xpose.msra.mxu0 0.0
    %2539 = vmatprep.subr.mxu0 0.0
    %2540 = vmatpush1.xpose.msra.mxu0 0.0
    %2541 = vmatprep.subr.mxu0 0.0
    %2542 = vmatpush1.xpose.msra.mxu0 0.0
    %2543 = vmatprep.subr.mxu0 0.0
    %2544 = vmatpush1.xpose.msra.mxu0 0.0
    %2545 = vmatprep.subr.mxu0 0.0
    %2546 = vmatpush1.xpose.msra.mxu0 0.0
    %2547 = vmatprep.subr.mxu0 0.0
    %2548 = vmatpush1.xpose.msra.mxu0 0.0
    %2549 = vmatprep.subr.mxu0 0.0
    %2550 = vmatpush1.xpose.msra.mxu0 0.0
    %2551 = vmatprep.subr.mxu0 0.0
    %2552 = vmatpush1.xpose.msra.mxu0 0.0
    %2553 = vmatprep.mubr.f32.mxu0 0.0
    %2554 = vmatmul.mubr.f32.gmra.mrb[0].mxu0 %v2485
    %v2555 = vpop.f32.mrb[0].mxu0
    %v2556 = vadd.f32 0.0, %v2555
    %v2557 = vpop.f32.mrb[0].mxu0
    %2558 = vdwg.mxu0
    %v2559 = vsel %vm337, %v2078, 0
    %v2561 = vsel %vm337, %v2092, 0
    %2563 = vmatprep.subr.mxu0 0.0
    %2564 = vmatpush1.xpose.msra.mxu0 %v2561
    %2565 = vmatprep.subr.mxu0 0.0
    %2566 = vmatpush1.xpose.msra.mxu0 0.0
    %2567 = vmatprep.subr.mxu0 0.0
    %2568 = vmatpush1.xpose.msra.mxu0 0.0
    %2569 = vmatprep.subr.mxu0 0.0
    %2570 = vmatpush1.xpose.msra.mxu0 0.0
    %2571 = vmatprep.subr.mxu0 0.0
    %2572 = vmatpush1.xpose.msra.mxu0 0.0
    %2573 = vmatprep.subr.mxu0 0.0
    %2574 = vmatpush1.xpose.msra.mxu0 0.0
    %2575 = vmatprep.subr.mxu0 0.0
    %2576 = vmatpush1.xpose.msra.mxu0 0.0
    %2577 = vmatprep.subr.mxu0 0.0
    %2578 = vmatpush1.xpose.msra.mxu0 0.0
    %2579 = vmatprep.subr.mxu0 0.0
    %2580 = vmatpush1.xpose.msra.mxu0 0.0
    %2581 = vmatprep.subr.mxu0 0.0
    %2582 = vmatpush1.xpose.msra.mxu0 0.0
    %2583 = vmatprep.subr.mxu0 0.0
    %2584 = vmatpush1.xpose.msra.mxu0 0.0
    %2585 = vmatprep.subr.mxu0 0.0
    %2586 = vmatpush1.xpose.msra.mxu0 0.0
    %2587 = vmatprep.subr.mxu0 0.0
    %2588 = vmatpush1.xpose.msra.mxu0 0.0
    %2589 = vmatprep.subr.mxu0 0.0
    %2590 = vmatpush1.xpose.msra.mxu0 0.0
    %2591 = vmatprep.subr.mxu0 0.0
    %2592 = vmatpush1.xpose.msra.mxu0 0.0
    %2593 = vmatprep.subr.mxu0 0.0
    %2594 = vmatpush1.xpose.msra.mxu0 0.0
    %2595 = vmatprep.subr.mxu0 0.0
    %2596 = vmatpush1.xpose.msra.mxu0 0.0
    %2597 = vmatprep.subr.mxu0 0.0
    %2598 = vmatpush1.xpose.msra.mxu0 0.0
    %2599 = vmatprep.subr.mxu0 0.0
    %2600 = vmatpush1.xpose.msra.mxu0 0.0
    %2601 = vmatprep.subr.mxu0 0.0
    %2602 = vmatpush1.xpose.msra.mxu0 0.0
    %2603 = vmatprep.subr.mxu0 0.0
    %2604 = vmatpush1.xpose.msra.mxu0 0.0
    %2605 = vmatprep.subr.mxu0 0.0
    %2606 = vmatpush1.xpose.msra.mxu0 0.0
    %2607 = vmatprep.subr.mxu0 0.0
    %2608 = vmatpush1.xpose.msra.mxu0 0.0
    %2609 = vmatprep.subr.mxu0 0.0
    %2610 = vmatpush1.xpose.msra.mxu0 0.0
    %2611 = vmatprep.subr.mxu0 0.0
    %2612 = vmatpush1.xpose.msra.mxu0 0.0
    %2613 = vmatprep.subr.mxu0 0.0
    %2614 = vmatpush1.xpose.msra.mxu0 0.0
    %2615 = vmatprep.subr.mxu0 0.0
    %2616 = vmatpush1.xpose.msra.mxu0 0.0
    %2617 = vmatprep.subr.mxu0 0.0
    %2618 = vmatpush1.xpose.msra.mxu0 0.0
    %2619 = vmatprep.subr.mxu0 0.0
    %2620 = vmatpush1.xpose.msra.mxu0 0.0
    %2621 = vmatprep.subr.mxu0 0.0
    %2622 = vmatpush1.xpose.msra.mxu0 0.0
    %2623 = vmatprep.subr.mxu0 0.0
    %2624 = vmatpush1.xpose.msra.mxu0 0.0
    %2625 = vmatprep.subr.mxu0 0.0
    %2626 = vmatpush1.xpose.msra.mxu0 0.0
    %2627 = vmatprep.mubr.f32.mxu0 0.0
    %2628 = vmatmul.mubr.f32.gmra.mrb[0].mxu0 %v2559
    %v2629 = vpop.f32.mrb[0].mxu0
    %v2630 = vadd.f32 0.0, %v2629
    %v2631 = vpop.f32.mrb[0].mxu0
    %2632 = vdwg.mxu0
    %v2633 = vsel %vm337, %v2080, 0
    %v2635 = vsel %vm337, %v2094, 0
    %2637 = vmatprep.subr.mxu0 0.0
    %2638 = vmatpush1.xpose.msra.mxu0 %v2635
    %2639 = vmatprep.subr.mxu0 0.0
    %2640 = vmatpush1.xpose.msra.mxu0 0.0
    %2641 = vmatprep.subr.mxu0 0.0
    %2642 = vmatpush1.xpose.msra.mxu0 0.0
    %2643 = vmatprep.subr.mxu0 0.0
    %2644 = vmatpush1.xpose.msra.mxu0 0.0
    %2645 = vmatprep.subr.mxu0 0.0
    %2646 = vmatpush1.xpose.msra.mxu0 0.0
    %2647 = vmatprep.subr.mxu0 0.0
    %2648 = vmatpush1.xpose.msra.mxu0 0.0
    %2649 = vmatprep.subr.mxu0 0.0
    %2650 = vmatpush1.xpose.msra.mxu0 0.0
    %2651 = vmatprep.subr.mxu0 0.0
    %2652 = vmatpush1.xpose.msra.mxu0 0.0
    %2653 = vmatprep.subr.mxu0 0.0
    %2654 = vmatpush1.xpose.msra.mxu0 0.0
    %2655 = vmatprep.subr.mxu0 0.0
    %2656 = vmatpush1.xpose.msra.mxu0 0.0
    %2657 = vmatprep.subr.mxu0 0.0
    %2658 = vmatpush1.xpose.msra.mxu0 0.0
    %2659 = vmatprep.subr.mxu0 0.0
    %2660 = vmatpush1.xpose.msra.mxu0 0.0
    %2661 = vmatprep.subr.mxu0 0.0
    %2662 = vmatpush1.xpose.msra.mxu0 0.0
    %2663 = vmatprep.subr.mxu0 0.0
    %2664 = vmatpush1.xpose.msra.mxu0 0.0
    %2665 = vmatprep.subr.mxu0 0.0
    %2666 = vmatpush1.xpose.msra.mxu0 0.0
    %2667 = vmatprep.subr.mxu0 0.0
    %2668 = vmatpush1.xpose.msra.mxu0 0.0
    %2669 = vmatprep.subr.mxu0 0.0
    %2670 = vmatpush1.xpose.msra.mxu0 0.0
    %2671 = vmatprep.subr.mxu0 0.0
    %2672 = vmatpush1.xpose.msra.mxu0 0.0
    %2673 = vmatprep.subr.mxu0 0.0
    %2674 = vmatpush1.xpose.msra.mxu0 0.0
    %2675 = vmatprep.subr.mxu0 0.0
    %2676 = vmatpush1.xpose.msra.mxu0 0.0
    %2677 = vmatprep.subr.mxu0 0.0
    %2678 = vmatpush1.xpose.msra.mxu0 0.0
    %2679 = vmatprep.subr.mxu0 0.0
    %2680 = vmatpush1.xpose.msra.mxu0 0.0
    %2681 = vmatprep.subr.mxu0 0.0
    %2682 = vmatpush1.xpose.msra.mxu0 0.0
    %2683 = vmatprep.subr.mxu0 0.0
    %2684 = vmatpush1.xpose.msra.mxu0 0.0
    %2685 = vmatprep.subr.mxu0 0.0
    %2686 = vmatpush1.xpose.msra.mxu0 0.0
    %2687 = vmatprep.subr.mxu0 0.0
    %2688 = vmatpush1.xpose.msra.mxu0 0.0
    %2689 = vmatprep.subr.mxu0 0.0
    %2690 = vmatpush1.xpose.msra.mxu0 0.0
    %2691 = vmatprep.subr.mxu0 0.0
    %2692 = vmatpush1.xpose.msra.mxu0 0.0
    %2693 = vmatprep.subr.mxu0 0.0
    %2694 = vmatpush1.xpose.msra.mxu0 0.0
    %2695 = vmatprep.subr.mxu0 0.0
    %2696 = vmatpush1.xpose.msra.mxu0 0.0
    %2697 = vmatprep.subr.mxu0 0.0
    %2698 = vmatpush1.xpose.msra.mxu0 0.0
    %2699 = vmatprep.subr.mxu0 0.0
    %2700 = vmatpush1.xpose.msra.mxu0 0.0
    %2701 = vmatprep.mubr.f32.mxu0 0.0
    %2702 = vmatmul.mubr.f32.gmra.mrb[0].mxu0 %v2633
    %v2703 = vpop.f32.mrb[0].mxu0
    %v2704 = vadd.f32 0.0, %v2703
    %v2705 = vpop.f32.mrb[0].mxu0
    %2706 = vdwg.mxu0
    %v2707 = vmul.f32 %v2186, 0.35355338
    %v2708 = vmul.f32 %v2260, 0.35355338
    %v2709 = vmul.f32 %v2334, 0.35355338
    %v2710 = vmul.f32 %v2408, 0.35355338
    %v2711 = vmul.f32 %v2482, 0.35355338
    %v2712 = vmul.f32 %v2556, 0.35355338
    %v2713 = vmul.f32 %v2630, 0.35355338
    %v2714 = vmul.f32 %v2704, 0.35355338
    %v2715 = vsel %vm337, %v2707, -inf
    %2716 = vmax.xlane.f32.xlu0 %v2715
    %v2717 = vpop.xlane.xlu0 %2716
    %v2718 = vsel %vm337, %v2708, -inf
    %2719 = vmax.xlane.f32.xlu0 %v2718
    %v2720 = vpop.xlane.xlu0 %2719
    %v2721 = vsel %vm337, %v2709, -inf
    %2722 = vmax.xlane.f32.xlu0 %v2721
    %v2723 = vpop.xlane.xlu0 %2722
    %v2724 = vsel %vm337, %v2710, -inf
    %2725 = vmax.xlane.f32.xlu0 %v2724
    %v2726 = vpop.xlane.xlu0 %2725
    %v2727 = vsel %vm337, %v2711, -inf
    %2728 = vmax.xlane.f32.xlu0 %v2727
    %v2729 = vpop.xlane.xlu0 %2728
    %v2730 = vsel %vm337, %v2712, -inf
    %2731 = vmax.xlane.f32.xlu0 %v2730
    %v2732 = vpop.xlane.xlu0 %2731
    %v2733 = vsel %vm337, %v2713, -inf
    %2734 = vmax.xlane.f32.xlu0 %v2733
    %v2735 = vpop.xlane.xlu0 %2734
    %v2736 = vsel %vm337, %v2714, -inf
    %2737 = vmax.xlane.f32.xlu0 %v2736
    %v2738 = vpop.xlane.xlu0 %2737
    %v2739 = vsub.f32 %v2707, %v2717
    %v2740 = vsub.f32 %v2708, %v2720
    %v2741 = vsub.f32 %v2709, %v2723
    %v2742 = vsub.f32 %v2710, %v2726
    %v2743 = vsub.f32 %v2711, %v2729
    %v2744 = vsub.f32 %v2712, %v2732
    %v2745 = vsub.f32 %v2713, %v2735
    %v2746 = vsub.f32 %v2714, %v2738
    %v2747 = vmul.f32 %v2739, 1.442695
    %v2748 = vpow.pop %v2747
    %v2749 = vmul.f32 %v2740, 1.442695
    %v2750 = vpow.pop %v2749
    %v2751 = vmul.f32 %v2741, 1.442695
    %v2752 = vpow.pop %v2751
    %v2753 = vmul.f32 %v2742, 1.442695
    %v2754 = vpow.pop %v2753
    %v2755 = vmul.f32 %v2743, 1.442695
    %v2756 = vpow.pop %v2755
    %v2757 = vmul.f32 %v2744, 1.442695
    %v2758 = vpow.pop %v2757
    %v2759 = vmul.f32 %v2745, 1.442695
    %v2760 = vpow.pop %v2759
    %v2761 = vmul.f32 %v2746, 1.442695
    %v2762 = vpow.pop %v2761
    %v2763 = vsel %vm337, %v2748, 0.0
    %2764 = vadd.xlane.f32.xlu0 %v2763
    %v2765 = vpop.xlane.xlu0 %2764
    %v2766 = vsel %vm337, %v2750, 0.0
    %2767 = vadd.xlane.f32.xlu0 %v2766
    %v2768 = vpop.xlane.xlu0 %2767
    %v2769 = vsel %vm337, %v2752, 0.0
    %2770 = vadd.xlane.f32.xlu0 %v2769
    %v2771 = vpop.xlane.xlu0 %2770
    %v2772 = vsel %vm337, %v2754, 0.0
    %2773 = vadd.xlane.f32.xlu0 %v2772
    %v2774 = vpop.xlane.xlu0 %2773
    %v2775 = vsel %vm337, %v2756, 0.0
    %2776 = vadd.xlane.f32.xlu0 %v2775
    %v2777 = vpop.xlane.xlu0 %2776
    %v2778 = vsel %vm337, %v2758, 0.0
    %2779 = vadd.xlane.f32.xlu0 %v2778
    %v2780 = vpop.xlane.xlu0 %2779
    %v2781 = vsel %vm337, %v2760, 0.0
    %2782 = vadd.xlane.f32.xlu0 %v2781
    %v2783 = vpop.xlane.xlu0 %2782
    %v2784 = vsel %vm337, %v2762, 0.0
    %2785 = vadd.xlane.f32.xlu0 %v2784
    %v2786 = vpop.xlane.xlu0 %2785
    %v2787 = vrcp.pop %v2765
    %v2788 = vmul.f32 %v2748, %v2787
    %v2789 = vrcp.pop %v2768
    %v2790 = vmul.f32 %v2750, %v2789
    %v2791 = vrcp.pop %v2771
    %v2792 = vmul.f32 %v2752, %v2791
    %v2793 = vrcp.pop %v2774
    %v2794 = vmul.f32 %v2754, %v2793
    %v2795 = vrcp.pop %v2777
    %v2796 = vmul.f32 %v2756, %v2795
    %v2797 = vrcp.pop %v2780
    %v2798 = vmul.f32 %v2758, %v2797
    %v2799 = vrcp.pop %v2783
    %v2800 = vmul.f32 %v2760, %v2799
    %v2801 = vrcp.pop %v2786
    %v2802 = vmul.f32 %v2762, %v2801
    %v2803 = vadd.f32 %v2788, %v2792
    %v2804 = vadd.f32 %v2790, %v2794
    %v2805 = vadd.f32 %v2803, %v2796
    %v2806 = vadd.f32 %v2804, %v2798
    %v2807 = vadd.f32 %v2805, %v2800
    %v2808 = vadd.f32 %v2806, %v2802
    %v2809 = vmul.f32 %v2807, 0.25
    %v2810 = vmul.f32 %v2808, 0.25
    %v2812 = vsel %vm337, %v2788, 0
    %2814 = vmatprep.subr.mxu0 0.0
    %2815 = vmatpush1.msra.mxu0 %v2061
    %2816 = vmatprep.subr.mxu0 0.0
    %2817 = vmatpush1.msra.mxu0 0.0
    %2818 = vmatprep.subr.mxu0 0.0
    %2819 = vmatpush1.msra.mxu0 0.0
    %2820 = vmatprep.subr.mxu0 0.0
    %2821 = vmatpush1.msra.mxu0 0.0
    %2822 = vmatprep.subr.mxu0 0.0
    %2823 = vmatpush1.msra.mxu0 0.0
    %2824 = vmatprep.subr.mxu0 0.0
    %2825 = vmatpush1.msra.mxu0 0.0
    %2826 = vmatprep.subr.mxu0 0.0
    %2827 = vmatpush1.msra.mxu0 0.0
    %2828 = vmatprep.subr.mxu0 0.0
    %2829 = vmatpush1.msra.mxu0 0.0
    %2830 = vmatprep.subr.mxu0 0.0
    %2831 = vmatpush1.msra.mxu0 0.0
    %2832 = vmatprep.subr.mxu0 0.0
    %2833 = vmatpush1.msra.mxu0 0.0
    %2834 = vmatprep.subr.mxu0 0.0
    %2835 = vmatpush1.msra.mxu0 0.0
    %2836 = vmatprep.subr.mxu0 0.0
    %2837 = vmatpush1.msra.mxu0 0.0
    %2838 = vmatprep.subr.mxu0 0.0
    %2839 = vmatpush1.msra.mxu0 0.0
    %2840 = vmatprep.subr.mxu0 0.0
    %2841 = vmatpush1.msra.mxu0 0.0
    %2842 = vmatprep.subr.mxu0 0.0
    %2843 = vmatpush1.msra.mxu0 0.0
    %2844 = vmatprep.subr.mxu0 0.0
    %2845 = vmatpush1.msra.mxu0 0.0
    %2846 = vmatprep.subr.mxu0 0.0
    %2847 = vmatpush1.msra.mxu0 0.0
    %2848 = vmatprep.subr.mxu0 0.0
    %2849 = vmatpush1.msra.mxu0 0.0
    %2850 = vmatprep.subr.mxu0 0.0
    %2851 = vmatpush1.msra.mxu0 0.0
    %2852 = vmatprep.subr.mxu0 0.0
    %2853 = vmatpush1.msra.mxu0 0.0
    %2854 = vmatprep.subr.mxu0 0.0
    %2855 = vmatpush1.msra.mxu0 0.0
    %2856 = vmatprep.subr.mxu0 0.0
    %2857 = vmatpush1.msra.mxu0 0.0
    %2858 = vmatprep.subr.mxu0 0.0
    %2859 = vmatpush1.msra.mxu0 0.0
    %2860 = vmatprep.subr.mxu0 0.0
    %2861 = vmatpush1.msra.mxu0 0.0
    %2862 = vmatprep.subr.mxu0 0.0
    %2863 = vmatpush1.msra.mxu0 0.0
    %2864 = vmatprep.subr.mxu0 0.0
    %2865 = vmatpush1.msra.mxu0 0.0
    %2866 = vmatprep.subr.mxu0 0.0
    %2867 = vmatpush1.msra.mxu0 0.0
    %2868 = vmatprep.subr.mxu0 0.0
    %2869 = vmatpush1.msra.mxu0 0.0
    %2870 = vmatprep.subr.mxu0 0.0
    %2871 = vmatpush1.msra.mxu0 0.0
    %2872 = vmatprep.subr.mxu0 0.0
    %2873 = vmatpush1.msra.mxu0 0.0
    %2874 = vmatprep.subr.mxu0 0.0
    %2875 = vmatpush1.msra.mxu0 0.0
    %2876 = vmatprep.subr.mxu0 0.0
    %2877 = vmatpush1.msra.mxu0 0.0
    %2878 = vmatprep.mubr.f32.mxu0 0.0
    %2879 = vmatmul.mubr.f32.gmra.mrb[0].mxu0 %v2812
    %v2880 = vpop.f32.mrb[0].mxu0
    %v2881 = vadd.f32 0.0, %v2880
    %v2882 = vpop.f32.mrb[0].mxu0
    %2883 = vdwg.mxu0
    %v2885 = vsel %vm337, %v2790, 0
    %2887 = vmatprep.subr.mxu0 0.0
    %2888 = vmatpush1.msra.mxu0 %v2064
    %2889 = vmatprep.subr.mxu0 0.0
    %2890 = vmatpush1.msra.mxu0 0.0
    %2891 = vmatprep.subr.mxu0 0.0
    %2892 = vmatpush1.msra.mxu0 0.0
    %2893 = vmatprep.subr.mxu0 0.0
    %2894 = vmatpush1.msra.mxu0 0.0
    %2895 = vmatprep.subr.mxu0 0.0
    %2896 = vmatpush1.msra.mxu0 0.0
    %2897 = vmatprep.subr.mxu0 0.0
    %2898 = vmatpush1.msra.mxu0 0.0
    %2899 = vmatprep.subr.mxu0 0.0
    %2900 = vmatpush1.msra.mxu0 0.0
    %2901 = vmatprep.subr.mxu0 0.0
    %2902 = vmatpush1.msra.mxu0 0.0
    %2903 = vmatprep.subr.mxu0 0.0
    %2904 = vmatpush1.msra.mxu0 0.0
    %2905 = vmatprep.subr.mxu0 0.0
    %2906 = vmatpush1.msra.mxu0 0.0
    %2907 = vmatprep.subr.mxu0 0.0
    %2908 = vmatpush1.msra.mxu0 0.0
    %2909 = vmatprep.subr.mxu0 0.0
    %2910 = vmatpush1.msra.mxu0 0.0
    %2911 = vmatprep.subr.mxu0 0.0
    %2912 = vmatpush1.msra.mxu0 0.0
    %2913 = vmatprep.subr.mxu0 0.0
    %2914 = vmatpush1.msra.mxu0 0.0
    %2915 = vmatprep.subr.mxu0 0.0
    %2916 = vmatpush1.msra.mxu0 0.0
    %2917 = vmatprep.subr.mxu0 0.0
    %2918 = vmatpush1.msra.mxu0 0.0
    %2919 = vmatprep.subr.mxu0 0.0
    %2920 = vmatpush1.msra.mxu0 0.0
    %2921 = vmatprep.subr.mxu0 0.0
    %2922 = vmatpush1.msra.mxu0 0.0
    %2923 = vmatprep.subr.mxu0 0.0
    %2924 = vmatpush1.msra.mxu0 0.0
    %2925 = vmatprep.subr.mxu0 0.0
    %2926 = vmatpush1.msra.mxu0 0.0
    %2927 = vmatprep.subr.mxu0 0.0
    %2928 = vmatpush1.msra.mxu0 0.0
    %2929 = vmatprep.subr.mxu0 0.0
    %2930 = vmatpush1.msra.mxu0 0.0
    %2931 = vmatprep.subr.mxu0 0.0
    %2932 = vmatpush1.msra.mxu0 0.0
    %2933 = vmatprep.subr.mxu0 0.0
    %2934 = vmatpush1.msra.mxu0 0.0
    %2935 = vmatprep.subr.mxu0 0.0
    %2936 = vmatpush1.msra.mxu0 0.0
    %2937 = vmatprep.subr.mxu0 0.0
    %2938 = vmatpush1.msra.mxu0 0.0
    %2939 = vmatprep.subr.mxu0 0.0
    %2940 = vmatpush1.msra.mxu0 0.0
    %2941 = vmatprep.subr.mxu0 0.0
    %2942 = vmatpush1.msra.mxu0 0.0
    %2943 = vmatprep.subr.mxu0 0.0
    %2944 = vmatpush1.msra.mxu0 0.0
    %2945 = vmatprep.subr.mxu0 0.0
    %2946 = vmatpush1.msra.mxu0 0.0
    %2947 = vmatprep.subr.mxu0 0.0
    %2948 = vmatpush1.msra.mxu0 0.0
    %2949 = vmatprep.subr.mxu0 0.0
    %2950 = vmatpush1.msra.mxu0 0.0
    %2951 = vmatprep.mubr.f32.mxu0 0.0
    %2952 = vmatmul.mubr.f32.gmra.mrb[0].mxu0 %v2885
    %v2953 = vpop.f32.mrb[0].mxu0
    %v2954 = vadd.f32 0.0, %v2953
    %v2955 = vpop.f32.mrb[0].mxu0
    %2956 = vdwg.mxu0
    %v2958 = vsel %vm337, %v2792, 0
    %2960 = vmatprep.subr.mxu0 0.0
    %2961 = vmatpush1.msra.mxu0 %v2098
    %2962 = vmatprep.subr.mxu0 0.0
    %2963 = vmatpush1.msra.mxu0 0.0
    %2964 = vmatprep.subr.mxu0 0.0
    %2965 = vmatpush1.msra.mxu0 0.0
    %2966 = vmatprep.subr.mxu0 0.0
    %2967 = vmatpush1.msra.mxu0 0.0
    %2968 = vmatprep.subr.mxu0 0.0
    %2969 = vmatpush1.msra.mxu0 0.0
    %2970 = vmatprep.subr.mxu0 0.0
    %2971 = vmatpush1.msra.mxu0 0.0
    %2972 = vmatprep.subr.mxu0 0.0
    %2973 = vmatpush1.msra.mxu0 0.0
    %2974 = vmatprep.subr.mxu0 0.0
    %2975 = vmatpush1.msra.mxu0 0.0
    %2976 = vmatprep.subr.mxu0 0.0
    %2977 = vmatpush1.msra.mxu0 0.0
    %2978 = vmatprep.subr.mxu0 0.0
    %2979 = vmatpush1.msra.mxu0 0.0
    %2980 = vmatprep.subr.mxu0 0.0
    %2981 = vmatpush1.msra.mxu0 0.0
    %2982 = vmatprep.subr.mxu0 0.0
    %2983 = vmatpush1.msra.mxu0 0.0
    %2984 = vmatprep.subr.mxu0 0.0
    %2985 = vmatpush1.msra.mxu0 0.0
    %2986 = vmatprep.subr.mxu0 0.0
    %2987 = vmatpush1.msra.mxu0 0.0
    %2988 = vmatprep.subr.mxu0 0.0
    %2989 = vmatpush1.msra.mxu0 0.0
    %2990 = vmatprep.subr.mxu0 0.0
    %2991 = vmatpush1.msra.mxu0 0.0
    %2992 = vmatprep.subr.mxu0 0.0
    %2993 = vmatpush1.msra.mxu0 0.0
    %2994 = vmatprep.subr.mxu0 0.0
    %2995 = vmatpush1.msra.mxu0 0.0
    %2996 = vmatprep.subr.mxu0 0.0
    %2997 = vmatpush1.msra.mxu0 0.0
    %2998 = vmatprep.subr.mxu0 0.0
    %2999 = vmatpush1.msra.mxu0 0.0
    %3000 = vmatprep.subr.mxu0 0.0
    %3001 = vmatpush1.msra.mxu0 0.0
    %3002 = vmatprep.subr.mxu0 0.0
    %3003 = vmatpush1.msra.mxu0 0.0
    %3004 = vmatprep.subr.mxu0 0.0
    %3005 = vmatpush1.msra.mxu0 0.0
    %3006 = vmatprep.subr.mxu0 0.0
    %3007 = vmatpush1.msra.mxu0 0.0
    %3008 = vmatprep.subr.mxu0 0.0
    %3009 = vmatpush1.msra.mxu0 0.0
    %3010 = vmatprep.subr.mxu0 0.0
    %3011 = vmatpush1.msra.mxu0 0.0
    %3012 = vmatprep.subr.mxu0 0.0
    %3013 = vmatpush1.msra.mxu0 0.0
    %3014 = vmatprep.subr.mxu0 0.0
    %3015 = vmatpush1.msra.mxu0 0.0
    %3016 = vmatprep.subr.mxu0 0.0
    %3017 = vmatpush1.msra.mxu0 0.0
    %3018 = vmatprep.subr.mxu0 0.0
    %3019 = vmatpush1.msra.mxu0 0.0
    %3020 = vmatprep.subr.mxu0 0.0
    %3021 = vmatpush1.msra.mxu0 0.0
    %3022 = vmatprep.subr.mxu0 0.0
    %3023 = vmatpush1.msra.mxu0 0.0
    %3024 = vmatprep.mubr.f32.mxu0 0.0
    %3025 = vmatmul.mubr.f32.gmra.mrb[0].mxu0 %v2958
    %v3026 = vpop.f32.mrb[0].mxu0
    %v3027 = vadd.f32 0.0, %v3026
    %v3028 = vpop.f32.mrb[0].mxu0
    %3029 = vdwg.mxu0
    %v3031 = vsel %vm337, %v2794, 0
    %3033 = vmatprep.subr.mxu0 0.0
    %3034 = vmatpush1.msra.mxu0 %v2100
    %3035 = vmatprep.subr.mxu0 0.0
    %3036 = vmatpush1.msra.mxu0 0.0
    %3037 = vmatprep.subr.mxu0 0.0
    %3038 = vmatpush1.msra.mxu0 0.0
    %3039 = vmatprep.subr.mxu0 0.0
    %3040 = vmatpush1.msra.mxu0 0.0
    %3041 = vmatprep.subr.mxu0 0.0
    %3042 = vmatpush1.msra.mxu0 0.0
    %3043 = vmatprep.subr.mxu0 0.0
    %3044 = vmatpush1.msra.mxu0 0.0
    %3045 = vmatprep.subr.mxu0 0.0
    %3046 = vmatpush1.msra.mxu0 0.0
    %3047 = vmatprep.subr.mxu0 0.0
    %3048 = vmatpush1.msra.mxu0 0.0
    %3049 = vmatprep.subr.mxu0 0.0
    %3050 = vmatpush1.msra.mxu0 0.0
    %3051 = vmatprep.subr.mxu0 0.0
    %3052 = vmatpush1.msra.mxu0 0.0
    %3053 = vmatprep.subr.mxu0 0.0
    %3054 = vmatpush1.msra.mxu0 0.0
    %3055 = vmatprep.subr.mxu0 0.0
    %3056 = vmatpush1.msra.mxu0 0.0
    %3057 = vmatprep.subr.mxu0 0.0
    %3058 = vmatpush1.msra.mxu0 0.0
    %3059 = vmatprep.subr.mxu0 0.0
    %3060 = vmatpush1.msra.mxu0 0.0
    %3061 = vmatprep.subr.mxu0 0.0
    %3062 = vmatpush1.msra.mxu0 0.0
    %3063 = vmatprep.subr.mxu0 0.0
    %3064 = vmatpush1.msra.mxu0 0.0
    %3065 = vmatprep.subr.mxu0 0.0
    %3066 = vmatpush1.msra.mxu0 0.0
    %3067 = vmatprep.subr.mxu0 0.0
    %3068 = vmatpush1.msra.mxu0 0.0
    %3069 = vmatprep.subr.mxu0 0.0
    %3070 = vmatpush1.msra.mxu0 0.0
    %3071 = vmatprep.subr.mxu0 0.0
    %3072 = vmatpush1.msra.mxu0 0.0
    %3073 = vmatprep.subr.mxu0 0.0
    %3074 = vmatpush1.msra.mxu0 0.0
    %3075 = vmatprep.subr.mxu0 0.0
    %3076 = vmatpush1.msra.mxu0 0.0
    %3077 = vmatprep.subr.mxu0 0.0
    %3078 = vmatpush1.msra.mxu0 0.0
    %3079 = vmatprep.subr.mxu0 0.0
    %3080 = vmatpush1.msra.mxu0 0.0
    %3081 = vmatprep.subr.mxu0 0.0
    %3082 = vmatpush1.msra.mxu0 0.0
    %3083 = vmatprep.subr.mxu0 0.0
    %3084 = vmatpush1.msra.mxu0 0.0
    %3085 = vmatprep.subr.mxu0 0.0
    %3086 = vmatpush1.msra.mxu0 0.0
    %3087 = vmatprep.subr.mxu0 0.0
    %3088 = vmatpush1.msra.mxu0 0.0
    %3089 = vmatprep.subr.mxu0 0.0
    %3090 = vmatpush1.msra.mxu0 0.0
    %3091 = vmatprep.subr.mxu0 0.0
    %3092 = vmatpush1.msra.mxu0 0.0
    %3093 = vmatprep.subr.mxu0 0.0
    %3094 = vmatpush1.msra.mxu0 0.0
    %3095 = vmatprep.subr.mxu0 0.0
    %3096 = vmatpush1.msra.mxu0 0.0
    %3097 = vmatprep.mubr.f32.mxu0 0.0
    %3098 = vmatmul.mubr.f32.gmra.mrb[0].mxu0 %v3031
    %v3099 = vpop.f32.mrb[0].mxu0
    %v3100 = vadd.f32 0.0, %v3099
    %v3101 = vpop.f32.mrb[0].mxu0
    %3102 = vdwg.mxu0
    %v3104 = vsel %vm337, %v2796, 0
    %3106 = vmatprep.subr.mxu0 0.0
    %3107 = vmatpush1.msra.mxu0 %v2104
    %3108 = vmatprep.subr.mxu0 0.0
    %3109 = vmatpush1.msra.mxu0 0.0
    %3110 = vmatprep.subr.mxu0 0.0
    %3111 = vmatpush1.msra.mxu0 0.0
    %3112 = vmatprep.subr.mxu0 0.0
    %3113 = vmatpush1.msra.mxu0 0.0
    %3114 = vmatprep.subr.mxu0 0.0
    %3115 = vmatpush1.msra.mxu0 0.0
    %3116 = vmatprep.subr.mxu0 0.0
    %3117 = vmatpush1.msra.mxu0 0.0
    %3118 = vmatprep.subr.mxu0 0.0
    %3119 = vmatpush1.msra.mxu0 0.0
    %3120 = vmatprep.subr.mxu0 0.0
    %3121 = vmatpush1.msra.mxu0 0.0
    %3122 = vmatprep.subr.mxu0 0.0
    %3123 = vmatpush1.msra.mxu0 0.0
    %3124 = vmatprep.subr.mxu0 0.0
    %3125 = vmatpush1.msra.mxu0 0.0
    %3126 = vmatprep.subr.mxu0 0.0
    %3127 = vmatpush1.msra.mxu0 0.0
    %3128 = vmatprep.subr.mxu0 0.0
    %3129 = vmatpush1.msra.mxu0 0.0
    %3130 = vmatprep.subr.mxu0 0.0
    %3131 = vmatpush1.msra.mxu0 0.0
    %3132 = vmatprep.subr.mxu0 0.0
    %3133 = vmatpush1.msra.mxu0 0.0
    %3134 = vmatprep.subr.mxu0 0.0
    %3135 = vmatpush1.msra.mxu0 0.0
    %3136 = vmatprep.subr.mxu0 0.0
    %3137 = vmatpush1.msra.mxu0 0.0
    %3138 = vmatprep.subr.mxu0 0.0
    %3139 = vmatpush1.msra.mxu0 0.0
    %3140 = vmatprep.subr.mxu0 0.0
    %3141 = vmatpush1.msra.mxu0 0.0
    %3142 = vmatprep.subr.mxu0 0.0
    %3143 = vmatpush1.msra.mxu0 0.0
    %3144 = vmatprep.subr.mxu0 0.0
    %3145 = vmatpush1.msra.mxu0 0.0
    %3146 = vmatprep.subr.mxu0 0.0
    %3147 = vmatpush1.msra.mxu0 0.0
    %3148 = vmatprep.subr.mxu0 0.0
    %3149 = vmatpush1.msra.mxu0 0.0
    %3150 = vmatprep.subr.mxu0 0.0
    %3151 = vmatpush1.msra.mxu0 0.0
    %3152 = vmatprep.subr.mxu0 0.0
    %3153 = vmatpush1.msra.mxu0 0.0
    %3154 = vmatprep.subr.mxu0 0.0
    %3155 = vmatpush1.msra.mxu0 0.0
    %3156 = vmatprep.subr.mxu0 0.0
    %3157 = vmatpush1.msra.mxu0 0.0
    %3158 = vmatprep.subr.mxu0 0.0
    %3159 = vmatpush1.msra.mxu0 0.0
    %3160 = vmatprep.subr.mxu0 0.0
    %3161 = vmatpush1.msra.mxu0 0.0
    %3162 = vmatprep.subr.mxu0 0.0
    %3163 = vmatpush1.msra.mxu0 0.0
    %3164 = vmatprep.subr.mxu0 0.0
    %3165 = vmatpush1.msra.mxu0 0.0
    %3166 = vmatprep.subr.mxu0 0.0
    %3167 = vmatpush1.msra.mxu0 0.0
    %3168 = vmatprep.subr.mxu0 0.0
    %3169 = vmatpush1.msra.mxu0 0.0
    %3170 = vmatprep.mubr.f32.mxu0 0.0
    %3171 = vmatmul.mubr.f32.gmra.mrb[0].mxu0 %v3104
    %v3172 = vpop.f32.mrb[0].mxu0
    %v3173 = vadd.f32 0.0, %v3172
    %v3174 = vpop.f32.mrb[0].mxu0
    %3175 = vdwg.mxu0
    %v3177 = vsel %vm337, %v2798, 0
    %3179 = vmatprep.subr.mxu0 0.0
    %3180 = vmatpush1.msra.mxu0 %v2106
    %3181 = vmatprep.subr.mxu0 0.0
    %3182 = vmatpush1.msra.mxu0 0.0
    %3183 = vmatprep.subr.mxu0 0.0
    %3184 = vmatpush1.msra.mxu0 0.0
    %3185 = vmatprep.subr.mxu0 0.0
    %3186 = vmatpush1.msra.mxu0 0.0
    %3187 = vmatprep.subr.mxu0 0.0
    %3188 = vmatpush1.msra.mxu0 0.0
    %3189 = vmatprep.subr.mxu0 0.0
    %3190 = vmatpush1.msra.mxu0 0.0
    %3191 = vmatprep.subr.mxu0 0.0
    %3192 = vmatpush1.msra.mxu0 0.0
    %3193 = vmatprep.subr.mxu0 0.0
    %3194 = vmatpush1.msra.mxu0 0.0
    %3195 = vmatprep.subr.mxu0 0.0
    %3196 = vmatpush1.msra.mxu0 0.0
    %3197 = vmatprep.subr.mxu0 0.0
    %3198 = vmatpush1.msra.mxu0 0.0
    %3199 = vmatprep.subr.mxu0 0.0
    %3200 = vmatpush1.msra.mxu0 0.0
    %3201 = vmatprep.subr.mxu0 0.0
    %3202 = vmatpush1.msra.mxu0 0.0
    %3203 = vmatprep.subr.mxu0 0.0
    %3204 = vmatpush1.msra.mxu0 0.0
    %3205 = vmatprep.subr.mxu0 0.0
    %3206 = vmatpush1.msra.mxu0 0.0
    %3207 = vmatprep.subr.mxu0 0.0
    %3208 = vmatpush1.msra.mxu0 0.0
    %3209 = vmatprep.subr.mxu0 0.0
    %3210 = vmatpush1.msra.mxu0 0.0
    %3211 = vmatprep.subr.mxu0 0.0
    %3212 = vmatpush1.msra.mxu0 0.0
    %3213 = vmatprep.subr.mxu0 0.0
    %3214 = vmatpush1.msra.mxu0 0.0
    %3215 = vmatprep.subr.mxu0 0.0
    %3216 = vmatpush1.msra.mxu0 0.0
    %3217 = vmatprep.subr.mxu0 0.0
    %3218 = vmatpush1.msra.mxu0 0.0
    %3219 = vmatprep.subr.mxu0 0.0
    %3220 = vmatpush1.msra.mxu0 0.0
    %3221 = vmatprep.subr.mxu0 0.0
    %3222 = vmatpush1.msra.mxu0 0.0
    %3223 = vmatprep.subr.mxu0 0.0
    %3224 = vmatpush1.msra.mxu0 0.0
    %3225 = vmatprep.subr.mxu0 0.0
    %3226 = vmatpush1.msra.mxu0 0.0
    %3227 = vmatprep.subr.mxu0 0.0
    %3228 = vmatpush1.msra.mxu0 0.0
    %3229 = vmatprep.subr.mxu0 0.0
    %3230 = vmatpush1.msra.mxu0 0.0
    %3231 = vmatprep.subr.mxu0 0.0
    %3232 = vmatpush1.msra.mxu0 0.0
    %3233 = vmatprep.subr.mxu0 0.0
    %3234 = vmatpush1.msra.mxu0 0.0
    %3235 = vmatprep.subr.mxu0 0.0
    %3236 = vmatpush1.msra.mxu0 0.0
    %3237 = vmatprep.subr.mxu0 0.0
    %3238 = vmatpush1.msra.mxu0 0.0
    %3239 = vmatprep.subr.mxu0 0.0
    %3240 = vmatpush1.msra.mxu0 0.0
    %3241 = vmatprep.subr.mxu0 0.0
    %3242 = vmatpush1.msra.mxu0 0.0
    %3243 = vmatprep.mubr.f32.mxu0 0.0
    %3244 = vmatmul.mubr.f32.gmra.mrb[0].mxu0 %v3177
    %v3245 = vpop.f32.mrb[0].mxu0
    %v3246 = vadd.f32 0.0, %v3245
    %v3247 = vpop.f32.mrb[0].mxu0
    %3248 = vdwg.mxu0
    %v3250 = vsel %vm337, %v2800, 0
    %3252 = vmatprep.subr.mxu0 0.0
    %3253 = vmatpush1.msra.mxu0 %v2110
    %3254 = vmatprep.subr.mxu0 0.0
    %3255 = vmatpush1.msra.mxu0 0.0
    %3256 = vmatprep.subr.mxu0 0.0
    %3257 = vmatpush1.msra.mxu0 0.0
    %3258 = vmatprep.subr.mxu0 0.0
    %3259 = vmatpush1.msra.mxu0 0.0
    %3260 = vmatprep.subr.mxu0 0.0
    %3261 = vmatpush1.msra.mxu0 0.0
    %3262 = vmatprep.subr.mxu0 0.0
    %3263 = vmatpush1.msra.mxu0 0.0
    %3264 = vmatprep.subr.mxu0 0.0
    %3265 = vmatpush1.msra.mxu0 0.0
    %3266 = vmatprep.subr.mxu0 0.0
    %3267 = vmatpush1.msra.mxu0 0.0
    %3268 = vmatprep.subr.mxu0 0.0
    %3269 = vmatpush1.msra.mxu0 0.0
    %3270 = vmatprep.subr.mxu0 0.0
    %3271 = vmatpush1.msra.mxu0 0.0
    %3272 = vmatprep.subr.mxu0 0.0
    %3273 = vmatpush1.msra.mxu0 0.0
    %3274 = vmatprep.subr.mxu0 0.0
    %3275 = vmatpush1.msra.mxu0 0.0
    %3276 = vmatprep.subr.mxu0 0.0
    %3277 = vmatpush1.msra.mxu0 0.0
    %3278 = vmatprep.subr.mxu0 0.0
    %3279 = vmatpush1.msra.mxu0 0.0
    %3280 = vmatprep.subr.mxu0 0.0
    %3281 = vmatpush1.msra.mxu0 0.0
    %3282 = vmatprep.subr.mxu0 0.0
    %3283 = vmatpush1.msra.mxu0 0.0
    %3284 = vmatprep.subr.mxu0 0.0
    %3285 = vmatpush1.msra.mxu0 0.0
    %3286 = vmatprep.subr.mxu0 0.0
    %3287 = vmatpush1.msra.mxu0 0.0
    %3288 = vmatprep.subr.mxu0 0.0
    %3289 = vmatpush1.msra.mxu0 0.0
    %3290 = vmatprep.subr.mxu0 0.0
    %3291 = vmatpush1.msra.mxu0 0.0
    %3292 = vmatprep.subr.mxu0 0.0
    %3293 = vmatpush1.msra.mxu0 0.0
    %3294 = vmatprep.subr.mxu0 0.0
    %3295 = vmatpush1.msra.mxu0 0.0
    %3296 = vmatprep.subr.mxu0 0.0
    %3297 = vmatpush1.msra.mxu0 0.0
    %3298 = vmatprep.subr.mxu0 0.0
    %3299 = vmatpush1.msra.mxu0 0.0
    %3300 = vmatprep.subr.mxu0 0.0
    %3301 = vmatpush1.msra.mxu0 0.0
    %3302 = vmatprep.subr.mxu0 0.0
    %3303 = vmatpush1.msra.mxu0 0.0
    %3304 = vmatprep.subr.mxu0 0.0
    %3305 = vmatpush1.msra.mxu0 0.0
    %3306 = vmatprep.subr.mxu0 0.0
    %3307 = vmatpush1.msra.mxu0 0.0
    %3308 = vmatprep.subr.mxu0 0.0
    %3309 = vmatpush1.msra.mxu0 0.0
    %3310 = vmatprep.subr.mxu0 0.0
    %3311 = vmatpush1.msra.mxu0 0.0
    %3312 = vmatprep.subr.mxu0 0.0
    %3313 = vmatpush1.msra.mxu0 0.0
    %3314 = vmatprep.subr.mxu0 0.0
    %3315 = vmatpush1.msra.mxu0 0.0
    %3316 = vmatprep.mubr.f32.mxu0 0.0
    %3317 = vmatmul.mubr.f32.gmra.mrb[0].mxu0 %v3250
    %v3318 = vpop.f32.mrb[0].mxu0
    %v3319 = vadd.f32 0.0, %v3318
    %v3320 = vpop.f32.mrb[0].mxu0
    %3321 = vdwg.mxu0
    %v3323 = vsel %vm337, %v2802, 0
    %3325 = vmatprep.subr.mxu0 0.0
    %3326 = vmatpush1.msra.mxu0 %v2112
    %3327 = vmatprep.subr.mxu0 0.0
    %3328 = vmatpush1.msra.mxu0 0.0
    %3329 = vmatprep.subr.mxu0 0.0
    %3330 = vmatpush1.msra.mxu0 0.0
    %3331 = vmatprep.subr.mxu0 0.0
    %3332 = vmatpush1.msra.mxu0 0.0
    %3333 = vmatprep.subr.mxu0 0.0
    %3334 = vmatpush1.msra.mxu0 0.0
    %3335 = vmatprep.subr.mxu0 0.0
    %3336 = vmatpush1.msra.mxu0 0.0
    %3337 = vmatprep.subr.mxu0 0.0
    %3338 = vmatpush1.msra.mxu0 0.0
    %3339 = vmatprep.subr.mxu0 0.0
    %3340 = vmatpush1.msra.mxu0 0.0
    %3341 = vmatprep.subr.mxu0 0.0
    %3342 = vmatpush1.msra.mxu0 0.0
    %3343 = vmatprep.subr.mxu0 0.0
    %3344 = vmatpush1.msra.mxu0 0.0
    %3345 = vmatprep.subr.mxu0 0.0
    %3346 = vmatpush1.msra.mxu0 0.0
    %3347 = vmatprep.subr.mxu0 0.0
    %3348 = vmatpush1.msra.mxu0 0.0
    %3349 = vmatprep.subr.mxu0 0.0
    %3350 = vmatpush1.msra.mxu0 0.0
    %3351 = vmatprep.subr.mxu0 0.0
    %3352 = vmatpush1.msra.mxu0 0.0
    %3353 = vmatprep.subr.mxu0 0.0
    %3354 = vmatpush1.msra.mxu0 0.0
    %3355 = vmatprep.subr.mxu0 0.0
    %3356 = vmatpush1.msra.mxu0 0.0
    %3357 = vmatprep.subr.mxu0 0.0
    %3358 = vmatpush1.msra.mxu0 0.0
    %3359 = vmatprep.subr.mxu0 0.0
    %3360 = vmatpush1.msra.mxu0 0.0
    %3361 = vmatprep.subr.mxu0 0.0
    %3362 = vmatpush1.msra.mxu0 0.0
    %3363 = vmatprep.subr.mxu0 0.0
    %3364 = vmatpush1.msra.mxu0 0.0
    %3365 = vmatprep.subr.mxu0 0.0
    %3366 = vmatpush1.msra.mxu0 0.0
    %3367 = vmatprep.subr.mxu0 0.0
    %3368 = vmatpush1.msra.mxu0 0.0
    %3369 = vmatprep.subr.mxu0 0.0
    %3370 = vmatpush1.msra.mxu0 0.0
    %3371 = vmatprep.subr.mxu0 0.0
    %3372 = vmatpush1.msra.mxu0 0.0
    %3373 = vmatprep.subr.mxu0 0.0
    %3374 = vmatpush1.msra.mxu0 0.0
    %3375 = vmatprep.subr.mxu0 0.0
    %3376 = vmatpush1.msra.mxu0 0.0
    %3377 = vmatprep.subr.mxu0 0.0
    %3378 = vmatpush1.msra.mxu0 0.0
    %3379 = vmatprep.subr.mxu0 0.0
    %3380 = vmatpush1.msra.mxu0 0.0
    %3381 = vmatprep.subr.mxu0 0.0
    %3382 = vmatpush1.msra.mxu0 0.0
    %3383 = vmatprep.subr.mxu0 0.0
    %3384 = vmatpush1.msra.mxu0 0.0
    %3385 = vmatprep.subr.mxu0 0.0
    %3386 = vmatpush1.msra.mxu0 0.0
    %3387 = vmatprep.subr.mxu0 0.0
    %3388 = vmatpush1.msra.mxu0 0.0
    %3389 = vmatprep.mubr.f32.mxu0 0.0
    %3390 = vmatmul.mubr.f32.gmra.mrb[0].mxu0 %v3323
    %v3391 = vpop.f32.mrb[0].mxu0
    %v3392 = vadd.f32 0.0, %v3391
    %v3393 = vpop.f32.mrb[0].mxu0
    %3394 = vdwg.mxu0
    %v3395 = vld [vmem:[%s16] sm:$0xf]
    %v3396 = vld [vmem:[%s16 + $0x4] sm:$0xf]
    %v3397 = vld [vmem:[%s16 + $0x8] sm:$0xf]
    %v3398 = vld [vmem:[%s16 + $0xc] sm:$0xf]
    %v3399 = vpack.c.bf16 %v2954, %v2881
    %v3400 = vpack.c.bf16 %v3100, %v3027
    %v3402 = vsel %vm337, %v3400, 0
    %v3405 = vsel %vm1619, %v3396, 0
    %3407 = vmatprep.subr.bf16.mxu0 0
    %3408 = vmatpush1.bf16.msra.mxu0 %v3405
    %3409 = vmatprep.subr.bf16.mxu0 0
    %3410 = vmatpush1.bf16.msra.mxu0 0
    %3411 = vmatprep.subr.bf16.mxu0 0
    %3412 = vmatpush1.bf16.msra.mxu0 0
    %3413 = vmatprep.subr.bf16.mxu0 0
    %3414 = vmatpush1.bf16.msra.mxu0 0
    %3415 = vmatprep.subr.bf16.mxu0 0
    %3416 = vmatpush1.bf16.msra.mxu0 0
    %3417 = vmatprep.subr.bf16.mxu0 0
    %3418 = vmatpush1.bf16.msra.mxu0 0
    %3419 = vmatprep.subr.bf16.mxu0 0
    %3420 = vmatpush1.bf16.msra.mxu0 0
    %3421 = vmatprep.subr.bf16.mxu0 0
    %3422 = vmatpush1.bf16.msra.mxu0 0
    %3423 = vmatprep.subr.bf16.mxu0 0
    %3424 = vmatpush1.bf16.msra.mxu0 0
    %3425 = vmatprep.subr.bf16.mxu0 0
    %3426 = vmatpush1.bf16.msra.mxu0 0
    %3427 = vmatprep.subr.bf16.mxu0 0
    %3428 = vmatpush1.bf16.msra.mxu0 0
    %3429 = vmatprep.subr.bf16.mxu0 0
    %3430 = vmatpush1.bf16.msra.mxu0 0
    %3431 = vmatprep.subr.bf16.mxu0 0
    %3432 = vmatpush1.bf16.msra.mxu0 0
    %3433 = vmatprep.subr.bf16.mxu0 0
    %3434 = vmatpush1.bf16.msra.mxu0 0
    %3435 = vmatprep.subr.bf16.mxu0 0
    %3436 = vmatpush1.bf16.msra.mxu0 0
    %3437 = vmatprep.subr.bf16.mxu0 0
    %3438 = vmatpush1.bf16.msra.mxu0 0
    %3439 = vmatprep.mubr.bf16.mxu0 0
    %3440 = vmatmul.mubr.bf16.gmra.mrb[0].mxu0 %v3402
    %v3441 = vpop.f32.mrb[0].mxu0
    %v3442 = vadd.f32 0.0, %v3441
    %v3443 = vpop.f32.mrb[0].mxu0
    %v3444 = vpop.f32.mrb[0].mxu0
    %v3445 = vadd.f32 0.0, %v3444
    %v3446 = vpop.f32.mrb[0].mxu0
    %3447 = vdwg.mxu0
    %v3449 = vsel %vm337, %v3399, 0
    %v3452 = vsel %vm1619, %v3395, 0
    %3454 = vmatprep.subr.bf16.mxu0 0
    %3455 = vmatpush1.bf16.msra.mxu0 %v3452
    %3456 = vmatprep.subr.bf16.mxu0 0
    %3457 = vmatpush1.bf16.msra.mxu0 0
    %3458 = vmatprep.subr.bf16.mxu0 0
    %3459 = vmatpush1.bf16.msra.mxu0 0
    %3460 = vmatprep.subr.bf16.mxu0 0
    %3461 = vmatpush1.bf16.msra.mxu0 0
    %3462 = vmatprep.subr.bf16.mxu0 0
    %3463 = vmatpush1.bf16.msra.mxu0 0
    %3464 = vmatprep.subr.bf16.mxu0 0
    %3465 = vmatpush1.bf16.msra.mxu0 0
    %3466 = vmatprep.subr.bf16.mxu0 0
    %3467 = vmatpush1.bf16.msra.mxu0 0
    %3468 = vmatprep.subr.bf16.mxu0 0
    %3469 = vmatpush1.bf16.msra.mxu0 0
    %3470 = vmatprep.subr.bf16.mxu0 0
    %3471 = vmatpush1.bf16.msra.mxu0 0
    %3472 = vmatprep.subr.bf16.mxu0 0
    %3473 = vmatpush1.bf16.msra.mxu0 0
    %3474 = vmatprep.subr.bf16.mxu0 0
    %3475 = vmatpush1.bf16.msra.mxu0 0
    %3476 = vmatprep.subr.bf16.mxu0 0
    %3477 = vmatpush1.bf16.msra.mxu0 0
    %3478 = vmatprep.subr.bf16.mxu0 0
    %3479 = vmatpush1.bf16.msra.mxu0 0
    %3480 = vmatprep.subr.bf16.mxu0 0
    %3481 = vmatpush1.bf16.msra.mxu0 0
    %3482 = vmatprep.subr.bf16.mxu0 0
    %3483 = vmatpush1.bf16.msra.mxu0 0
    %3484 = vmatprep.subr.bf16.mxu0 0
    %3485 = vmatpush1.bf16.msra.mxu0 0
    %3486 = vmatprep.mubr.bf16.mxu0 0
    %3487 = vmatmul.mubr.bf16.gmra.mrb[0].mxu0 %v3449
    %v3488 = vpop.f32.mrb[0].mxu0
    %v3489 = vadd.f32 %v3442, %v3488
    %v3490 = vpop.f32.mrb[0].mxu0
    %v3491 = vpop.f32.mrb[0].mxu0
    %v3492 = vadd.f32 %v3445, %v3491
    %v3493 = vpop.f32.mrb[0].mxu0
    %3494 = vdwg.mxu0
    %v3495 = vpack.c.bf16 %v3246, %v3173
    %v3497 = vsel %vm337, %v3495, 0
    %v3500 = vsel %vm1619, %v3397, 0
    %3502 = vmatprep.subr.bf16.mxu0 0
    %3503 = vmatpush1.bf16.msra.mxu0 %v3500
    %3504 = vmatprep.subr.bf16.mxu0 0
    %3505 = vmatpush1.bf16.msra.mxu0 0
    %3506 = vmatprep.subr.bf16.mxu0 0
    %3507 = vmatpush1.bf16.msra.mxu0 0
    %3508 = vmatprep.subr.bf16.mxu0 0
    %3509 = vmatpush1.bf16.msra.mxu0 0
    %3510 = vmatprep.subr.bf16.mxu0 0
    %3511 = vmatpush1.bf16.msra.mxu0 0
    %3512 = vmatprep.subr.bf16.mxu0 0
    %3513 = vmatpush1.bf16.msra.mxu0 0
    %3514 = vmatprep.subr.bf16.mxu0 0
    %3515 = vmatpush1.bf16.msra.mxu0 0
    %3516 = vmatprep.subr.bf16.mxu0 0
    %3517 = vmatpush1.bf16.msra.mxu0 0
    %3518 = vmatprep.subr.bf16.mxu0 0
    %3519 = vmatpush1.bf16.msra.mxu0 0
    %3520 = vmatprep.subr.bf16.mxu0 0
    %3521 = vmatpush1.bf16.msra.mxu0 0
    %3522 = vmatprep.subr.bf16.mxu0 0
    %3523 = vmatpush1.bf16.msra.mxu0 0
    %3524 = vmatprep.subr.bf16.mxu0 0
    %3525 = vmatpush1.bf16.msra.mxu0 0
    %3526 = vmatprep.subr.bf16.mxu0 0
    %3527 = vmatpush1.bf16.msra.mxu0 0
    %3528 = vmatprep.subr.bf16.mxu0 0
    %3529 = vmatpush1.bf16.msra.mxu0 0
    %3530 = vmatprep.subr.bf16.mxu0 0
    %3531 = vmatpush1.bf16.msra.mxu0 0
    %3532 = vmatprep.subr.bf16.mxu0 0
    %3533 = vmatpush1.bf16.msra.mxu0 0
    %3534 = vmatprep.mubr.bf16.mxu0 0
    %3535 = vmatmul.mubr.bf16.gmra.mrb[0].mxu0 %v3497
    %v3536 = vpop.f32.mrb[0].mxu0
    %v3537 = vadd.f32 0.0, %v3536
    %v3538 = vpop.f32.mrb[0].mxu0
    %v3539 = vpop.f32.mrb[0].mxu0
    %v3540 = vadd.f32 0.0, %v3539
    %v3541 = vpop.f32.mrb[0].mxu0
    %3542 = vdwg.mxu0
    %v3543 = vadd.f32 %v3489, %v3537
    %v3544 = vadd.f32 %v3492, %v3540
    %v3545 = vpack.c.bf16 %v3392, %v3319
    %v3547 = vsel %vm337, %v3545, 0
    %v3550 = vsel %vm1619, %v3398, 0
    %3552 = vmatprep.subr.bf16.mxu0 0
    %3553 = vmatpush1.bf16.msra.mxu0 %v3550
    %3554 = vmatprep.subr.bf16.mxu0 0
    %3555 = vmatpush1.bf16.msra.mxu0 0
    %3556 = vmatprep.subr.bf16.mxu0 0
    %3557 = vmatpush1.bf16.msra.mxu0 0
    %3558 = vmatprep.subr.bf16.mxu0 0
    %3559 = vmatpush1.bf16.msra.mxu0 0
    %3560 = vmatprep.subr.bf16.mxu0 0
    %3561 = vmatpush1.bf16.msra.mxu0 0
    %3562 = vmatprep.subr.bf16.mxu0 0
    %3563 = vmatpush1.bf16.msra.mxu0 0
    %3564 = vmatprep.subr.bf16.mxu0 0
    %3565 = vmatpush1.bf16.msra.mxu0 0
    %3566 = vmatprep.subr.bf16.mxu0 0
    %3567 = vmatpush1.bf16.msra.mxu0 0
    %3568 = vmatprep.subr.bf16.mxu0 0
    %3569 = vmatpush1.bf16.msra.mxu0 0
    %3570 = vmatprep.subr.bf16.mxu0 0
    %3571 = vmatpush1.bf16.msra.mxu0 0
    %3572 = vmatprep.subr.bf16.mxu0 0
    %3573 = vmatpush1.bf16.msra.mxu0 0
    %3574 = vmatprep.subr.bf16.mxu0 0
    %3575 = vmatpush1.bf16.msra.mxu0 0
    %3576 = vmatprep.subr.bf16.mxu0 0
    %3577 = vmatpush1.bf16.msra.mxu0 0
    %3578 = vmatprep.subr.bf16.mxu0 0
    %3579 = vmatpush1.bf16.msra.mxu0 0
    %3580 = vmatprep.subr.bf16.mxu0 0
    %3581 = vmatpush1.bf16.msra.mxu0 0
    %3582 = vmatprep.subr.bf16.mxu0 0
    %3583 = vmatpush1.bf16.msra.mxu0 0
    %3584 = vmatprep.mubr.bf16.mxu0 0
    %3585 = vmatmul.mubr.bf16.gmra.mrb[0].mxu0 %v3547
    %v3586 = vpop.f32.mrb[0].mxu0
    %v3587 = vadd.f32 0.0, %v3586
    %v3588 = vpop.f32.mrb[0].mxu0
    %v3589 = vpop.f32.mrb[0].mxu0
    %v3590 = vadd.f32 0.0, %v3589
    %v3591 = vpop.f32.mrb[0].mxu0
    %3592 = vdwg.mxu0
    %v3593 = vadd.f32 %v3543, %v3587
    %v3594 = vadd.f32 %v3544, %v3590
    %v3595 = vld [vmem:[%s17] sm:$0x1]
    %v3597 = vlaneseq
    %v3598 = vshrl.u32 %v3597, 7
    %v3599 = vsub.s32 0, %v3598
    %v3600 = vrot.slane %v3595, %v3599
    %v3602 = vadd.f32 %v3593, %v3600
    %v3603 = vadd.f32 %v3594, %v3600
    %v3604 = vadd.f32 %v1865, %v3602
    %v3605 = vadd.f32 %v1866, %v3603
    %v3606 = vld [vmem:[%s22] sm:$0x1]
    %v3607 = vld [vmem:[%s23] sm:$0x1]
    %v3608 = vsel %vm116, %v3604, 0.0
    %3609 = vadd.xlane.f32.xlu0 %v3608
    %v3610 = vpop.xlane.xlu0 %3609
    %v3611 = vsel %vm116, %v3605, 0.0
    %3612 = vadd.xlane.f32.xlu0 %v3611
    %v3613 = vpop.xlane.xlu0 %3612
    %v3614 = vmul.f32 %v3610, %v1830
    %v3615 = vmul.f32 %v3613, %v1830
    %v3616 = vsub.f32 %v3604, %v3614
    %v3617 = vsub.f32 %v3605, %v3615
    %v3618 = vmul.f32 %v3616, %v3616
    %v3619 = vmul.f32 %v3617, %v3617
    %v3620 = vsel %vm116, %v3618, 0.0
    %3621 = vadd.xlane.f32.xlu0 %v3620
    %v3622 = vpop.xlane.xlu0 %3621
    %v3623 = vsel %vm116, %v3619, 0.0
    %3624 = vadd.xlane.f32.xlu0 %v3623
    %v3625 = vpop.xlane.xlu0 %3624
    %v3626 = vmul.f32 %v3622, %v1830
    %v3627 = vmul.f32 %v3625, %v1830
    %v3628 = vadd.f32 %v3626, 1e-05
    %v3629 = vadd.f32 %v3627, 1e-05
    %v3630 = vrsqrt.pop %v3628
    %v3631 = vrsqrt.pop %v3629
    %v3632 = vmul.f32 %v3616, %v3630
    %v3633 = vmul.f32 %v3617, %v3631
    %v3635 = vlaneseq
    %v3636 = vshrl.u32 %v3635, 7
    %v3637 = vsub.s32 0, %v3636
    %v3638 = vrot.slane %v3606, %v3637
    %v3640 = vmul.f32 %v3632, %v3638
    %v3641 = vmul.f32 %v3633, %v3638
    %v3643 = vlaneseq
    %v3644 = vshrl.u32 %v3643, 7
    %v3645 = vsub.s32 0, %v3644
    %v3646 = vrot.slane %v3607, %v3645
    %v3648 = vadd.f32 %v3640, %v3646
    %v3649 = vadd.f32 %v3641, %v3646
    %v3650 = vpack.c.bf16 %v3649, %v3648
    %v3651 = vld [vmem:[%s18] sm:$0xff]
    %v3652 = vld [vmem:[%s18 + $0x8] sm:$0xff]
    %v3653 = vld [vmem:[%s18 + $0x10] sm:$0xff]
    %v3654 = vld [vmem:[%s18 + $0x18] sm:$0xff]
    %v3655 = vld [vmem:[%s18 + $0x20] sm:$0xff]
    %v3656 = vld [vmem:[%s18 + $0x28] sm:$0xff]
    %v3657 = vld [vmem:[%s18 + $0x30] sm:$0xff]
    %v3658 = vld [vmem:[%s18 + $0x38] sm:$0xff]
    %v3659 = vld [vmem:[%s18 + $0x40] sm:$0xff]
    %v3660 = vld [vmem:[%s18 + $0x48] sm:$0xff]
    %v3661 = vld [vmem:[%s18 + $0x50] sm:$0xff]
    %v3662 = vld [vmem:[%s18 + $0x58] sm:$0xff]
    %v3663 = vld [vmem:[%s18 + $0x60] sm:$0xff]
    %v3664 = vld [vmem:[%s18 + $0x68] sm:$0xff]
    %v3665 = vld [vmem:[%s18 + $0x70] sm:$0xff]
    %v3666 = vld [vmem:[%s18 + $0x78] sm:$0xff]
    %v3683 = vunpack.c.l.b16 %v3651
    %v3684 = vunpack.c.h.b16 %v3651
    %v3685 = vunpack.c.l.b16 %v3652
    %v3686 = vunpack.c.h.b16 %v3652
    %v3687 = vunpack.c.l.b16 %v3653
    %v3688 = vunpack.c.h.b16 %v3653
    %v3689 = vunpack.c.l.b16 %v3654
    %v3690 = vunpack.c.h.b16 %v3654
    %v3691 = vunpack.c.l.b16 %v3655
    %v3692 = vunpack.c.h.b16 %v3655
    %v3693 = vunpack.c.l.b16 %v3656
    %v3694 = vunpack.c.h.b16 %v3656
    %v3695 = vunpack.c.l.b16 %v3657
    %v3696 = vunpack.c.h.b16 %v3657
    %v3697 = vunpack.c.l.b16 %v3658
    %v3698 = vunpack.c.h.b16 %v3658
    %v3699 = vunpack.c.l.b16 %v3659
    %v3700 = vunpack.c.h.b16 %v3659
    %v3701 = vunpack.c.l.b16 %v3660
    %v3702 = vunpack.c.h.b16 %v3660
    %v3703 = vunpack.c.l.b16 %v3661
    %v3704 = vunpack.c.h.b16 %v3661
    %v3705 = vunpack.c.l.b16 %v3662
    %v3706 = vunpack.c.h.b16 %v3662
    %v3707 = vunpack.c.l.b16 %v3663
    %v3708 = vunpack.c.h.b16 %v3663
    %v3709 = vunpack.c.l.b16 %v3664
    %v3710 = vunpack.c.h.b16 %v3664
    %v3711 = vunpack.c.l.b16 %v3665
    %v3712 = vunpack.c.h.b16 %v3665
    %v3713 = vunpack.c.l.b16 %v3666
    %v3714 = vunpack.c.h.b16 %v3666
    %v3715 = vpack.c.b16 %v3691, %v3683
    %v3716 = vpack.c.b16 %v3692, %v3684
    %v3717 = vpack.c.b16 %v3693, %v3685
    %v3718 = vpack.c.b16 %v3694, %v3686
    %v3719 = vpack.c.b16 %v3695, %v3687
    %v3720 = vpack.c.b16 %v3696, %v3688
    %v3721 = vpack.c.b16 %v3697, %v3689
    %v3722 = vpack.c.b16 %v3698, %v3690
    %v3723 = vpack.c.b16 %v3707, %v3699
    %v3724 = vpack.c.b16 %v3708, %v3700
    %v3725 = vpack.c.b16 %v3709, %v3701
    %v3726 = vpack.c.b16 %v3710, %v3702
    %v3727 = vpack.c.b16 %v3711, %v3703
    %v3728 = vpack.c.b16 %v3712, %v3704
    %v3729 = vpack.c.b16 %v3713, %v3705
    %v3730 = vpack.c.b16 %v3714, %v3706
    %v3748 = vsel %vm116, %v3650, 0
    %3750 = vmatprep.subr.bf16.mxu0 %v3716
    %3751 = vmatpush1.bf16.msra.mxu0 %v3715
    %3752 = vmatprep.subr.bf16.mxu0 %v3724
    %3753 = vmatpush1.bf16.msra.mxu0 %v3723
    %3754 = vmatprep.subr.bf16.mxu0 0
    %3755 = vmatpush1.bf16.msra.mxu0 0
    %3756 = vmatprep.subr.bf16.mxu0 0
    %3757 = vmatpush1.bf16.msra.mxu0 0
    %3758 = vmatprep.subr.bf16.mxu0 0
    %3759 = vmatpush1.bf16.msra.mxu0 0
    %3760 = vmatprep.subr.bf16.mxu0 0
    %3761 = vmatpush1.bf16.msra.mxu0 0
    %3762 = vmatprep.subr.bf16.mxu0 0
    %3763 = vmatpush1.bf16.msra.mxu0 0
    %3764 = vmatprep.subr.bf16.mxu0 0
    %3765 = vmatpush1.bf16.msra.mxu0 0
    %3766 = vmatprep.subr.bf16.mxu0 0
    %3767 = vmatpush1.bf16.msra.mxu0 0
    %3768 = vmatprep.subr.bf16.mxu0 0
    %3769 = vmatpush1.bf16.msra.mxu0 0
    %3770 = vmatprep.subr.bf16.mxu0 0
    %3771 = vmatpush1.bf16.msra.mxu0 0
    %3772 = vmatprep.subr.bf16.mxu0 0
    %3773 = vmatpush1.bf16.msra.mxu0 0
    %3774 = vmatprep.subr.bf16.mxu0 0
    %3775 = vmatpush1.bf16.msra.mxu0 0
    %3776 = vmatprep.subr.bf16.mxu0 0
    %3777 = vmatpush1.bf16.msra.mxu0 0
    %3778 = vmatprep.subr.bf16.mxu0 0
    %3779 = vmatpush1.bf16.msra.mxu0 0
    %3780 = vmatprep.subr.bf16.mxu0 0
    %3781 = vmatpush1.bf16.msra.mxu0 0
    %3782 = vmatprep.mubr.bf16.mxu0 0
    %3783 = vmatmul.mubr.bf16.gmra.mrb[0].mxu0 %v3748
    %v3784 = vpop.f32.mrb[0].mxu0
    %v3785 = vadd.f32 0.0, %v3784
    %v3786 = vpop.f32.mrb[0].mxu0
    %v3787 = vadd.f32 0.0, %v3786
    %v3788 = vpop.f32.mrb[0].mxu0
    %v3789 = vadd.f32 0.0, %v3788
    %v3790 = vpop.f32.mrb[0].mxu0
    %v3791 = vadd.f32 0.0, %v3790
    %3792 = vdwg.mxu0
    %3793 = vmatprep.subr.bf16.mxu0 %v3718
    %3794 = vmatpush1.bf16.msra.mxu0 %v3717
    %3795 = vmatprep.subr.bf16.mxu0 %v3726
    %3796 = vmatpush1.bf16.msra.mxu0 %v3725
    %3797 = vmatprep.subr.bf16.mxu0 0
    %3798 = vmatpush1.bf16.msra.mxu0 0
    %3799 = vmatprep.subr.bf16.mxu0 0
    %3800 = vmatpush1.bf16.msra.mxu0 0
    %3801 = vmatprep.subr.bf16.mxu0 0
    %3802 = vmatpush1.bf16.msra.mxu0 0
    %3803 = vmatprep.subr.bf16.mxu0 0
    %3804 = vmatpush1.bf16.msra.mxu0 0
    %3805 = vmatprep.subr.bf16.mxu0 0
    %3806 = vmatpush1.bf16.msra.mxu0 0
    %3807 = vmatprep.subr.bf16.mxu0 0
    %3808 = vmatpush1.bf16.msra.mxu0 0
    %3809 = vmatprep.subr.bf16.mxu0 0
    %3810 = vmatpush1.bf16.msra.mxu0 0
    %3811 = vmatprep.subr.bf16.mxu0 0
    %3812 = vmatpush1.bf16.msra.mxu0 0
    %3813 = vmatprep.subr.bf16.mxu0 0
    %3814 = vmatpush1.bf16.msra.mxu0 0
    %3815 = vmatprep.subr.bf16.mxu0 0
    %3816 = vmatpush1.bf16.msra.mxu0 0
    %3817 = vmatprep.subr.bf16.mxu0 0
    %3818 = vmatpush1.bf16.msra.mxu0 0
    %3819 = vmatprep.subr.bf16.mxu0 0
    %3820 = vmatpush1.bf16.msra.mxu0 0
    %3821 = vmatprep.subr.bf16.mxu0 0
    %3822 = vmatpush1.bf16.msra.mxu0 0
    %3823 = vmatprep.subr.bf16.mxu0 0
    %3824 = vmatpush1.bf16.msra.mxu0 0
    %3825 = vmatprep.mubr.bf16.mxu0 0
    %3826 = vmatmul.mubr.bf16.gmra.mrb[0].mxu0 %v3748
    %v3827 = vpop.f32.mrb[0].mxu0
    %v3828 = vadd.f32 0.0, %v3827
    %v3829 = vpop.f32.mrb[0].mxu0
    %v3830 = vadd.f32 0.0, %v3829
    %v3831 = vpop.f32.mrb[0].mxu0
    %v3832 = vadd.f32 0.0, %v3831
    %v3833 = vpop.f32.mrb[0].mxu0
    %v3834 = vadd.f32 0.0, %v3833
    %3835 = vdwg.mxu0
    %3836 = vmatprep.subr.bf16.mxu0 %v3720
    %3837 = vmatpush1.bf16.msra.mxu0 %v3719
    %3838 = vmatprep.subr.bf16.mxu0 %v3728
    %3839 = vmatpush1.bf16.msra.mxu0 %v3727
    %3840 = vmatprep.subr.bf16.mxu0 0
    %3841 = vmatpush1.bf16.msra.mxu0 0
    %3842 = vmatprep.subr.bf16.mxu0 0
    %3843 = vmatpush1.bf16.msra.mxu0 0
    %3844 = vmatprep.subr.bf16.mxu0 0
    %3845 = vmatpush1.bf16.msra.mxu0 0
    %3846 = vmatprep.subr.bf16.mxu0 0
    %3847 = vmatpush1.bf16.msra.mxu0 0
    %3848 = vmatprep.subr.bf16.mxu0 0
    %3849 = vmatpush1.bf16.msra.mxu0 0
    %3850 = vmatprep.subr.bf16.mxu0 0
    %3851 = vmatpush1.bf16.msra.mxu0 0
    %3852 = vmatprep.subr.bf16.mxu0 0
    %3853 = vmatpush1.bf16.msra.mxu0 0
    %3854 = vmatprep.subr.bf16.mxu0 0
    %3855 = vmatpush1.bf16.msra.mxu0 0
    %3856 = vmatprep.subr.bf16.mxu0 0
    %3857 = vmatpush1.bf16.msra.mxu0 0
    %3858 = vmatprep.subr.bf16.mxu0 0
    %3859 = vmatpush1.bf16.msra.mxu0 0
    %3860 = vmatprep.subr.bf16.mxu0 0
    %3861 = vmatpush1.bf16.msra.mxu0 0
    %3862 = vmatprep.subr.bf16.mxu0 0
    %3863 = vmatpush1.bf16.msra.mxu0 0
    %3864 = vmatprep.subr.bf16.mxu0 0
    %3865 = vmatpush1.bf16.msra.mxu0 0
    %3866 = vmatprep.subr.bf16.mxu0 0
    %3867 = vmatpush1.bf16.msra.mxu0 0
    %3868 = vmatprep.mubr.bf16.mxu0 0
    %3869 = vmatmul.mubr.bf16.gmra.mrb[0].mxu0 %v3748
    %v3870 = vpop.f32.mrb[0].mxu0
    %v3871 = vadd.f32 0.0, %v3870
    %v3872 = vpop.f32.mrb[0].mxu0
    %v3873 = vadd.f32 0.0, %v3872
    %v3874 = vpop.f32.mrb[0].mxu0
    %v3875 = vadd.f32 0.0, %v3874
    %v3876 = vpop.f32.mrb[0].mxu0
    %v3877 = vadd.f32 0.0, %v3876
    %3878 = vdwg.mxu0
    %3879 = vmatprep.subr.bf16.mxu0 %v3722
    %3880 = vmatpush1.bf16.msra.mxu0 %v3721
    %3881 = vmatprep.subr.bf16.mxu0 %v3730
    %3882 = vmatpush1.bf16.msra.mxu0 %v3729
    %3883 = vmatprep.subr.bf16.mxu0 0
    %3884 = vmatpush1.bf16.msra.mxu0 0
    %3885 = vmatprep.subr.bf16.mxu0 0
    %3886 = vmatpush1.bf16.msra.mxu0 0
    %3887 = vmatprep.subr.bf16.mxu0 0
    %3888 = vmatpush1.bf16.msra.mxu0 0
    %3889 = vmatprep.subr.bf16.mxu0 0
    %3890 = vmatpush1.bf16.msra.mxu0 0
    %3891 = vmatprep.subr.bf16.mxu0 0
    %3892 = vmatpush1.bf16.msra.mxu0 0
    %3893 = vmatprep.subr.bf16.mxu0 0
    %3894 = vmatpush1.bf16.msra.mxu0 0
    %3895 = vmatprep.subr.bf16.mxu0 0
    %3896 = vmatpush1.bf16.msra.mxu0 0
    %3897 = vmatprep.subr.bf16.mxu0 0
    %3898 = vmatpush1.bf16.msra.mxu0 0
    %3899 = vmatprep.subr.bf16.mxu0 0
    %3900 = vmatpush1.bf16.msra.mxu0 0
    %3901 = vmatprep.subr.bf16.mxu0 0
    %3902 = vmatpush1.bf16.msra.mxu0 0
    %3903 = vmatprep.subr.bf16.mxu0 0
    %3904 = vmatpush1.bf16.msra.mxu0 0
    %3905 = vmatprep.subr.bf16.mxu0 0
    %3906 = vmatpush1.bf16.msra.mxu0 0
    %3907 = vmatprep.subr.bf16.mxu0 0
    %3908 = vmatpush1.bf16.msra.mxu0 0
    %3909 = vmatprep.subr.bf16.mxu0 0
    %3910 = vmatpush1.bf16.msra.mxu0 0
    %3911 = vmatprep.mubr.bf16.mxu0 0
    %3912 = vmatmul.mubr.bf16.gmra.mrb[0].mxu0 %v3748
    %v3913 = vpop.f32.mrb[0].mxu0
    %v3914 = vadd.f32 0.0, %v3913
    %v3915 = vpop.f32.mrb[0].mxu0
    %v3916 = vadd.f32 0.0, %v3915
    %v3917 = vpop.f32.mrb[0].mxu0
    %v3918 = vadd.f32 0.0, %v3917
    %v3919 = vpop.f32.mrb[0].mxu0
    %v3920 = vadd.f32 0.0, %v3919
    %3921 = vdwg.mxu0
    %v3922 = vmax.f32 %v3785, 0.0
    %v3923 = vmax.f32 %v3787, 0.0
    %v3924 = vmax.f32 %v3828, 0.0
    %v3925 = vmax.f32 %v3830, 0.0
    %v3926 = vmax.f32 %v3871, 0.0
    %v3927 = vmax.f32 %v3873, 0.0
    %v3928 = vmax.f32 %v3914, 0.0
    %v3929 = vmax.f32 %v3916, 0.0
    %v3930 = vmax.f32 %v3789, 0.0
    %v3931 = vmax.f32 %v3791, 0.0
    %v3932 = vmax.f32 %v3832, 0.0
    %v3933 = vmax.f32 %v3834, 0.0
    %v3934 = vmax.f32 %v3875, 0.0
    %v3935 = vmax.f32 %v3877, 0.0
    %v3936 = vmax.f32 %v3918, 0.0
    %v3937 = vmax.f32 %v3920, 0.0
    %v3938 = vpack.c.bf16 %v3930, %v3922
    %v3939 = vpack.c.bf16 %v3931, %v3923
    %v3940 = vpack.c.bf16 %v3932, %v3924
    %v3941 = vpack.c.bf16 %v3933, %v3925
    %v3942 = vpack.c.bf16 %v3934, %v3926
    %v3943 = vpack.c.bf16 %v3935, %v3927
    %v3944 = vpack.c.bf16 %v3936, %v3928
    %v3945 = vpack.c.bf16 %v3937, %v3929
    %v3946 = vld [vmem:[%s19] sm:$0xf]
    %v3947 = vld [vmem:[%s19 + $0x4] sm:$0xf]
    %v3948 = vld [vmem:[%s19 + $0x8] sm:$0xf]
    %v3949 = vld [vmem:[%s19 + $0xc] sm:$0xf]
    %v3950 = vld [vmem:[%s19 + $0x10] sm:$0xf]
    %v3951 = vld [vmem:[%s19 + $0x14] sm:$0xf]
    %v3952 = vld [vmem:[%s19 + $0x18] sm:$0xf]
    %v3953 = vld [vmem:[%s19 + $0x1c] sm:$0xf]
    %v3954 = vld [vmem:[%s19 + $0x20] sm:$0xf]
    %v3955 = vld [vmem:[%s19 + $0x24] sm:$0xf]
    %v3956 = vld [vmem:[%s19 + $0x28] sm:$0xf]
    %v3957 = vld [vmem:[%s19 + $0x2c] sm:$0xf]
    %v3958 = vld [vmem:[%s19 + $0x30] sm:$0xf]
    %v3959 = vld [vmem:[%s19 + $0x34] sm:$0xf]
    %v3960 = vld [vmem:[%s19 + $0x38] sm:$0xf]
    %v3961 = vld [vmem:[%s19 + $0x3c] sm:$0xf]
    %v3962 = vld [vmem:[%s19 + $0x40] sm:$0xf]
    %v3963 = vld [vmem:[%s19 + $0x44] sm:$0xf]
    %v3964 = vld [vmem:[%s19 + $0x48] sm:$0xf]
    %v3965 = vld [vmem:[%s19 + $0x4c] sm:$0xf]
    %v3966 = vld [vmem:[%s19 + $0x50] sm:$0xf]
    %v3967 = vld [vmem:[%s19 + $0x54] sm:$0xf]
    %v3968 = vld [vmem:[%s19 + $0x58] sm:$0xf]
    %v3969 = vld [vmem:[%s19 + $0x5c] sm:$0xf]
    %v3970 = vld [vmem:[%s19 + $0x60] sm:$0xf]
    %v3971 = vld [vmem:[%s19 + $0x64] sm:$0xf]
    %v3972 = vld [vmem:[%s19 + $0x68] sm:$0xf]
    %v3973 = vld [vmem:[%s19 + $0x6c] sm:$0xf]
    %v3974 = vld [vmem:[%s19 + $0x70] sm:$0xf]
    %v3975 = vld [vmem:[%s19 + $0x74] sm:$0xf]
    %v3976 = vld [vmem:[%s19 + $0x78] sm:$0xf]
    %v3977 = vld [vmem:[%s19 + $0x7c] sm:$0xf]
    %v3978 = vld [vmem:[%s19 + $0x80] sm:$0xf]
    %v3979 = vld [vmem:[%s19 + $0x84] sm:$0xf]
    %v3980 = vld [vmem:[%s19 + $0x88] sm:$0xf]
    %v3981 = vld [vmem:[%s19 + $0x8c] sm:$0xf]
    %v3982 = vld [vmem:[%s19 + $0x90] sm:$0xf]
    %v3983 = vld [vmem:[%s19 + $0x94] sm:$0xf]
    %v3984 = vld [vmem:[%s19 + $0x98] sm:$0xf]
    %v3985 = vld [vmem:[%s19 + $0x9c] sm:$0xf]
    %v3986 = vld [vmem:[%s19 + $0xa0] sm:$0xf]
    %v3987 = vld [vmem:[%s19 + $0xa4] sm:$0xf]
    %v3988 = vld [vmem:[%s19 + $0xa8] sm:$0xf]
    %v3989 = vld [vmem:[%s19 + $0xac] sm:$0xf]
    %v3990 = vld [vmem:[%s19 + $0xb0] sm:$0xf]
    %v3991 = vld [vmem:[%s19 + $0xb4] sm:$0xf]
    %v3992 = vld [vmem:[%s19 + $0xb8] sm:$0xf]
    %v3993 = vld [vmem:[%s19 + $0xbc] sm:$0xf]
    %v3994 = vld [vmem:[%s19 + $0xc0] sm:$0xf]
    %v3995 = vld [vmem:[%s19 + $0xc4] sm:$0xf]
    %v3996 = vld [vmem:[%s19 + $0xc8] sm:$0xf]
    %v3997 = vld [vmem:[%s19 + $0xcc] sm:$0xf]
    %v3998 = vld [vmem:[%s19 + $0xd0] sm:$0xf]
    %v3999 = vld [vmem:[%s19 + $0xd4] sm:$0xf]
    %v4000 = vld [vmem:[%s19 + $0xd8] sm:$0xf]
    %v4001 = vld [vmem:[%s19 + $0xdc] sm:$0xf]
    %v4002 = vld [vmem:[%s19 + $0xe0] sm:$0xf]
    %v4003 = vld [vmem:[%s19 + $0xe4] sm:$0xf]
    %v4004 = vld [vmem:[%s19 + $0xe8] sm:$0xf]
    %v4005 = vld [vmem:[%s19 + $0xec] sm:$0xf]
    %v4006 = vld [vmem:[%s19 + $0xf0] sm:$0xf]
    %v4007 = vld [vmem:[%s19 + $0xf4] sm:$0xf]
    %v4008 = vld [vmem:[%s19 + $0xf8] sm:$0xf]
    %v4009 = vld [vmem:[%s19 + $0xfc] sm:$0xf]
    %v4010 = vld [vmem:[%s19 + $0x100] sm:$0xf]
    %v4011 = vld [vmem:[%s19 + $0x104] sm:$0xf]
    %v4012 = vld [vmem:[%s19 + $0x108] sm:$0xf]
    %v4013 = vld [vmem:[%s19 + $0x10c] sm:$0xf]
    %v4014 = vld [vmem:[%s19 + $0x110] sm:$0xf]
    %v4015 = vld [vmem:[%s19 + $0x114] sm:$0xf]
    %v4016 = vld [vmem:[%s19 + $0x118] sm:$0xf]
    %v4017 = vld [vmem:[%s19 + $0x11c] sm:$0xf]
    %v4018 = vld [vmem:[%s19 + $0x120] sm:$0xf]
    %v4019 = vld [vmem:[%s19 + $0x124] sm:$0xf]
    %v4020 = vld [vmem:[%s19 + $0x128] sm:$0xf]
    %v4021 = vld [vmem:[%s19 + $0x12c] sm:$0xf]
    %v4022 = vld [vmem:[%s19 + $0x130] sm:$0xf]
    %v4023 = vld [vmem:[%s19 + $0x134] sm:$0xf]
    %v4024 = vld [vmem:[%s19 + $0x138] sm:$0xf]
    %v4025 = vld [vmem:[%s19 + $0x13c] sm:$0xf]
    %v4026 = vld [vmem:[%s19 + $0x140] sm:$0xf]
    %v4027 = vld [vmem:[%s19 + $0x144] sm:$0xf]
    %v4028 = vld [vmem:[%s19 + $0x148] sm:$0xf]
    %v4029 = vld [vmem:[%s19 + $0x14c] sm:$0xf]
    %v4030 = vld [vmem:[%s19 + $0x150] sm:$0xf]
    %v4031 = vld [vmem:[%s19 + $0x154] sm:$0xf]
    %v4032 = vld [vmem:[%s19 + $0x158] sm:$0xf]
    %v4033 = vld [vmem:[%s19 + $0x15c] sm:$0xf]
    %v4034 = vld [vmem:[%s19 + $0x160] sm:$0xf]
    %v4035 = vld [vmem:[%s19 + $0x164] sm:$0xf]
    %v4036 = vld [vmem:[%s19 + $0x168] sm:$0xf]
    %v4037 = vld [vmem:[%s19 + $0x16c] sm:$0xf]
    %v4038 = vld [vmem:[%s19 + $0x170] sm:$0xf]
    %v4039 = vld [vmem:[%s19 + $0x174] sm:$0xf]
    %v4040 = vld [vmem:[%s19 + $0x178] sm:$0xf]
    %v4041 = vld [vmem:[%s19 + $0x17c] sm:$0xf]
    %v4042 = vld [vmem:[%s19 + $0x180] sm:$0xf]
    %v4043 = vld [vmem:[%s19 + $0x184] sm:$0xf]
    %v4044 = vld [vmem:[%s19 + $0x188] sm:$0xf]
    %v4045 = vld [vmem:[%s19 + $0x18c] sm:$0xf]
    %v4046 = vld [vmem:[%s19 + $0x190] sm:$0xf]
    %v4047 = vld [vmem:[%s19 + $0x194] sm:$0xf]
    %v4048 = vld [vmem:[%s19 + $0x198] sm:$0xf]
    %v4049 = vld [vmem:[%s19 + $0x19c] sm:$0xf]
    %v4050 = vld [vmem:[%s19 + $0x1a0] sm:$0xf]
    %v4051 = vld [vmem:[%s19 + $0x1a4] sm:$0xf]
    %v4052 = vld [vmem:[%s19 + $0x1a8] sm:$0xf]
    %v4053 = vld [vmem:[%s19 + $0x1ac] sm:$0xf]
    %v4054 = vld [vmem:[%s19 + $0x1b0] sm:$0xf]
    %v4055 = vld [vmem:[%s19 + $0x1b4] sm:$0xf]
    %v4056 = vld [vmem:[%s19 + $0x1b8] sm:$0xf]
    %v4057 = vld [vmem:[%s19 + $0x1bc] sm:$0xf]
    %v4058 = vld [vmem:[%s19 + $0x1c0] sm:$0xf]
    %v4059 = vld [vmem:[%s19 + $0x1c4] sm:$0xf]
    %v4060 = vld [vmem:[%s19 + $0x1c8] sm:$0xf]
    %v4061 = vld [vmem:[%s19 + $0x1cc] sm:$0xf]
    %v4062 = vld [vmem:[%s19 + $0x1d0] sm:$0xf]
    %v4063 = vld [vmem:[%s19 + $0x1d4] sm:$0xf]
    %v4064 = vld [vmem:[%s19 + $0x1d8] sm:$0xf]
    %v4065 = vld [vmem:[%s19 + $0x1dc] sm:$0xf]
    %v4066 = vld [vmem:[%s19 + $0x1e0] sm:$0xf]
    %v4067 = vld [vmem:[%s19 + $0x1e4] sm:$0xf]
    %v4068 = vld [vmem:[%s19 + $0x1e8] sm:$0xf]
    %v4069 = vld [vmem:[%s19 + $0x1ec] sm:$0xf]
    %v4070 = vld [vmem:[%s19 + $0x1f0] sm:$0xf]
    %v4071 = vld [vmem:[%s19 + $0x1f4] sm:$0xf]
    %v4072 = vld [vmem:[%s19 + $0x1f8] sm:$0xf]
    %v4073 = vld [vmem:[%s19 + $0x1fc] sm:$0xf]
    %v4202 = vunpack.c.l.b16 %v3946
    %v4203 = vunpack.c.l.b16 %v3947
    %v4204 = vunpack.c.l.b16 %v3948
    %v4205 = vunpack.c.l.b16 %v3949
    %v4206 = vunpack.c.l.b16 %v3950
    %v4207 = vunpack.c.l.b16 %v3951
    %v4208 = vunpack.c.l.b16 %v3952
    %v4209 = vunpack.c.l.b16 %v3953
    %v4210 = vunpack.c.l.b16 %v3954
    %v4211 = vunpack.c.l.b16 %v3955
    %v4212 = vunpack.c.l.b16 %v3956
    %v4213 = vunpack.c.l.b16 %v3957
    %v4214 = vunpack.c.l.b16 %v3958
    %v4215 = vunpack.c.l.b16 %v3959
    %v4216 = vunpack.c.l.b16 %v3960
    %v4217 = vunpack.c.l.b16 %v3961
    %v4218 = vunpack.c.l.b16 %v3962
    %v4219 = vunpack.c.l.b16 %v3963
    %v4220 = vunpack.c.l.b16 %v3964
    %v4221 = vunpack.c.l.b16 %v3965
    %v4222 = vunpack.c.l.b16 %v3966
    %v4223 = vunpack.c.l.b16 %v3967
    %v4224 = vunpack.c.l.b16 %v3968
    %v4225 = vunpack.c.l.b16 %v3969
    %v4226 = vunpack.c.l.b16 %v3970
    %v4227 = vunpack.c.l.b16 %v3971
    %v4228 = vunpack.c.l.b16 %v3972
    %v4229 = vunpack.c.l.b16 %v3973
    %v4230 = vunpack.c.l.b16 %v3974
    %v4231 = vunpack.c.l.b16 %v3975
    %v4232 = vunpack.c.l.b16 %v3976
    %v4233 = vunpack.c.l.b16 %v3977
    %v4234 = vunpack.c.l.b16 %v3978
    %v4235 = vunpack.c.l.b16 %v3979
    %v4236 = vunpack.c.l.b16 %v3980
    %v4237 = vunpack.c.l.b16 %v3981
    %v4238 = vunpack.c.l.b16 %v3982
    %v4239 = vunpack.c.l.b16 %v3983
    %v4240 = vunpack.c.l.b16 %v3984
    %v4241 = vunpack.c.l.b16 %v3985
    %v4242 = vunpack.c.l.b16 %v3986
    %v4243 = vunpack.c.l.b16 %v3987
    %v4244 = vunpack.c.l.b16 %v3988
    %v4245 = vunpack.c.l.b16 %v3989
    %v4246 = vunpack.c.l.b16 %v3990
    %v4247 = vunpack.c.l.b16 %v3991
    %v4248 = vunpack.c.l.b16 %v3992
    %v4249 = vunpack.c.l.b16 %v3993
    %v4250 = vunpack.c.l.b16 %v3994
    %v4251 = vunpack.c.l.b16 %v3995
    %v4252 = vunpack.c.l.b16 %v3996
    %v4253 = vunpack.c.l.b16 %v3997
    %v4254 = vunpack.c.l.b16 %v3998
    %v4255 = vunpack.c.l.b16 %v3999
    %v4256 = vunpack.c.l.b16 %v4000
    %v4257 = vunpack.c.l.b16 %v4001
    %v4258 = vunpack.c.l.b16 %v4002
    %v4259 = vunpack.c.l.b16 %v4003
    %v4260 = vunpack.c.l.b16 %v4004
    %v4261 = vunpack.c.l.b16 %v4005
    %v4262 = vunpack.c.l.b16 %v4006
    %v4263 = vunpack.c.l.b16 %v4007
    %v4264 = vunpack.c.l.b16 %v4008
    %v4265 = vunpack.c.l.b16 %v4009
    %v4266 = vunpack.c.l.b16 %v4010
    %v4267 = vunpack.c.l.b16 %v4011
    %v4268 = vunpack.c.l.b16 %v4012
    %v4269 = vunpack.c.l.b16 %v4013
    %v4270 = vunpack.c.l.b16 %v4014
    %v4271 = vunpack.c.l.b16 %v4015
    %v4272 = vunpack.c.l.b16 %v4016
    %v4273 = vunpack.c.l.b16 %v4017
    %v4274 = vunpack.c.l.b16 %v4018
    %v4275 = vunpack.c.l.b16 %v4019
    %v4276 = vunpack.c.l.b16 %v4020
    %v4277 = vunpack.c.l.b16 %v4021
    %v4278 = vunpack.c.l.b16 %v4022
    %v4279 = vunpack.c.l.b16 %v4023
    %v4280 = vunpack.c.l.b16 %v4024
    %v4281 = vunpack.c.l.b16 %v4025
    %v4282 = vunpack.c.l.b16 %v4026
    %v4283 = vunpack.c.l.b16 %v4027
    %v4284 = vunpack.c.l.b16 %v4028
    %v4285 = vunpack.c.l.b16 %v4029
    %v4286 = vunpack.c.l.b16 %v4030
    %v4287 = vunpack.c.l.b16 %v4031
    %v4288 = vunpack.c.l.b16 %v4032
    %v4289 = vunpack.c.l.b16 %v4033
    %v4290 = vunpack.c.l.b16 %v4034
    %v4291 = vunpack.c.l.b16 %v4035
    %v4292 = vunpack.c.l.b16 %v4036
    %v4293 = vunpack.c.l.b16 %v4037
    %v4294 = vunpack.c.l.b16 %v4038
    %v4295 = vunpack.c.l.b16 %v4039
    %v4296 = vunpack.c.l.b16 %v4040
    %v4297 = vunpack.c.l.b16 %v4041
    %v4298 = vunpack.c.l.b16 %v4042
    %v4299 = vunpack.c.l.b16 %v4043
    %v4300 = vunpack.c.l.b16 %v4044
    %v4301 = vunpack.c.l.b16 %v4045
    %v4302 = vunpack.c.l.b16 %v4046
    %v4303 = vunpack.c.l.b16 %v4047
    %v4304 = vunpack.c.l.b16 %v4048
    %v4305 = vunpack.c.l.b16 %v4049
    %v4306 = vunpack.c.l.b16 %v4050
    %v4307 = vunpack.c.l.b16 %v4051
    %v4308 = vunpack.c.l.b16 %v4052
    %v4309 = vunpack.c.l.b16 %v4053
    %v4310 = vunpack.c.l.b16 %v4054
    %v4311 = vunpack.c.l.b16 %v4055
    %v4312 = vunpack.c.l.b16 %v4056
    %v4313 = vunpack.c.l.b16 %v4057
    %v4314 = vunpack.c.l.b16 %v4058
    %v4315 = vunpack.c.l.b16 %v4059
    %v4316 = vunpack.c.l.b16 %v4060
    %v4317 = vunpack.c.l.b16 %v4061
    %v4318 = vunpack.c.l.b16 %v4062
    %v4319 = vunpack.c.l.b16 %v4063
    %v4320 = vunpack.c.l.b16 %v4064
    %v4321 = vunpack.c.l.b16 %v4065
    %v4322 = vunpack.c.l.b16 %v4066
    %v4323 = vunpack.c.l.b16 %v4067
    %v4324 = vunpack.c.l.b16 %v4068
    %v4325 = vunpack.c.l.b16 %v4069
    %v4326 = vunpack.c.l.b16 %v4070
    %v4327 = vunpack.c.l.b16 %v4071
    %v4328 = vunpack.c.l.b16 %v4072
    %v4329 = vunpack.c.l.b16 %v4073
    %v4330 = vpack.c.b16 %v4203, %v4202
    %v4331 = vpack.c.b16 %v4205, %v4204
    %v4332 = vpack.c.b16 %v4207, %v4206
    %v4333 = vpack.c.b16 %v4209, %v4208
    %v4334 = vpack.c.b16 %v4211, %v4210
    %v4335 = vpack.c.b16 %v4213, %v4212
    %v4336 = vpack.c.b16 %v4215, %v4214
    %v4337 = vpack.c.b16 %v4217, %v4216
    %v4338 = vpack.c.b16 %v4219, %v4218
    %v4339 = vpack.c.b16 %v4221, %v4220
    %v4340 = vpack.c.b16 %v4223, %v4222
    %v4341 = vpack.c.b16 %v4225, %v4224
    %v4342 = vpack.c.b16 %v4227, %v4226
    %v4343 = vpack.c.b16 %v4229, %v4228
    %v4344 = vpack.c.b16 %v4231, %v4230
    %v4345 = vpack.c.b16 %v4233, %v4232
    %v4346 = vpack.c.b16 %v4235, %v4234
    %v4347 = vpack.c.b16 %v4237, %v4236
    %v4348 = vpack.c.b16 %v4239, %v4238
    %v4349 = vpack.c.b16 %v4241, %v4240
    %v4350 = vpack.c.b16 %v4243, %v4242
    %v4351 = vpack.c.b16 %v4245, %v4244
    %v4352 = vpack.c.b16 %v4247, %v4246
    %v4353 = vpack.c.b16 %v4249, %v4248
    %v4354 = vpack.c.b16 %v4251, %v4250
    %v4355 = vpack.c.b16 %v4253, %v4252
    %v4356 = vpack.c.b16 %v4255, %v4254
    %v4357 = vpack.c.b16 %v4257, %v4256
    %v4358 = vpack.c.b16 %v4259, %v4258
    %v4359 = vpack.c.b16 %v4261, %v4260
    %v4360 = vpack.c.b16 %v4263, %v4262
    %v4361 = vpack.c.b16 %v4265, %v4264
    %v4362 = vpack.c.b16 %v4267, %v4266
    %v4363 = vpack.c.b16 %v4269, %v4268
    %v4364 = vpack.c.b16 %v4271, %v4270
    %v4365 = vpack.c.b16 %v4273, %v4272
    %v4366 = vpack.c.b16 %v4275, %v4274
    %v4367 = vpack.c.b16 %v4277, %v4276
    %v4368 = vpack.c.b16 %v4279, %v4278
    %v4369 = vpack.c.b16 %v4281, %v4280
    %v4370 = vpack.c.b16 %v4283, %v4282
    %v4371 = vpack.c.b16 %v4285, %v4284
    %v4372 = vpack.c.b16 %v4287, %v4286
    %v4373 = vpack.c.b16 %v4289, %v4288
    %v4374 = vpack.c.b16 %v4291, %v4290
    %v4375 = vpack.c.b16 %v4293, %v4292
    %v4376 = vpack.c.b16 %v4295, %v4294
    %v4377 = vpack.c.b16 %v4297, %v4296
    %v4378 = vpack.c.b16 %v4299, %v4298
    %v4379 = vpack.c.b16 %v4301, %v4300
    %v4380 = vpack.c.b16 %v4303, %v4302
    %v4381 = vpack.c.b16 %v4305, %v4304
    %v4382 = vpack.c.b16 %v4307, %v4306
    %v4383 = vpack.c.b16 %v4309, %v4308
    %v4384 = vpack.c.b16 %v4311, %v4310
    %v4385 = vpack.c.b16 %v4313, %v4312
    %v4386 = vpack.c.b16 %v4315, %v4314
    %v4387 = vpack.c.b16 %v4317, %v4316
    %v4388 = vpack.c.b16 %v4319, %v4318
    %v4389 = vpack.c.b16 %v4321, %v4320
    %v4390 = vpack.c.b16 %v4323, %v4322
    %v4391 = vpack.c.b16 %v4325, %v4324
    %v4392 = vpack.c.b16 %v4327, %v4326
    %v4393 = vpack.c.b16 %v4329, %v4328
    %4458 = vmatprep.subr.bf16.mxu0 0
    %4459 = vmatpush1.bf16.msra.mxu0 %v4330
    %4460 = vmatprep.subr.bf16.mxu0 0
    %4461 = vmatpush1.bf16.msra.mxu0 %v4331
    %4462 = vmatprep.subr.bf16.mxu0 0
    %4463 = vmatpush1.bf16.msra.mxu0 %v4332
    %4464 = vmatprep.subr.bf16.mxu0 0
    %4465 = vmatpush1.bf16.msra.mxu0 %v4333
    %4466 = vmatprep.subr.bf16.mxu0 0
    %4467 = vmatpush1.bf16.msra.mxu0 %v4334
    %4468 = vmatprep.subr.bf16.mxu0 0
    %4469 = vmatpush1.bf16.msra.mxu0 %v4335
    %4470 = vmatprep.subr.bf16.mxu0 0
    %4471 = vmatpush1.bf16.msra.mxu0 %v4336
    %4472 = vmatprep.subr.bf16.mxu0 0
    %4473 = vmatpush1.bf16.msra.mxu0 %v4337
    %4474 = vmatprep.subr.bf16.mxu0 0
    %4475 = vmatpush1.bf16.msra.mxu0 %v4338
    %4476 = vmatprep.subr.bf16.mxu0 0
    %4477 = vmatpush1.bf16.msra.mxu0 %v4339
    %4478 = vmatprep.subr.bf16.mxu0 0
    %4479 = vmatpush1.bf16.msra.mxu0 %v4340
    %4480 = vmatprep.subr.bf16.mxu0 0
    %4481 = vmatpush1.bf16.msra.mxu0 %v4341
    %4482 = vmatprep.subr.bf16.mxu0 0
    %4483 = vmatpush1.bf16.msra.mxu0 %v4342
    %4484 = vmatprep.subr.bf16.mxu0 0
    %4485 = vmatpush1.bf16.msra.mxu0 %v4343
    %4486 = vmatprep.subr.bf16.mxu0 0
    %4487 = vmatpush1.bf16.msra.mxu0 %v4344
    %4488 = vmatprep.subr.bf16.mxu0 0
    %4489 = vmatpush1.bf16.msra.mxu0 %v4345
    %4490 = vmatprep.mubr.bf16.mxu0 %v3939
    %4491 = vmatmul.mubr.bf16.gmra.mrb[0].mxu0 %v3938
    %v4492 = vpop.f32.mrb[0].mxu0
    %v4493 = vadd.f32 %v3648, %v4492
    %v4494 = vpop.f32.mrb[0].mxu0
    %v4495 = vpop.f32.mrb[0].mxu0
    %v4496 = vadd.f32 %v3649, %v4495
    %v4497 = vpop.f32.mrb[0].mxu0
    %4498 = vdwg.mxu0
    %4499 = vmatprep.subr.bf16.mxu0 0
    %4500 = vmatpush1.bf16.msra.mxu0 %v4346
    %4501 = vmatprep.subr.bf16.mxu0 0
    %4502 = vmatpush1.bf16.msra.mxu0 %v4347
    %4503 = vmatprep.subr.bf16.mxu0 0
    %4504 = vmatpush1.bf16.msra.mxu0 %v4348
    %4505 = vmatprep.subr.bf16.mxu0 0
    %4506 = vmatpush1.bf16.msra.mxu0 %v4349
    %4507 = vmatprep.subr.bf16.mxu0 0
    %4508 = vmatpush1.bf16.msra.mxu0 %v4350
    %4509 = vmatprep.subr.bf16.mxu0 0
    %4510 = vmatpush1.bf16.msra.mxu0 %v4351
    %4511 = vmatprep.subr.bf16.mxu0 0
    %4512 = vmatpush1.bf16.msra.mxu0 %v4352
    %4513 = vmatprep.subr.bf16.mxu0 0
    %4514 = vmatpush1.bf16.msra.mxu0 %v4353
    %4515 = vmatprep.subr.bf16.mxu0 0
    %4516 = vmatpush1.bf16.msra.mxu0 %v4354
    %4517 = vmatprep.subr.bf16.mxu0 0
    %4518 = vmatpush1.bf16.msra.mxu0 %v4355
    %4519 = vmatprep.subr.bf16.mxu0 0
    %4520 = vmatpush1.bf16.msra.mxu0 %v4356
    %4521 = vmatprep.subr.bf16.mxu0 0
    %4522 = vmatpush1.bf16.msra.mxu0 %v4357
    %4523 = vmatprep.subr.bf16.mxu0 0
    %4524 = vmatpush1.bf16.msra.mxu0 %v4358
    %4525 = vmatprep.subr.bf16.mxu0 0
    %4526 = vmatpush1.bf16.msra.mxu0 %v4359
    %4527 = vmatprep.subr.bf16.mxu0 0
    %4528 = vmatpush1.bf16.msra.mxu0 %v4360
    %4529 = vmatprep.subr.bf16.mxu0 0
    %4530 = vmatpush1.bf16.msra.mxu0 %v4361
    %4531 = vmatprep.mubr.bf16.mxu0 %v3941
    %4532 = vmatmul.mubr.bf16.gmra.mrb[0].mxu0 %v3940
    %v4533 = vpop.f32.mrb[0].mxu0
    %v4534 = vadd.f32 %v4493, %v4533
    %v4535 = vpop.f32.mrb[0].mxu0
    %v4536 = vpop.f32.mrb[0].mxu0
    %v4537 = vadd.f32 %v4496, %v4536
    %v4538 = vpop.f32.mrb[0].mxu0
    %4539 = vdwg.mxu0
    %4540 = vmatprep.subr.bf16.mxu0 0
    %4541 = vmatpush1.bf16.msra.mxu0 %v4362
    %4542 = vmatprep.subr.bf16.mxu0 0
    %4543 = vmatpush1.bf16.msra.mxu0 %v4363
    %4544 = vmatprep.subr.bf16.mxu0 0
    %4545 = vmatpush1.bf16.msra.mxu0 %v4364
    %4546 = vmatprep.subr.bf16.mxu0 0
    %4547 = vmatpush1.bf16.msra.mxu0 %v4365
    %4548 = vmatprep.subr.bf16.mxu0 0
    %4549 = vmatpush1.bf16.msra.mxu0 %v4366
    %4550 = vmatprep.subr.bf16.mxu0 0
    %4551 = vmatpush1.bf16.msra.mxu0 %v4367
    %4552 = vmatprep.subr.bf16.mxu0 0
    %4553 = vmatpush1.bf16.msra.mxu0 %v4368
    %4554 = vmatprep.subr.bf16.mxu0 0
    %4555 = vmatpush1.bf16.msra.mxu0 %v4369
    %4556 = vmatprep.subr.bf16.mxu0 0
    %4557 = vmatpush1.bf16.msra.mxu0 %v4370
    %4558 = vmatprep.subr.bf16.mxu0 0
    %4559 = vmatpush1.bf16.msra.mxu0 %v4371
    %4560 = vmatprep.subr.bf16.mxu0 0
    %4561 = vmatpush1.bf16.msra.mxu0 %v4372
    %4562 = vmatprep.subr.bf16.mxu0 0
    %4563 = vmatpush1.bf16.msra.mxu0 %v4373
    %4564 = vmatprep.subr.bf16.mxu0 0
    %4565 = vmatpush1.bf16.msra.mxu0 %v4374
    %4566 = vmatprep.subr.bf16.mxu0 0
    %4567 = vmatpush1.bf16.msra.mxu0 %v4375
    %4568 = vmatprep.subr.bf16.mxu0 0
    %4569 = vmatpush1.bf16.msra.mxu0 %v4376
    %4570 = vmatprep.subr.bf16.mxu0 0
    %4571 = vmatpush1.bf16.msra.mxu0 %v4377
    %4572 = vmatprep.mubr.bf16.mxu0 %v3943
    %4573 = vmatmul.mubr.bf16.gmra.mrb[0].mxu0 %v3942
    %v4574 = vpop.f32.mrb[0].mxu0
    %v4575 = vadd.f32 %v4534, %v4574
    %v4576 = vpop.f32.mrb[0].mxu0
    %v4577 = vpop.f32.mrb[0].mxu0
    %v4578 = vadd.f32 %v4537, %v4577
    %v4579 = vpop.f32.mrb[0].mxu0
    %4580 = vdwg.mxu0
    %4581 = vmatprep.subr.bf16.mxu0 0
    %4582 = vmatpush1.bf16.msra.mxu0 %v4378
    %4583 = vmatprep.subr.bf16.mxu0 0
    %4584 = vmatpush1.bf16.msra.mxu0 %v4379
    %4585 = vmatprep.subr.bf16.mxu0 0
    %4586 = vmatpush1.bf16.msra.mxu0 %v4380
    %4587 = vmatprep.subr.bf16.mxu0 0
    %4588 = vmatpush1.bf16.msra.mxu0 %v4381
    %4589 = vmatprep.subr.bf16.mxu0 0
    %4590 = vmatpush1.bf16.msra.mxu0 %v4382
    %4591 = vmatprep.subr.bf16.mxu0 0
    %4592 = vmatpush1.bf16.msra.mxu0 %v4383
    %4593 = vmatprep.subr.bf16.mxu0 0
    %4594 = vmatpush1.bf16.msra.mxu0 %v4384
    %4595 = vmatprep.subr.bf16.mxu0 0
    %4596 = vmatpush1.bf16.msra.mxu0 %v4385
    %4597 = vmatprep.subr.bf16.mxu0 0
    %4598 = vmatpush1.bf16.msra.mxu0 %v4386
    %4599 = vmatprep.subr.bf16.mxu0 0
    %4600 = vmatpush1.bf16.msra.mxu0 %v4387
    %4601 = vmatprep.subr.bf16.mxu0 0
    %4602 = vmatpush1.bf16.msra.mxu0 %v4388
    %4603 = vmatprep.subr.bf16.mxu0 0
    %4604 = vmatpush1.bf16.msra.mxu0 %v4389
    %4605 = vmatprep.subr.bf16.mxu0 0
    %4606 = vmatpush1.bf16.msra.mxu0 %v4390
    %4607 = vmatprep.subr.bf16.mxu0 0
    %4608 = vmatpush1.bf16.msra.mxu0 %v4391
    %4609 = vmatprep.subr.bf16.mxu0 0
    %4610 = vmatpush1.bf16.msra.mxu0 %v4392
    %4611 = vmatprep.subr.bf16.mxu0 0
    %4612 = vmatpush1.bf16.msra.mxu0 %v4393
    %4613 = vmatprep.mubr.bf16.mxu0 %v3945
    %4614 = vmatmul.mubr.bf16.gmra.mrb[0].mxu0 %v3944
    %v4615 = vpop.f32.mrb[0].mxu0
    %v4616 = vadd.f32 %v4575, %v4615
    %v4617 = vpop.f32.mrb[0].mxu0
    %v4618 = vpop.f32.mrb[0].mxu0
    %v4619 = vadd.f32 %v4578, %v4618
    %v4620 = vpop.f32.mrb[0].mxu0
    %4621 = vdwg.mxu0
    %v4622 = vsel %vm116, %v4616, 0.0
    %4623 = vadd.xlane.f32.xlu0 %v4622
    %v4624 = vpop.xlane.xlu0 %4623
    %v4625 = vsel %vm116, %v4619, 0.0
    %4626 = vadd.xlane.f32.xlu0 %v4625
    %v4627 = vpop.xlane.xlu0 %4626
    %v4628 = vmul.f32 %v4624, %v1830
    %v4629 = vmul.f32 %v4627, %v1830
    %v4630 = vsub.f32 %v4616, %v4628
    %v4631 = vsub.f32 %v4619, %v4629
    %v4632 = vmul.f32 %v4630, %v4630
    %v4633 = vmul.f32 %v4631, %v4631
    %v4634 = vsel %vm116, %v4632, 0.0
    %4635 = vadd.xlane.f32.xlu0 %v4634
    %v4636 = vpop.xlane.xlu0 %4635
    %v4637 = vsel %vm116, %v4633, 0.0
    %4638 = vadd.xlane.f32.xlu0 %v4637
    %v4639 = vpop.xlane.xlu0 %4638
    %v4640 = vmul.f32 %v4636, %v1830
    %v4641 = vmul.f32 %v4639, %v1830
    %v4642 = vadd.f32 %v4640, 1e-05
    %v4643 = vadd.f32 %v4641, 1e-05
    %v4644 = vrsqrt.pop %v4642
    %v4645 = vrsqrt.pop %v4643
    %v4646 = vmul.f32 %v4630, %v4644
    %v4647 = vmul.f32 %v4631, %v4645
    %v4648 = vadd.f32 %v4646, 0.0
    %v4649 = vadd.f32 %v4647, 0.0
    %v4650 = vadd.f32 %v3648, %v4648
    %v4651 = vadd.f32 %v3649, %v4649
    %v4652 = vld [vmem:[%s24] sm:$0x1]
    %v4653 = vld [vmem:[%s25] sm:$0x1]
    %v4654 = vsel %vm116, %v4650, 0.0
    %4655 = vadd.xlane.f32.xlu0 %v4654
    %v4656 = vpop.xlane.xlu0 %4655
    %v4657 = vsel %vm116, %v4651, 0.0
    %4658 = vadd.xlane.f32.xlu0 %v4657
    %v4659 = vpop.xlane.xlu0 %4658
    %v4660 = vmul.f32 %v4656, %v1830
    %v4661 = vmul.f32 %v4659, %v1830
    %v4662 = vsub.f32 %v4650, %v4660
    %v4663 = vsub.f32 %v4651, %v4661
    %v4664 = vmul.f32 %v4662, %v4662
    %v4665 = vmul.f32 %v4663, %v4663
    %v4666 = vsel %vm116, %v4664, 0.0
    %4667 = vadd.xlane.f32.xlu0 %v4666
    %v4668 = vpop.xlane.xlu0 %4667
    %v4669 = vsel %vm116, %v4665, 0.0
    %4670 = vadd.xlane.f32.xlu0 %v4669
    %v4671 = vpop.xlane.xlu0 %4670
    %v4672 = vmul.f32 %v4668, %v1830
    %v4673 = vmul.f32 %v4671, %v1830
    %v4674 = vadd.f32 %v4672, 1e-05
    %v4675 = vadd.f32 %v4673, 1e-05
    %v4676 = vrsqrt.pop %v4674
    %v4677 = vrsqrt.pop %v4675
    %v4678 = vmul.f32 %v4662, %v4676
    %v4679 = vmul.f32 %v4663, %v4677
    %v4681 = vlaneseq
    %v4682 = vshrl.u32 %v4681, 7
    %v4683 = vsub.s32 0, %v4682
    %v4684 = vrot.slane %v4652, %v4683
    %v4686 = vmul.f32 %v4678, %v4684
    %v4687 = vmul.f32 %v4679, %v4684
    %v4689 = vlaneseq
    %v4690 = vshrl.u32 %v4689, 7
    %v4691 = vsub.s32 0, %v4690
    %v4692 = vrot.slane %v4653, %v4691
    %v4694 = vadd.f32 %v4686, %v4692
    %v4695 = vadd.f32 %v4687, %v4692
    %4696 = vst.msk [vmem:[#allocation2] sm:$0xff] %vm116, %v4694
    %4697 = vst.msk [vmem:[#allocation2 + $0x8] sm:$0xff] %vm116, %v4695
    %4698 = vst.msk [vmem:[#allocation4] sm:$0xff] %vm337, %v2809
    %4699 = vst.msk [vmem:[#allocation4 + $0x8] sm:$0xff] %vm337, %v2810
    // Predicated region
    $region106: #{decoder_layer.1} parent=1 // pred_check
      _
    $region107: #{decoder_layer.1} parent=1 // pred_check_branch
      %4701 = sbr.rel (0) target = $region109
    $region108: #{decoder_layer.1} parent=1 // pred_region
      %s4703 = ssub.s32 256, 256
      %4704 = vsyncadd [#allocation3], %s4703
      %s4705 = sshll.u32 [#allocation2], 4
      %s4706 = int_to_ptr.vmem [resolvable:$true] %s4705
      %4711 = dma.vmem_to_hbm [thread:$0]  %s4706, 256, %s26, [#allocation3], 128, 128, 8
    $region109: #{decoder_layer.1} parent=1 // pred_fallthru
      _
    // Predicated region
    $region110: #{decoder_layer.1} parent=1 // pred_check
      _
    $region111: #{decoder_layer.1} parent=1 // pred_check_branch
      %4713 = sbr.rel (0) target = $region113
    $region112: #{decoder_layer.1} parent=1 // pred_region
      %s4715 = ssub.s32 256, 256
      %4716 = vsyncadd [#allocation5], %s4715
      %s4717 = sshll.u32 [#allocation4], 4
      %s4718 = int_to_ptr.vmem [resolvable:$true] %s4717
      %4723 = dma.vmem_to_hbm [thread:$0]  %s4718, 256, %s27, [#allocation5], 128, 128, 8
    $region113: #{decoder_layer.1} parent=1 // pred_fallthru
      _
    // Predicated region
    $region114: #{decoder_layer.1} parent=1 // pred_check
      _
    $region115: #{decoder_layer.1} parent=1 // pred_check_branch
      %4725 = sbr.rel (0) target = $region117
    $region116: #{decoder_layer.1} parent=1 // pred_region
      %4726 = dma.done [#allocation3], 256
    $region117: #{decoder_layer.1} parent=1 // pred_fallthru
      _
    // Predicated region
    $region118: #{decoder_layer.1} parent=1 // pred_check
      _
    $region119: #{decoder_layer.1} parent=1 // pred_check_branch
      %4728 = sbr.rel (0) target = $region121
    $region120: #{decoder_layer.1} parent=1 // pred_region
      %4729 = dma.done [#allocation5], 256
    $region121: #{decoder_layer.1} parent=1 // pred_fallthru
      _
    %4730 = vsyncpa [#allocation3], 1
    %4731 = vsyncpa [#allocation5], 1

</llo_original>
